<compile_context>
chip_gen: v6e
topology: v6e:2x2x1
jax: 0.10.0
libtpu: 0.0.40
codegen_flags: <defaults>
</compile_context>

<pallas_src>
import functools

import numpy as np
import jax
import jax.numpy as jnp
from jax.experimental import pallas as pl
from jax.experimental.pallas import tpu as pltpu


# ----------------------------- Pallas kernel ------------------------------

def encoder_kernel(x_ref, mask_ref, *refs, seq_len, batch, hidden, num_dirs,
                   num_layers):
    """Fully fused multi-layer bidirectional GRU encoder.

    x_ref:    [T*B, E0]              f32 VMEM (time-major, flattened)
    mask_ref: [T, B, 1]              f32 VMEM (1.0 where t < length)
    per layer (gate order r|z|n, fwd columns first then bwd):
      w_ih:   [in_0, D*3H]  (layer 0)      f32 VMEM
              [D, H, D*3H]  (layers > 0)   f32 VMEM (rows split per src dir)
      w_hh:   [D, H, 3H]                   f32 VMEM
      b_comb: [1, D*3H]                    f32 VMEM (b_ih + b_hh on r,z)
      b_hn:   [1, D*H]                     f32 VMEM (hidden bias of n gate)
    out_ref:  [B, D*H]               f32 VMEM (final hidden, fwd|bwd)
    scratch:
      seq_ref: [D, T*B, H]           f32 VMEM (per-direction layer output)
      gi_ref:  [D, T*B, 3H]          f32 VMEM (hoisted input projections)
    """
    T, B, H, D = seq_len, batch, hidden, num_dirs
    G = 3 * H
    wrefs = refs[:-3]
    out_ref, seq_ref, gi_ref = refs[-3], refs[-2], refs[-1]

    h = [None] * D
    for layer in range(num_layers):
        w_ih_ref, w_hh_ref, b_comb_ref, b_hn_ref = wrefs[4 * layer:4 * layer + 4]
        last_layer = layer == num_layers - 1

        # ---- Hoisted input projection for every timestep & BOTH directions.
        # Layer 0: ONE MXU matmul.  Layers > 0: D summed matmuls over the
        # per-direction sequence scratch (no fwd|bwd lane concat).
        b_comb = b_comb_ref[...]                              # [1, D*G]
        if layer == 0:
            gi = jnp.dot(x_ref[...], w_ih_ref[...],
                         preferred_element_type=jnp.float32) + b_comb
        else:
            gi = b_comb
            for dd in range(D):
                gi = gi + jnp.dot(seq_ref[dd], w_ih_ref[dd],
                                  preferred_element_type=jnp.float32)
        # Park the projection in VMEM scratch (per output direction) so the
        # unrolled time loop doesn't keep ~12 projection vregs live.
        for d in range(D):
            gi_ref[d] = gi[:, d * G:(d + 1) * G]

        # ---- Hoisted, loop-invariant weight/bias loads.
        w_hh = [w_hh_ref[d] for d in range(D)]                # each [H, G]
        b_hn_all = b_hn_ref[...]                              # [1, D*H]
        b_hn = [b_hn_all[:, d * H:(d + 1) * H] for d in range(D)]

        # ---- Recurrence: one unrolled loop, both directions per step.
        h = [None] * D                                        # h == 0 at step 0
        for s in range(T):                                    # fully unrolled
            # Issue the per-direction recurrence matmuls together: they are
            # independent, so they pipeline through the MXU.
            gh = [None] * D
            for d in range(D):
                if h[d] is not None:
                    gh[d] = jnp.dot(h[d], w_hh[d],
                                    preferred_element_type=jnp.float32)  # [B,G]
            for d in range(D):
                t = s if d == 0 else T - 1 - s
                gi_t = gi_ref[d, t * B:(t + 1) * B, :]        # [B, G] static slice
                if gh[d] is None:                             # step 0: h_prev == 0
                    gr, gz, gn_h = gi_t[:, :H], gi_t[:, H:2 * H], b_hn[d]
                else:
                    gr = gi_t[:, :H] + gh[d][:, :H]
                    gz = gi_t[:, H:2 * H] + gh[d][:, H:2 * H]
                    gn_h = gh[d][:, 2 * H:] + b_hn[d]
                r = jax.nn.sigmoid(gr)
                z = jax.nn.sigmoid(gz)
                n = jnp.tanh(gi_t[:, 2 * H:] + r * gn_h)
                m = mask_ref[t]                               # [B, 1] -> bcast H
                if h[d] is None:
                    h_new = m * ((1.0 - z) * n)               # h_prev == 0
                else:
                    h_cand = n + z * (h[d] - n)               # (1-z)*n + z*h
                    h_new = h[d] + m * (h_cand - h[d])        # freeze padded
                h[d] = h_new
                if not last_layer:
                    seq_ref[d, t * B:(t + 1) * B, :] = h_new  # off critical path

    out_ref[...] = jnp.concatenate(h, axis=-1)                # [B, D*H]


# ------------------------------ JAX wrapper -------------------------------

def pack_params_for_kernel(raw_params, *, num_layers, num_dirs, hidden):
    """Convert PyTorch-layout params to kernel layout. Call ONCE at init."""
    H = hidden
    G = 3 * H
    flat = []
    for layer in range(num_layers):
        w_ih_cols, w_hh_stack, b_comb_cols, b_hn_cols = [], [], [], []
        for d in range(num_dirs):
            w_ih, w_hh, b_ih, b_hh = raw_params[(layer, d)]
            w_ih_cols.append(jnp.transpose(w_ih))             # [in_l, G]
            w_hh_stack.append(jnp.transpose(w_hh))            # [H, G]
            b_comb_cols.append(b_ih + jnp.concatenate(
                [b_hh[:2 * H], jnp.zeros((H,), jnp.float32)]))
            b_hn_cols.append(b_hh[2 * H:])
        w_ih_cat = jnp.concatenate(w_ih_cols, axis=1)         # [in_l, D*G]
        if layer > 0:
            # Split input rows per source direction -> [D, H, D*G] so the
            # kernel can do `seq_fwd @ W[0] + seq_bwd @ W[1]` (no lane concat).
            w_ih_cat = w_ih_cat.reshape(num_dirs, H, num_dirs * G)
        flat.extend([
            w_ih_cat,
            jnp.stack(w_hh_stack),                            # [D, H, G]
            jnp.concatenate(b_comb_cols).reshape(1, num_dirs * G),
            jnp.concatenate(b_hn_cols).reshape(1, num_dirs * H),
        ])
    return tuple(flat)


def utterance_encoder_forward(utt_emb, utt_len, packed_params, *, num_layers,
                              num_dirs, hidden):
    """utt_emb: [B, T, E] batch-first; utt_len: [B] int lengths;
       packed_params: output of pack_params_for_kernel (pre-packed once).
       returns: [B, hidden * num_dirs] (last-layer final hidden, fwd|bwd)."""
    B, T, E = utt_emb.shape
    H, D = hidden, num_dirs
    x = jnp.transpose(utt_emb.astype(jnp.float32), (1, 0, 2)).reshape(T * B, E)
    mask = (jnp.arange(T, dtype=jnp.int32)[:, None]
            < utt_len.astype(jnp.int32)[None, :]).astype(jnp.float32)
    mask = mask[:, :, None]                                   # [T, B, 1]

    kernel = functools.partial(encoder_kernel, seq_len=T, batch=B, hidden=H,
                               num_dirs=D, num_layers=num_layers)
    return pl.pallas_call(
        kernel,
        out_shape=jax.ShapeDtypeStruct((B, D * H), jnp.float32),
        in_specs=[pl.BlockSpec(memory_space=pltpu.MemorySpace.VMEM)]
                 * (2 + len(packed_params)),
        out_specs=pl.BlockSpec(memory_space=pltpu.MemorySpace.VMEM),
        scratch_shapes=[pltpu.VMEM((D, T * B, H), jnp.float32),     # seq
                        pltpu.VMEM((D, T * B, 3 * H), jnp.float32)],  # gi
        compiler_params=pltpu.CompilerParams(
            vmem_limit_bytes=32 * 1024 * 1024),
    )(x, mask, *packed_params)


def init_gru_params(key, *, num_layers, num_dirs, input_size, hidden):
    """Deterministic init with PyTorch nn.GRU layout:
       w_ih [3H, in], w_hh [3H, H], b_ih [3H], b_hh [3H] (gate order r,z,n)."""
    params = {}
    k = 1.0 / np.sqrt(hidden)
    for layer in range(num_layers):
        in_size = input_size if layer == 0 else hidden * num_dirs
        for d in range(num_dirs):
            key, k0, k1, k2, k3 = jax.random.split(key, 5)
            params[(layer, d)] = (
                jax.random.uniform(k0, (3 * hidden, in_size), jnp.float32, -k, k),
                jax.random.uniform(k1, (3 * hidden, hidden), jnp.float32, -k, k),
                jax.random.uniform(k2, (3 * hidden,), jnp.float32, -k, k),
                jax.random.uniform(k3, (3 * hidden,), jnp.float32, -k, k),
            )
    return params


# --------------------------- numpy reference ------------------------------

def gru_ref(utt_emb, lengths, raw_params, *, num_layers, num_dirs, hidden):
    """Independent reference in PyTorch weight layout (masked-carry padding)."""
    x = np.transpose(np.asarray(utt_emb, np.float32), (1, 0, 2))  # [T, B, E]
    lengths = np.asarray(lengths)
    T, B, _ = x.shape
    H = hidden
    lasts = []
    for layer in range(num_layers):
        outs, lasts = [], []
        for d in range(num_dirs):
            w_ih, w_hh, b_ih, b_hh = [np.asarray(p) for p in raw_params[(layer, d)]]
            h = np.zeros((B, H), np.float32)
            out = np.zeros((T, B, H), np.float32)
            order = range(T - 1, -1, -1) if d == 1 else range(T)
            for t in order:
                gi = x[t] @ w_ih.T + b_ih
                gh = h @ w_hh.T + b_hh
                r = 1.0 / (1.0 + np.exp(-(gi[:, :H] + gh[:, :H])))
                z = 1.0 / (1.0 + np.exp(-(gi[:, H:2 * H] + gh[:, H:2 * H])))
                n = np.tanh(gi[:, 2 * H:] + r * gh[:, 2 * H:])
                h_new = (1.0 - z) * n + z * h
                msk = (t < lengths)[:, None]
                h = np.where(msk, h_new, h)
                out[t] = h
            outs.append(out)
            lasts.append(h)
        x = np.concatenate(outs, axis=-1)
    return np.concatenate(lasts, axis=-1)


# --------------------------------- main -----------------------------------

if __name__ == "__main__":
    # options: word_embedding_size=16, utter_hidden_state=32,
    #          utter_num_layers=2, utter_direction=2 (bidirectional), dropout=0
    B, T, E, H = 8, 8, 16, 32
    NUM_LAYERS, NUM_DIRS = 2, 2

    key = jax.random.PRNGKey(0)
    key, k_emb = jax.random.split(key)
    utt_emb = jax.random.normal(k_emb, (B, T, E), jnp.float32)
    utt_len = jnp.array([8, 5, 3, 6, 1, 7, 2, 4], jnp.int32)

    params = init_gru_params(key, num_layers=NUM_LAYERS, num_dirs=NUM_DIRS,
                             input_size=E, hidden=H)
    # Pre-pack weights ONCE (outside the per-call path).
    packed = pack_params_for_kernel(params, num_layers=NUM_LAYERS,
                                    num_dirs=NUM_DIRS, hidden=H)
    packed = jax.tree_util.tree_map(jax.block_until_ready, packed)

    fwd = jax.jit(functools.partial(utterance_encoder_forward,
                                    num_layers=NUM_LAYERS, num_dirs=NUM_DIRS,
                                    hidden=H))
    out = fwd(utt_emb, utt_len, packed)
    out = jax.block_until_ready(out)

    ref = gru_ref(utt_emb, utt_len, params,
                  num_layers=NUM_LAYERS, num_dirs=NUM_DIRS, hidden=H)

    assert out.shape == (B, H * NUM_DIRS), out.shape
    np.testing.assert_allclose(np.asarray(out), ref, atol=2e-5, rtol=2e-5)
    print("KERNEL_OK")
</pallas_src>

<mosaic_0001>
module attributes {stable_mosaic.version = 11 : i64} {
  func.func @encoder_kernel(%arg0: memref<64x16xf32, #tpu.memory_space<vmem>>, %arg1: memref<8x8x1xf32, #tpu.memory_space<vmem>>, %arg2: memref<16x192xf32, #tpu.memory_space<vmem>>, %arg3: memref<2x32x96xf32, #tpu.memory_space<vmem>>, %arg4: memref<1x192xf32, #tpu.memory_space<vmem>>, %arg5: memref<1x64xf32, #tpu.memory_space<vmem>>, %arg6: memref<2x32x192xf32, #tpu.memory_space<vmem>>, %arg7: memref<2x32x96xf32, #tpu.memory_space<vmem>>, %arg8: memref<1x192xf32, #tpu.memory_space<vmem>>, %arg9: memref<1x64xf32, #tpu.memory_space<vmem>>, %arg10: memref<8x64xf32, #tpu.memory_space<vmem>>, %arg11: memref<2x64x32xf32, #tpu.memory_space<vmem>>, %arg12: memref<2x64x96xf32, #tpu.memory_space<vmem>>) attributes {dimension_semantics = [], scalar_prefetch = 0 : i64, scratch_operands = 2 : i64, tpu.core_type = #tpu.core_type<tc>} {
    %c0 = arith.constant 0 : index
    %c0_0 = arith.constant 0 : index
    %0 = vector.load %arg4[%c0, %c0_0] : memref<1x192xf32, #tpu.memory_space<vmem>>, vector<1x192xf32>
    %c0_1 = arith.constant 0 : index
    %c0_2 = arith.constant 0 : index
    %1 = vector.load %arg0[%c0_1, %c0_2] : memref<64x16xf32, #tpu.memory_space<vmem>>, vector<64x16xf32>
    %c0_3 = arith.constant 0 : index
    %c0_4 = arith.constant 0 : index
    %2 = vector.load %arg2[%c0_3, %c0_4] : memref<16x192xf32, #tpu.memory_space<vmem>>, vector<16x192xf32>
    %cst = arith.constant dense<0.000000e+00> : vector<64x192xf32>
    %3 = tpu.matmul %1, %2, %cst {dimension_numbers = #tpu.dot_dimension_numbers<[1], [0], [0], [1], [0, 0, 1, 1], [], []>} : vector<64x16xf32>, vector<16x192xf32>, vector<64x192xf32> -> vector<64x192xf32>
    %4 = vector.broadcast %0 : vector<1x192xf32> to vector<64x192xf32>
    %5 = arith.addf %3, %4 : vector<64x192xf32>
    %6 = vector.extract_strided_slice %5 {offsets = [0, 0], sizes = [64, 96], strides = [1, 1]} : vector<64x192xf32> to vector<64x96xf32>
    %c0_5 = arith.constant 0 : index
    %c0_6 = arith.constant 0 : index
    %c0_7 = arith.constant 0 : index
    %7 = vector.load %arg12[%c0_5, %c0_6, %c0_7] : memref<2x64x96xf32, #tpu.memory_space<vmem>>, vector<1x64x96xf32>
    %8 = vector.shape_cast %7 : vector<1x64x96xf32> to vector<64x96xf32>
    %9 = vector.shape_cast %6 : vector<64x96xf32> to vector<1x64x96xf32>
    tpu.vector_store %arg12[%c0_5, %c0_6, %c0_7], %9 {strides = array<i32>} : memref<2x64x96xf32, #tpu.memory_space<vmem>>, vector<1x64x96xf32>,
    %10 = vector.extract_strided_slice %5 {offsets = [0, 96], sizes = [64, 96], strides = [1, 1]} : vector<64x192xf32> to vector<64x96xf32>
    %c1 = arith.constant 1 : index
    %c0_8 = arith.constant 0 : index
    %c0_9 = arith.constant 0 : index
    %11 = vector.load %arg12[%c1, %c0_8, %c0_9] : memref<2x64x96xf32, #tpu.memory_space<vmem>>, vector<1x64x96xf32>
    %12 = vector.shape_cast %11 : vector<1x64x96xf32> to vector<64x96xf32>
    %13 = vector.shape_cast %10 : vector<64x96xf32> to vector<1x64x96xf32>
    tpu.vector_store %arg12[%c1, %c0_8, %c0_9], %13 {strides = array<i32>} : memref<2x64x96xf32, #tpu.memory_space<vmem>>, vector<1x64x96xf32>,
    %c0_10 = arith.constant 0 : index
    %c0_11 = arith.constant 0 : index
    %c0_12 = arith.constant 0 : index
    %14 = vector.load %arg3[%c0_10, %c0_11, %c0_12] : memref<2x32x96xf32, #tpu.memory_space<vmem>>, vector<1x32x96xf32>
    %15 = vector.shape_cast %14 : vector<1x32x96xf32> to vector<32x96xf32>
    %c1_13 = arith.constant 1 : index
    %c0_14 = arith.constant 0 : index
    %c0_15 = arith.constant 0 : index
    %16 = vector.load %arg3[%c1_13, %c0_14, %c0_15] : memref<2x32x96xf32, #tpu.memory_space<vmem>>, vector<1x32x96xf32>
    %17 = vector.shape_cast %16 : vector<1x32x96xf32> to vector<32x96xf32>
    %c0_16 = arith.constant 0 : index
    %c0_17 = arith.constant 0 : index
    %18 = vector.load %arg5[%c0_16, %c0_17] : memref<1x64xf32, #tpu.memory_space<vmem>>, vector<1x64xf32>
    %19 = vector.extract_strided_slice %18 {offsets = [0, 0], sizes = [1, 32], strides = [1, 1]} : vector<1x64xf32> to vector<1x32xf32>
    %20 = vector.extract_strided_slice %18 {offsets = [0, 32], sizes = [1, 32], strides = [1, 1]} : vector<1x64xf32> to vector<1x32xf32>
    %c0_18 = arith.constant 0 : index
    %c0_19 = arith.constant 0 : index
    %c0_20 = arith.constant 0 : index
    %21 = vector.load %arg12[%c0_18, %c0_19, %c0_20] : memref<2x64x96xf32, #tpu.memory_space<vmem>>, vector<1x8x96xf32>
    %22 = vector.shape_cast %21 : vector<1x8x96xf32> to vector<8x96xf32>
    %23 = vector.extract_strided_slice %22 {offsets = [0, 0], sizes = [8, 32], strides = [1, 1]} : vector<8x96xf32> to vector<8x32xf32>
    %24 = vector.extract_strided_slice %22 {offsets = [0, 32], sizes = [8, 32], strides = [1, 1]} : vector<8x96xf32> to vector<8x32xf32>
    %25 = arith.negf %23 : vector<8x32xf32>
    %26 = math.exp %25 : vector<8x32xf32>
    %cst_21 = arith.constant 1.000000e+00 : f32
    %27 = vector.broadcast %cst_21 : f32 to vector<8x32xf32>
    %28 = arith.addf %27, %26 : vector<8x32xf32>
    %29 = arith.divf %27, %28 : vector<8x32xf32>
    %30 = arith.negf %24 : vector<8x32xf32>
    %31 = math.exp %30 : vector<8x32xf32>
    %cst_22 = arith.constant 1.000000e+00 : f32
    %32 = vector.broadcast %cst_22 : f32 to vector<8x32xf32>
    %33 = arith.addf %32, %31 : vector<8x32xf32>
    %34 = arith.divf %32, %33 : vector<8x32xf32>
    %35 = vector.extract_strided_slice %22 {offsets = [0, 64], sizes = [8, 32], strides = [1, 1]} : vector<8x96xf32> to vector<8x32xf32>
    %36 = vector.broadcast %19 : vector<1x32xf32> to vector<8x32xf32>
    %37 = arith.mulf %29, %36 : vector<8x32xf32>
    %38 = arith.addf %35, %37 : vector<8x32xf32>
    %39 = math.tanh %38 : vector<8x32xf32>
    %c0_23 = arith.constant 0 : index
    %c0_24 = arith.constant 0 : index
    %c0_25 = arith.constant 0 : index
    %40 = vector.load %arg1[%c0_23, %c0_24, %c0_25] : memref<8x8x1xf32, #tpu.memory_space<vmem>>, vector<1x8x1xf32>
    %41 = vector.shape_cast %40 : vector<1x8x1xf32> to vector<8x1xf32>
    %cst_26 = arith.constant 1.000000e+00 : f32
    %42 = vector.broadcast %cst_26 : f32 to vector<8x32xf32>
    %43 = arith.subf %42, %34 : vector<8x32xf32>
    %44 = arith.mulf %43, %39 : vector<8x32xf32>
    %45 = vector.broadcast %41 : vector<8x1xf32> to vector<8x32xf32>
    %46 = arith.mulf %45, %44 : vector<8x32xf32>
    %c0_27 = arith.constant 0 : index
    %c0_28 = arith.constant 0 : index
    %c0_29 = arith.constant 0 : index
    %47 = vector.load %arg11[%c0_27, %c0_28, %c0_29] : memref<2x64x32xf32, #tpu.memory_space<vmem>>, vector<1x8x32xf32>
    %48 = vector.shape_cast %47 : vector<1x8x32xf32> to vector<8x32xf32>
    %49 = vector.shape_cast %46 : vector<8x32xf32> to vector<1x8x32xf32>
    tpu.vector_store %arg11[%c0_27, %c0_28, %c0_29], %49 {strides = array<i32>} : memref<2x64x32xf32, #tpu.memory_space<vmem>>, vector<1x8x32xf32>,
    %c1_30 = arith.constant 1 : index
    %c56 = arith.constant 56 : index
    %c0_31 = arith.constant 0 : index
    %50 = vector.load %arg12[%c1_30, %c56, %c0_31] : memref<2x64x96xf32, #tpu.memory_space<vmem>>, vector<1x8x96xf32>
    %51 = vector.shape_cast %50 : vector<1x8x96xf32> to vector<8x96xf32>
    %52 = vector.extract_strided_slice %51 {offsets = [0, 0], sizes = [8, 32], strides = [1, 1]} : vector<8x96xf32> to vector<8x32xf32>
    %53 = vector.extract_strided_slice %51 {offsets = [0, 32], sizes = [8, 32], strides = [1, 1]} : vector<8x96xf32> to vector<8x32xf32>
    %54 = arith.negf %52 : vector<8x32xf32>
    %55 = math.exp %54 : vector<8x32xf32>
    %cst_32 = arith.constant 1.000000e+00 : f32
    %56 = vector.broadcast %cst_32 : f32 to vector<8x32xf32>
    %57 = arith.addf %56, %55 : vector<8x32xf32>
    %58 = arith.divf %56, %57 : vector<8x32xf32>
    %59 = arith.negf %53 : vector<8x32xf32>
    %60 = math.exp %59 : vector<8x32xf32>
    %cst_33 = arith.constant 1.000000e+00 : f32
    %61 = vector.broadcast %cst_33 : f32 to vector<8x32xf32>
    %62 = arith.addf %61, %60 : vector<8x32xf32>
    %63 = arith.divf %61, %62 : vector<8x32xf32>
    %64 = vector.extract_strided_slice %51 {offsets = [0, 64], sizes = [8, 32], strides = [1, 1]} : vector<8x96xf32> to vector<8x32xf32>
    %65 = vector.broadcast %20 : vector<1x32xf32> to vector<8x32xf32>
    %66 = arith.mulf %58, %65 : vector<8x32xf32>
    %67 = arith.addf %64, %66 : vector<8x32xf32>
    %68 = math.tanh %67 : vector<8x32xf32>
    %c7 = arith.constant 7 : index
    %c0_34 = arith.constant 0 : index
    %c0_35 = arith.constant 0 : index
    %69 = vector.load %arg1[%c7, %c0_34, %c0_35] : memref<8x8x1xf32, #tpu.memory_space<vmem>>, vector<1x8x1xf32>
    %70 = vector.shape_cast %69 : vector<1x8x1xf32> to vector<8x1xf32>
    %cst_36 = arith.constant 1.000000e+00 : f32
    %71 = vector.broadcast %cst_36 : f32 to vector<8x32xf32>
    %72 = arith.subf %71, %63 : vector<8x32xf32>
    %73 = arith.mulf %72, %68 : vector<8x32xf32>
    %74 = vector.broadcast %70 : vector<8x1xf32> to vector<8x32xf32>
    %75 = arith.mulf %74, %73 : vector<8x32xf32>
    %c1_37 = arith.constant 1 : index
    %c56_38 = arith.constant 56 : index
    %c0_39 = arith.constant 0 : index
    %76 = vector.load %arg11[%c1_37, %c56_38, %c0_39] : memref<2x64x32xf32, #tpu.memory_space<vmem>>, vector<1x8x32xf32>
    %77 = vector.shape_cast %76 : vector<1x8x32xf32> to vector<8x32xf32>
    %78 = vector.shape_cast %75 : vector<8x32xf32> to vector<1x8x32xf32>
    tpu.vector_store %arg11[%c1_37, %c56_38, %c0_39], %78 {strides = array<i32>} : memref<2x64x32xf32, #tpu.memory_space<vmem>>, vector<1x8x32xf32>,
    %cst_40 = arith.constant dense<0.000000e+00> : vector<8x96xf32>
    %79 = tpu.matmul %46, %15, %cst_40 {dimension_numbers = #tpu.dot_dimension_numbers<[1], [0], [0], [1], [0, 0, 1, 1], [], []>} : vector<8x32xf32>, vector<32x96xf32>, vector<8x96xf32> -> vector<8x96xf32>
    %cst_41 = arith.constant dense<0.000000e+00> : vector<8x96xf32>
    %80 = tpu.matmul %75, %17, %cst_41 {dimension_numbers = #tpu.dot_dimension_numbers<[1], [0], [0], [1], [0, 0, 1, 1], [], []>} : vector<8x32xf32>, vector<32x96xf32>, vector<8x96xf32> -> vector<8x96xf32>
    %c0_42 = arith.constant 0 : index
    %c8 = arith.constant 8 : index
    %c0_43 = arith.constant 0 : index
    %81 = vector.load %arg12[%c0_42, %c8, %c0_43] : memref<2x64x96xf32, #tpu.memory_space<vmem>>, vector<1x8x96xf32>
    %82 = vector.shape_cast %81 : vector<1x8x96xf32> to vector<8x96xf32>
    %83 = vector.extract_strided_slice %82 {offsets = [0, 0], sizes = [8, 32], strides = [1, 1]} : vector<8x96xf32> to vector<8x32xf32>
    %84 = vector.extract_strided_slice %79 {offsets = [0, 0], sizes = [8, 32], strides = [1, 1]} : vector<8x96xf32> to vector<8x32xf32>
    %85 = arith.addf %83, %84 : vector<8x32xf32>
    %86 = vector.extract_strided_slice %82 {offsets = [0, 32], sizes = [8, 32], strides = [1, 1]} : vector<8x96xf32> to vector<8x32xf32>
    %87 = vector.extract_strided_slice %79 {offsets = [0, 32], sizes = [8, 32], strides = [1, 1]} : vector<8x96xf32> to vector<8x32xf32>
    %88 = arith.addf %86, %87 : vector<8x32xf32>
    %89 = vector.extract_strided_slice %79 {offsets = [0, 64], sizes = [8, 32], strides = [1, 1]} : vector<8x96xf32> to vector<8x32xf32>
    %90 = vector.broadcast %19 : vector<1x32xf32> to vector<8x32xf32>
    %91 = arith.addf %89, %90 : vector<8x32xf32>
    %92 = arith.negf %85 : vector<8x32xf32>
    %93 = math.exp %92 : vector<8x32xf32>
    %cst_44 = arith.constant 1.000000e+00 : f32
    %94 = vector.broadcast %cst_44 : f32 to vector<8x32xf32>
    %95 = arith.addf %94, %93 : vector<8x32xf32>
    %96 = arith.divf %94, %95 : vector<8x32xf32>
    %97 = arith.negf %88 : vector<8x32xf32>
    %98 = math.exp %97 : vector<8x32xf32>
    %cst_45 = arith.constant 1.000000e+00 : f32
    %99 = vector.broadcast %cst_45 : f32 to vector<8x32xf32>
    %100 = arith.addf %99, %98 : vector<8x32xf32>
    %101 = arith.divf %99, %100 : vector<8x32xf32>
    %102 = vector.extract_strided_slice %82 {offsets = [0, 64], sizes = [8, 32], strides = [1, 1]} : vector<8x96xf32> to vector<8x32xf32>
    %103 = arith.mulf %96, %91 : vector<8x32xf32>
    %104 = arith.addf %102, %103 : vector<8x32xf32>
    %105 = math.tanh %104 : vector<8x32xf32>
    %c1_46 = arith.constant 1 : index
    %c0_47 = arith.constant 0 : index
    %c0_48 = arith.constant 0 : index
    %106 = vector.load %arg1[%c1_46, %c0_47, %c0_48] : memref<8x8x1xf32, #tpu.memory_space<vmem>>, vector<1x8x1xf32>
    %107 = vector.shape_cast %106 : vector<1x8x1xf32> to vector<8x1xf32>
    %108 = arith.subf %46, %105 : vector<8x32xf32>
    %109 = arith.mulf %101, %108 : vector<8x32xf32>
    %110 = arith.addf %105, %109 : vector<8x32xf32>
    %111 = arith.subf %110, %46 : vector<8x32xf32>
    %112 = vector.broadcast %107 : vector<8x1xf32> to vector<8x32xf32>
    %113 = arith.mulf %112, %111 : vector<8x32xf32>
    %114 = arith.addf %46, %113 : vector<8x32xf32>
    %c0_49 = arith.constant 0 : index
    %c8_50 = arith.constant 8 : index
    %c0_51 = arith.constant 0 : index
    %115 = vector.load %arg11[%c0_49, %c8_50, %c0_51] : memref<2x64x32xf32, #tpu.memory_space<vmem>>, vector<1x8x32xf32>
    %116 = vector.shape_cast %115 : vector<1x8x32xf32> to vector<8x32xf32>
    %117 = vector.shape_cast %114 : vector<8x32xf32> to vector<1x8x32xf32>
    tpu.vector_store %arg11[%c0_49, %c8_50, %c0_51], %117 {strides = array<i32>} : memref<2x64x32xf32, #tpu.memory_space<vmem>>, vector<1x8x32xf32>,
    %c1_52 = arith.constant 1 : index
    %c48 = arith.constant 48 : index
    %c0_53 = arith.constant 0 : index
    %118 = vector.load %arg12[%c1_52, %c48, %c0_53] : memref<2x64x96xf32, #tpu.memory_space<vmem>>, vector<1x8x96xf32>
    %119 = vector.shape_cast %118 : vector<1x8x96xf32> to vector<8x96xf32>
    %120 = vector.extract_strided_slice %119 {offsets = [0, 0], sizes = [8, 32], strides = [1, 1]} : vector<8x96xf32> to vector<8x32xf32>
    %121 = vector.extract_strided_slice %80 {offsets = [0, 0], sizes = [8, 32], strides = [1, 1]} : vector<8x96xf32> to vector<8x32xf32>
    %122 = arith.addf %120, %121 : vector<8x32xf32>
    %123 = vector.extract_strided_slice %119 {offsets = [0, 32], sizes = [8, 32], strides = [1, 1]} : vector<8x96xf32> to vector<8x32xf32>
    %124 = vector.extract_strided_slice %80 {offsets = [0, 32], sizes = [8, 32], strides = [1, 1]} : vector<8x96xf32> to vector<8x32xf32>
    %125 = arith.addf %123, %124 : vector<8x32xf32>
    %126 = vector.extract_strided_slice %80 {offsets = [0, 64], sizes = [8, 32], strides = [1, 1]} : vector<8x96xf32> to vector<8x32xf32>
    %127 = vector.broadcast %20 : vector<1x32xf32> to vector<8x32xf32>
    %128 = arith.addf %126, %127 : vector<8x32xf32>
    %129 = arith.negf %122 : vector<8x32xf32>
    %130 = math.exp %129 : vector<8x32xf32>
    %cst_54 = arith.constant 1.000000e+00 : f32
    %131 = vector.broadcast %cst_54 : f32 to vector<8x32xf32>
    %132 = arith.addf %131, %130 : vector<8x32xf32>
    %133 = arith.divf %131, %132 : vector<8x32xf32>
    %134 = arith.negf %125 : vector<8x32xf32>
    %135 = math.exp %134 : vector<8x32xf32>
    %cst_55 = arith.constant 1.000000e+00 : f32
    %136 = vector.broadcast %cst_55 : f32 to vector<8x32xf32>
    %137 = arith.addf %136, %135 : vector<8x32xf32>
    %138 = arith.divf %136, %137 : vector<8x32xf32>
    %139 = vector.extract_strided_slice %119 {offsets = [0, 64], sizes = [8, 32], strides = [1, 1]} : vector<8x96xf32> to vector<8x32xf32>
    %140 = arith.mulf %133, %128 : vector<8x32xf32>
    %141 = arith.addf %139, %140 : vector<8x32xf32>
    %142 = math.tanh %141 : vector<8x32xf32>
    %c6 = arith.constant 6 : index
    %c0_56 = arith.constant 0 : index
    %c0_57 = arith.constant 0 : index
    %143 = vector.load %arg1[%c6, %c0_56, %c0_57] : memref<8x8x1xf32, #tpu.memory_space<vmem>>, vector<1x8x1xf32>
    %144 = vector.shape_cast %143 : vector<1x8x1xf32> to vector<8x1xf32>
    %145 = arith.subf %75, %142 : vector<8x32xf32>
    %146 = arith.mulf %138, %145 : vector<8x32xf32>
    %147 = arith.addf %142, %146 : vector<8x32xf32>
    %148 = arith.subf %147, %75 : vector<8x32xf32>
    %149 = vector.broadcast %144 : vector<8x1xf32> to vector<8x32xf32>
    %150 = arith.mulf %149, %148 : vector<8x32xf32>
    %151 = arith.addf %75, %150 : vector<8x32xf32>
    %c1_58 = arith.constant 1 : index
    %c48_59 = arith.constant 48 : index
    %c0_60 = arith.constant 0 : index
    %152 = vector.load %arg11[%c1_58, %c48_59, %c0_60] : memref<2x64x32xf32, #tpu.memory_space<vmem>>, vector<1x8x32xf32>
    %153 = vector.shape_cast %152 : vector<1x8x32xf32> to vector<8x32xf32>
    %154 = vector.shape_cast %151 : vector<8x32xf32> to vector<1x8x32xf32>
    tpu.vector_store %arg11[%c1_58, %c48_59, %c0_60], %154 {strides = array<i32>} : memref<2x64x32xf32, #tpu.memory_space<vmem>>, vector<1x8x32xf32>,
    %cst_61 = arith.constant dense<0.000000e+00> : vector<8x96xf32>
    %155 = tpu.matmul %114, %15, %cst_61 {dimension_numbers = #tpu.dot_dimension_numbers<[1], [0], [0], [1], [0, 0, 1, 1], [], []>} : vector<8x32xf32>, vector<32x96xf32>, vector<8x96xf32> -> vector<8x96xf32>
    %cst_62 = arith.constant dense<0.000000e+00> : vector<8x96xf32>
    %156 = tpu.matmul %151, %17, %cst_62 {dimension_numbers = #tpu.dot_dimension_numbers<[1], [0], [0], [1], [0, 0, 1, 1], [], []>} : vector<8x32xf32>, vector<32x96xf32>, vector<8x96xf32> -> vector<8x96xf32>
    %c0_63 = arith.constant 0 : index
    %c16 = arith.constant 16 : index
    %c0_64 = arith.constant 0 : index
    %157 = vector.load %arg12[%c0_63, %c16, %c0_64] : memref<2x64x96xf32, #tpu.memory_space<vmem>>, vector<1x8x96xf32>
    %158 = vector.shape_cast %157 : vector<1x8x96xf32> to vector<8x96xf32>
    %159 = vector.extract_strided_slice %158 {offsets = [0, 0], sizes = [8, 32], strides = [1, 1]} : vector<8x96xf32> to vector<8x32xf32>
    %160 = vector.extract_strided_slice %155 {offsets = [0, 0], sizes = [8, 32], strides = [1, 1]} : vector<8x96xf32> to vector<8x32xf32>
    %161 = arith.addf %159, %160 : vector<8x32xf32>
    %162 = vector.extract_strided_slice %158 {offsets = [0, 32], sizes = [8, 32], strides = [1, 1]} : vector<8x96xf32> to vector<8x32xf32>
    %163 = vector.extract_strided_slice %155 {offsets = [0, 32], sizes = [8, 32], strides = [1, 1]} : vector<8x96xf32> to vector<8x32xf32>
    %164 = arith.addf %162, %163 : vector<8x32xf32>
    %165 = vector.extract_strided_slice %155 {offsets = [0, 64], sizes = [8, 32], strides = [1, 1]} : vector<8x96xf32> to vector<8x32xf32>
    %166 = vector.broadcast %19 : vector<1x32xf32> to vector<8x32xf32>
    %167 = arith.addf %165, %166 : vector<8x32xf32>
    %168 = arith.negf %161 : vector<8x32xf32>
    %169 = math.exp %168 : vector<8x32xf32>
    %cst_65 = arith.constant 1.000000e+00 : f32
    %170 = vector.broadcast %cst_65 : f32 to vector<8x32xf32>
    %171 = arith.addf %170, %169 : vector<8x32xf32>
    %172 = arith.divf %170, %171 : vector<8x32xf32>
    %173 = arith.negf %164 : vector<8x32xf32>
    %174 = math.exp %173 : vector<8x32xf32>
    %cst_66 = arith.constant 1.000000e+00 : f32
    %175 = vector.broadcast %cst_66 : f32 to vector<8x32xf32>
    %176 = arith.addf %175, %174 : vector<8x32xf32>
    %177 = arith.divf %175, %176 : vector<8x32xf32>
    %178 = vector.extract_strided_slice %158 {offsets = [0, 64], sizes = [8, 32], strides = [1, 1]} : vector<8x96xf32> to vector<8x32xf32>
    %179 = arith.mulf %172, %167 : vector<8x32xf32>
    %180 = arith.addf %178, %179 : vector<8x32xf32>
    %181 = math.tanh %180 : vector<8x32xf32>
    %c2 = arith.constant 2 : index
    %c0_67 = arith.constant 0 : index
    %c0_68 = arith.constant 0 : index
    %182 = vector.load %arg1[%c2, %c0_67, %c0_68] : memref<8x8x1xf32, #tpu.memory_space<vmem>>, vector<1x8x1xf32>
    %183 = vector.shape_cast %182 : vector<1x8x1xf32> to vector<8x1xf32>
    %184 = arith.subf %114, %181 : vector<8x32xf32>
    %185 = arith.mulf %177, %184 : vector<8x32xf32>
    %186 = arith.addf %181, %185 : vector<8x32xf32>
    %187 = arith.subf %186, %114 : vector<8x32xf32>
    %188 = vector.broadcast %183 : vector<8x1xf32> to vector<8x32xf32>
    %189 = arith.mulf %188, %187 : vector<8x32xf32>
    %190 = arith.addf %114, %189 : vector<8x32xf32>
    %c0_69 = arith.constant 0 : index
    %c16_70 = arith.constant 16 : index
    %c0_71 = arith.constant 0 : index
    %191 = vector.load %arg11[%c0_69, %c16_70, %c0_71] : memref<2x64x32xf32, #tpu.memory_space<vmem>>, vector<1x8x32xf32>
    %192 = vector.shape_cast %191 : vector<1x8x32xf32> to vector<8x32xf32>
    %193 = vector.shape_cast %190 : vector<8x32xf32> to vector<1x8x32xf32>
    tpu.vector_store %arg11[%c0_69, %c16_70, %c0_71], %193 {strides = array<i32>} : memref<2x64x32xf32, #tpu.memory_space<vmem>>, vector<1x8x32xf32>,
    %c1_72 = arith.constant 1 : index
    %c40 = arith.constant 40 : index
    %c0_73 = arith.constant 0 : index
    %194 = vector.load %arg12[%c1_72, %c40, %c0_73] : memref<2x64x96xf32, #tpu.memory_space<vmem>>, vector<1x8x96xf32>
    %195 = vector.shape_cast %194 : vector<1x8x96xf32> to vector<8x96xf32>
    %196 = vector.extract_strided_slice %195 {offsets = [0, 0], sizes = [8, 32], strides = [1, 1]} : vector<8x96xf32> to vector<8x32xf32>
    %197 = vector.extract_strided_slice %156 {offsets = [0, 0], sizes = [8, 32], strides = [1, 1]} : vector<8x96xf32> to vector<8x32xf32>
    %198 = arith.addf %196, %197 : vector<8x32xf32>
    %199 = vector.extract_strided_slice %195 {offsets = [0, 32], sizes = [8, 32], strides = [1, 1]} : vector<8x96xf32> to vector<8x32xf32>
    %200 = vector.extract_strided_slice %156 {offsets = [0, 32], sizes = [8, 32], strides = [1, 1]} : vector<8x96xf32> to vector<8x32xf32>
    %201 = arith.addf %199, %200 : vector<8x32xf32>
    %202 = vector.extract_strided_slice %156 {offsets = [0, 64], sizes = [8, 32], strides = [1, 1]} : vector<8x96xf32> to vector<8x32xf32>
    %203 = vector.broadcast %20 : vector<1x32xf32> to vector<8x32xf32>
    %204 = arith.addf %202, %203 : vector<8x32xf32>
    %205 = arith.negf %198 : vector<8x32xf32>
    %206 = math.exp %205 : vector<8x32xf32>
    %cst_74 = arith.constant 1.000000e+00 : f32
    %207 = vector.broadcast %cst_74 : f32 to vector<8x32xf32>
    %208 = arith.addf %207, %206 : vector<8x32xf32>
    %209 = arith.divf %207, %208 : vector<8x32xf32>
    %210 = arith.negf %201 : vector<8x32xf32>
    %211 = math.exp %210 : vector<8x32xf32>
    %cst_75 = arith.constant 1.000000e+00 : f32
    %212 = vector.broadcast %cst_75 : f32 to vector<8x32xf32>
    %213 = arith.addf %212, %211 : vector<8x32xf32>
    %214 = arith.divf %212, %213 : vector<8x32xf32>
    %215 = vector.extract_strided_slice %195 {offsets = [0, 64], sizes = [8, 32], strides = [1, 1]} : vector<8x96xf32> to vector<8x32xf32>
    %216 = arith.mulf %209, %204 : vector<8x32xf32>
    %217 = arith.addf %215, %216 : vector<8x32xf32>
    %218 = math.tanh %217 : vector<8x32xf32>
    %c5 = arith.constant 5 : index
    %c0_76 = arith.constant 0 : index
    %c0_77 = arith.constant 0 : index
    %219 = vector.load %arg1[%c5, %c0_76, %c0_77] : memref<8x8x1xf32, #tpu.memory_space<vmem>>, vector<1x8x1xf32>
    %220 = vector.shape_cast %219 : vector<1x8x1xf32> to vector<8x1xf32>
    %221 = arith.subf %151, %218 : vector<8x32xf32>
    %222 = arith.mulf %214, %221 : vector<8x32xf32>
    %223 = arith.addf %218, %222 : vector<8x32xf32>
    %224 = arith.subf %223, %151 : vector<8x32xf32>
    %225 = vector.broadcast %220 : vector<8x1xf32> to vector<8x32xf32>
    %226 = arith.mulf %225, %224 : vector<8x32xf32>
    %227 = arith.addf %151, %226 : vector<8x32xf32>
    %c1_78 = arith.constant 1 : index
    %c40_79 = arith.constant 40 : index
    %c0_80 = arith.constant 0 : index
    %228 = vector.load %arg11[%c1_78, %c40_79, %c0_80] : memref<2x64x32xf32, #tpu.memory_space<vmem>>, vector<1x8x32xf32>
    %229 = vector.shape_cast %228 : vector<1x8x32xf32> to vector<8x32xf32>
    %230 = vector.shape_cast %227 : vector<8x32xf32> to vector<1x8x32xf32>
    tpu.vector_store %arg11[%c1_78, %c40_79, %c0_80], %230 {strides = array<i32>} : memref<2x64x32xf32, #tpu.memory_space<vmem>>, vector<1x8x32xf32>,
    %cst_81 = arith.constant dense<0.000000e+00> : vector<8x96xf32>
    %231 = tpu.matmul %190, %15, %cst_81 {dimension_numbers = #tpu.dot_dimension_numbers<[1], [0], [0], [1], [0, 0, 1, 1], [], []>} : vector<8x32xf32>, vector<32x96xf32>, vector<8x96xf32> -> vector<8x96xf32>
    %cst_82 = arith.constant dense<0.000000e+00> : vector<8x96xf32>
    %232 = tpu.matmul %227, %17, %cst_82 {dimension_numbers = #tpu.dot_dimension_numbers<[1], [0], [0], [1], [0, 0, 1, 1], [], []>} : vector<8x32xf32>, vector<32x96xf32>, vector<8x96xf32> -> vector<8x96xf32>
    %c0_83 = arith.constant 0 : index
    %c24 = arith.constant 24 : index
    %c0_84 = arith.constant 0 : index
    %233 = vector.load %arg12[%c0_83, %c24, %c0_84] : memref<2x64x96xf32, #tpu.memory_space<vmem>>, vector<1x8x96xf32>
    %234 = vector.shape_cast %233 : vector<1x8x96xf32> to vector<8x96xf32>
    %235 = vector.extract_strided_slice %234 {offsets = [0, 0], sizes = [8, 32], strides = [1, 1]} : vector<8x96xf32> to vector<8x32xf32>
    %236 = vector.extract_strided_slice %231 {offsets = [0, 0], sizes = [8, 32], strides = [1, 1]} : vector<8x96xf32> to vector<8x32xf32>
    %237 = arith.addf %235, %236 : vector<8x32xf32>
    %238 = vector.extract_strided_slice %234 {offsets = [0, 32], sizes = [8, 32], strides = [1, 1]} : vector<8x96xf32> to vector<8x32xf32>
    %239 = vector.extract_strided_slice %231 {offsets = [0, 32], sizes = [8, 32], strides = [1, 1]} : vector<8x96xf32> to vector<8x32xf32>
    %240 = arith.addf %238, %239 : vector<8x32xf32>
    %241 = vector.extract_strided_slice %231 {offsets = [0, 64], sizes = [8, 32], strides = [1, 1]} : vector<8x96xf32> to vector<8x32xf32>
    %242 = vector.broadcast %19 : vector<1x32xf32> to vector<8x32xf32>
    %243 = arith.addf %241, %242 : vector<8x32xf32>
    %244 = arith.negf %237 : vector<8x32xf32>
    %245 = math.exp %244 : vector<8x32xf32>
    %cst_85 = arith.constant 1.000000e+00 : f32
    %246 = vector.broadcast %cst_85 : f32 to vector<8x32xf32>
    %247 = arith.addf %246, %245 : vector<8x32xf32>
    %248 = arith.divf %246, %247 : vector<8x32xf32>
    %249 = arith.negf %240 : vector<8x32xf32>
    %250 = math.exp %249 : vector<8x32xf32>
    %cst_86 = arith.constant 1.000000e+00 : f32
    %251 = vector.broadcast %cst_86 : f32 to vector<8x32xf32>
    %252 = arith.addf %251, %250 : vector<8x32xf32>
    %253 = arith.divf %251, %252 : vector<8x32xf32>
    %254 = vector.extract_strided_slice %234 {offsets = [0, 64], sizes = [8, 32], strides = [1, 1]} : vector<8x96xf32> to vector<8x32xf32>
    %255 = arith.mulf %248, %243 : vector<8x32xf32>
    %256 = arith.addf %254, %255 : vector<8x32xf32>
    %257 = math.tanh %256 : vector<8x32xf32>
    %c3 = arith.constant 3 : index
    %c0_87 = arith.constant 0 : index
    %c0_88 = arith.constant 0 : index
    %258 = vector.load %arg1[%c3, %c0_87, %c0_88] : memref<8x8x1xf32, #tpu.memory_space<vmem>>, vector<1x8x1xf32>
    %259 = vector.shape_cast %258 : vector<1x8x1xf32> to vector<8x1xf32>
    %260 = arith.subf %190, %257 : vector<8x32xf32>
    %261 = arith.mulf %253, %260 : vector<8x32xf32>
    %262 = arith.addf %257, %261 : vector<8x32xf32>
    %263 = arith.subf %262, %190 : vector<8x32xf32>
    %264 = vector.broadcast %259 : vector<8x1xf32> to vector<8x32xf32>
    %265 = arith.mulf %264, %263 : vector<8x32xf32>
    %266 = arith.addf %190, %265 : vector<8x32xf32>
    %c0_89 = arith.constant 0 : index
    %c24_90 = arith.constant 24 : index
    %c0_91 = arith.constant 0 : index
    %267 = vector.load %arg11[%c0_89, %c24_90, %c0_91] : memref<2x64x32xf32, #tpu.memory_space<vmem>>, vector<1x8x32xf32>
    %268 = vector.shape_cast %267 : vector<1x8x32xf32> to vector<8x32xf32>
    %269 = vector.shape_cast %266 : vector<8x32xf32> to vector<1x8x32xf32>
    tpu.vector_store %arg11[%c0_89, %c24_90, %c0_91], %269 {strides = array<i32>} : memref<2x64x32xf32, #tpu.memory_space<vmem>>, vector<1x8x32xf32>,
    %c1_92 = arith.constant 1 : index
    %c32 = arith.constant 32 : index
    %c0_93 = arith.constant 0 : index
    %270 = vector.load %arg12[%c1_92, %c32, %c0_93] : memref<2x64x96xf32, #tpu.memory_space<vmem>>, vector<1x8x96xf32>
    %271 = vector.shape_cast %270 : vector<1x8x96xf32> to vector<8x96xf32>
    %272 = vector.extract_strided_slice %271 {offsets = [0, 0], sizes = [8, 32], strides = [1, 1]} : vector<8x96xf32> to vector<8x32xf32>
    %273 = vector.extract_strided_slice %232 {offsets = [0, 0], sizes = [8, 32], strides = [1, 1]} : vector<8x96xf32> to vector<8x32xf32>
    %274 = arith.addf %272, %273 : vector<8x32xf32>
    %275 = vector.extract_strided_slice %271 {offsets = [0, 32], sizes = [8, 32], strides = [1, 1]} : vector<8x96xf32> to vector<8x32xf32>
    %276 = vector.extract_strided_slice %232 {offsets = [0, 32], sizes = [8, 32], strides = [1, 1]} : vector<8x96xf32> to vector<8x32xf32>
    %277 = arith.addf %275, %276 : vector<8x32xf32>
    %278 = vector.extract_strided_slice %232 {offsets = [0, 64], sizes = [8, 32], strides = [1, 1]} : vector<8x96xf32> to vector<8x32xf32>
    %279 = vector.broadcast %20 : vector<1x32xf32> to vector<8x32xf32>
    %280 = arith.addf %278, %279 : vector<8x32xf32>
    %281 = arith.negf %274 : vector<8x32xf32>
    %282 = math.exp %281 : vector<8x32xf32>
    %cst_94 = arith.constant 1.000000e+00 : f32
    %283 = vector.broadcast %cst_94 : f32 to vector<8x32xf32>
    %284 = arith.addf %283, %282 : vector<8x32xf32>
    %285 = arith.divf %283, %284 : vector<8x32xf32>
    %286 = arith.negf %277 : vector<8x32xf32>
    %287 = math.exp %286 : vector<8x32xf32>
    %cst_95 = arith.constant 1.000000e+00 : f32
    %288 = vector.broadcast %cst_95 : f32 to vector<8x32xf32>
    %289 = arith.addf %288, %287 : vector<8x32xf32>
    %290 = arith.divf %288, %289 : vector<8x32xf32>
    %291 = vector.extract_strided_slice %271 {offsets = [0, 64], sizes = [8, 32], strides = [1, 1]} : vector<8x96xf32> to vector<8x32xf32>
    %292 = arith.mulf %285, %280 : vector<8x32xf32>
    %293 = arith.addf %291, %292 : vector<8x32xf32>
    %294 = math.tanh %293 : vector<8x32xf32>
    %c4 = arith.constant 4 : index
    %c0_96 = arith.constant 0 : index
    %c0_97 = arith.constant 0 : index
    %295 = vector.load %arg1[%c4, %c0_96, %c0_97] : memref<8x8x1xf32, #tpu.memory_space<vmem>>, vector<1x8x1xf32>
    %296 = vector.shape_cast %295 : vector<1x8x1xf32> to vector<8x1xf32>
    %297 = arith.subf %227, %294 : vector<8x32xf32>
    %298 = arith.mulf %290, %297 : vector<8x32xf32>
    %299 = arith.addf %294, %298 : vector<8x32xf32>
    %300 = arith.subf %299, %227 : vector<8x32xf32>
    %301 = vector.broadcast %296 : vector<8x1xf32> to vector<8x32xf32>
    %302 = arith.mulf %301, %300 : vector<8x32xf32>
    %303 = arith.addf %227, %302 : vector<8x32xf32>
    %c1_98 = arith.constant 1 : index
    %c32_99 = arith.constant 32 : index
    %c0_100 = arith.constant 0 : index
    %304 = vector.load %arg11[%c1_98, %c32_99, %c0_100] : memref<2x64x32xf32, #tpu.memory_space<vmem>>, vector<1x8x32xf32>
    %305 = vector.shape_cast %304 : vector<1x8x32xf32> to vector<8x32xf32>
    %306 = vector.shape_cast %303 : vector<8x32xf32> to vector<1x8x32xf32>
    tpu.vector_store %arg11[%c1_98, %c32_99, %c0_100], %306 {strides = array<i32>} : memref<2x64x32xf32, #tpu.memory_space<vmem>>, vector<1x8x32xf32>,
    %cst_101 = arith.constant dense<0.000000e+00> : vector<8x96xf32>
    %307 = tpu.matmul %266, %15, %cst_101 {dimension_numbers = #tpu.dot_dimension_numbers<[1], [0], [0], [1], [0, 0, 1, 1], [], []>} : vector<8x32xf32>, vector<32x96xf32>, vector<8x96xf32> -> vector<8x96xf32>
    %cst_102 = arith.constant dense<0.000000e+00> : vector<8x96xf32>
    %308 = tpu.matmul %303, %17, %cst_102 {dimension_numbers = #tpu.dot_dimension_numbers<[1], [0], [0], [1], [0, 0, 1, 1], [], []>} : vector<8x32xf32>, vector<32x96xf32>, vector<8x96xf32> -> vector<8x96xf32>
    %c0_103 = arith.constant 0 : index
    %c32_104 = arith.constant 32 : index
    %c0_105 = arith.constant 0 : index
    %309 = vector.load %arg12[%c0_103, %c32_104, %c0_105] : memref<2x64x96xf32, #tpu.memory_space<vmem>>, vector<1x8x96xf32>
    %310 = vector.shape_cast %309 : vector<1x8x96xf32> to vector<8x96xf32>
    %311 = vector.extract_strided_slice %310 {offsets = [0, 0], sizes = [8, 32], strides = [1, 1]} : vector<8x96xf32> to vector<8x32xf32>
    %312 = vector.extract_strided_slice %307 {offsets = [0, 0], sizes = [8, 32], strides = [1, 1]} : vector<8x96xf32> to vector<8x32xf32>
    %313 = arith.addf %311, %312 : vector<8x32xf32>
    %314 = vector.extract_strided_slice %310 {offsets = [0, 32], sizes = [8, 32], strides = [1, 1]} : vector<8x96xf32> to vector<8x32xf32>
    %315 = vector.extract_strided_slice %307 {offsets = [0, 32], sizes = [8, 32], strides = [1, 1]} : vector<8x96xf32> to vector<8x32xf32>
    %316 = arith.addf %314, %315 : vector<8x32xf32>
    %317 = vector.extract_strided_slice %307 {offsets = [0, 64], sizes = [8, 32], strides = [1, 1]} : vector<8x96xf32> to vector<8x32xf32>
    %318 = vector.broadcast %19 : vector<1x32xf32> to vector<8x32xf32>
    %319 = arith.addf %317, %318 : vector<8x32xf32>
    %320 = arith.negf %313 : vector<8x32xf32>
    %321 = math.exp %320 : vector<8x32xf32>
    %cst_106 = arith.constant 1.000000e+00 : f32
    %322 = vector.broadcast %cst_106 : f32 to vector<8x32xf32>
    %323 = arith.addf %322, %321 : vector<8x32xf32>
    %324 = arith.divf %322, %323 : vector<8x32xf32>
    %325 = arith.negf %316 : vector<8x32xf32>
    %326 = math.exp %325 : vector<8x32xf32>
    %cst_107 = arith.constant 1.000000e+00 : f32
    %327 = vector.broadcast %cst_107 : f32 to vector<8x32xf32>
    %328 = arith.addf %327, %326 : vector<8x32xf32>
    %329 = arith.divf %327, %328 : vector<8x32xf32>
    %330 = vector.extract_strided_slice %310 {offsets = [0, 64], sizes = [8, 32], strides = [1, 1]} : vector<8x96xf32> to vector<8x32xf32>
    %331 = arith.mulf %324, %319 : vector<8x32xf32>
    %332 = arith.addf %330, %331 : vector<8x32xf32>
    %333 = math.tanh %332 : vector<8x32xf32>
    %c4_108 = arith.constant 4 : index
    %c0_109 = arith.constant 0 : index
    %c0_110 = arith.constant 0 : index
    %334 = vector.load %arg1[%c4_108, %c0_109, %c0_110] : memref<8x8x1xf32, #tpu.memory_space<vmem>>, vector<1x8x1xf32>
    %335 = vector.shape_cast %334 : vector<1x8x1xf32> to vector<8x1xf32>
    %336 = arith.subf %266, %333 : vector<8x32xf32>
    %337 = arith.mulf %329, %336 : vector<8x32xf32>
    %338 = arith.addf %333, %337 : vector<8x32xf32>
    %339 = arith.subf %338, %266 : vector<8x32xf32>
    %340 = vector.broadcast %335 : vector<8x1xf32> to vector<8x32xf32>
    %341 = arith.mulf %340, %339 : vector<8x32xf32>
    %342 = arith.addf %266, %341 : vector<8x32xf32>
    %c0_111 = arith.constant 0 : index
    %c32_112 = arith.constant 32 : index
    %c0_113 = arith.constant 0 : index
    %343 = vector.load %arg11[%c0_111, %c32_112, %c0_113] : memref<2x64x32xf32, #tpu.memory_space<vmem>>, vector<1x8x32xf32>
    %344 = vector.shape_cast %343 : vector<1x8x32xf32> to vector<8x32xf32>
    %345 = vector.shape_cast %342 : vector<8x32xf32> to vector<1x8x32xf32>
    tpu.vector_store %arg11[%c0_111, %c32_112, %c0_113], %345 {strides = array<i32>} : memref<2x64x32xf32, #tpu.memory_space<vmem>>, vector<1x8x32xf32>,
    %c1_114 = arith.constant 1 : index
    %c24_115 = arith.constant 24 : index
    %c0_116 = arith.constant 0 : index
    %346 = vector.load %arg12[%c1_114, %c24_115, %c0_116] : memref<2x64x96xf32, #tpu.memory_space<vmem>>, vector<1x8x96xf32>
    %347 = vector.shape_cast %346 : vector<1x8x96xf32> to vector<8x96xf32>
    %348 = vector.extract_strided_slice %347 {offsets = [0, 0], sizes = [8, 32], strides = [1, 1]} : vector<8x96xf32> to vector<8x32xf32>
    %349 = vector.extract_strided_slice %308 {offsets = [0, 0], sizes = [8, 32], strides = [1, 1]} : vector<8x96xf32> to vector<8x32xf32>
    %350 = arith.addf %348, %349 : vector<8x32xf32>
    %351 = vector.extract_strided_slice %347 {offsets = [0, 32], sizes = [8, 32], strides = [1, 1]} : vector<8x96xf32> to vector<8x32xf32>
    %352 = vector.extract_strided_slice %308 {offsets = [0, 32], sizes = [8, 32], strides = [1, 1]} : vector<8x96xf32> to vector<8x32xf32>
    %353 = arith.addf %351, %352 : vector<8x32xf32>
    %354 = vector.extract_strided_slice %308 {offsets = [0, 64], sizes = [8, 32], strides = [1, 1]} : vector<8x96xf32> to vector<8x32xf32>
    %355 = vector.broadcast %20 : vector<1x32xf32> to vector<8x32xf32>
    %356 = arith.addf %354, %355 : vector<8x32xf32>
    %357 = arith.negf %350 : vector<8x32xf32>
    %358 = math.exp %357 : vector<8x32xf32>
    %cst_117 = arith.constant 1.000000e+00 : f32
    %359 = vector.broadcast %cst_117 : f32 to vector<8x32xf32>
    %360 = arith.addf %359, %358 : vector<8x32xf32>
    %361 = arith.divf %359, %360 : vector<8x32xf32>
    %362 = arith.negf %353 : vector<8x32xf32>
    %363 = math.exp %362 : vector<8x32xf32>
    %cst_118 = arith.constant 1.000000e+00 : f32
    %364 = vector.broadcast %cst_118 : f32 to vector<8x32xf32>
    %365 = arith.addf %364, %363 : vector<8x32xf32>
    %366 = arith.divf %364, %365 : vector<8x32xf32>
    %367 = vector.extract_strided_slice %347 {offsets = [0, 64], sizes = [8, 32], strides = [1, 1]} : vector<8x96xf32> to vector<8x32xf32>
    %368 = arith.mulf %361, %356 : vector<8x32xf32>
    %369 = arith.addf %367, %368 : vector<8x32xf32>
    %370 = math.tanh %369 : vector<8x32xf32>
    %c3_119 = arith.constant 3 : index
    %c0_120 = arith.constant 0 : index
    %c0_121 = arith.constant 0 : index
    %371 = vector.load %arg1[%c3_119, %c0_120, %c0_121] : memref<8x8x1xf32, #tpu.memory_space<vmem>>, vector<1x8x1xf32>
    %372 = vector.shape_cast %371 : vector<1x8x1xf32> to vector<8x1xf32>
    %373 = arith.subf %303, %370 : vector<8x32xf32>
    %374 = arith.mulf %366, %373 : vector<8x32xf32>
    %375 = arith.addf %370, %374 : vector<8x32xf32>
    %376 = arith.subf %375, %303 : vector<8x32xf32>
    %377 = vector.broadcast %372 : vector<8x1xf32> to vector<8x32xf32>
    %378 = arith.mulf %377, %376 : vector<8x32xf32>
    %379 = arith.addf %303, %378 : vector<8x32xf32>
    %c1_122 = arith.constant 1 : index
    %c24_123 = arith.constant 24 : index
    %c0_124 = arith.constant 0 : index
    %380 = vector.load %arg11[%c1_122, %c24_123, %c0_124] : memref<2x64x32xf32, #tpu.memory_space<vmem>>, vector<1x8x32xf32>
    %381 = vector.shape_cast %380 : vector<1x8x32xf32> to vector<8x32xf32>
    %382 = vector.shape_cast %379 : vector<8x32xf32> to vector<1x8x32xf32>
    tpu.vector_store %arg11[%c1_122, %c24_123, %c0_124], %382 {strides = array<i32>} : memref<2x64x32xf32, #tpu.memory_space<vmem>>, vector<1x8x32xf32>,
    %cst_125 = arith.constant dense<0.000000e+00> : vector<8x96xf32>
    %383 = tpu.matmul %342, %15, %cst_125 {dimension_numbers = #tpu.dot_dimension_numbers<[1], [0], [0], [1], [0, 0, 1, 1], [], []>} : vector<8x32xf32>, vector<32x96xf32>, vector<8x96xf32> -> vector<8x96xf32>
    %cst_126 = arith.constant dense<0.000000e+00> : vector<8x96xf32>
    %384 = tpu.matmul %379, %17, %cst_126 {dimension_numbers = #tpu.dot_dimension_numbers<[1], [0], [0], [1], [0, 0, 1, 1], [], []>} : vector<8x32xf32>, vector<32x96xf32>, vector<8x96xf32> -> vector<8x96xf32>
    %c0_127 = arith.constant 0 : index
    %c40_128 = arith.constant 40 : index
    %c0_129 = arith.constant 0 : index
    %385 = vector.load %arg12[%c0_127, %c40_128, %c0_129] : memref<2x64x96xf32, #tpu.memory_space<vmem>>, vector<1x8x96xf32>
    %386 = vector.shape_cast %385 : vector<1x8x96xf32> to vector<8x96xf32>
    %387 = vector.extract_strided_slice %386 {offsets = [0, 0], sizes = [8, 32], strides = [1, 1]} : vector<8x96xf32> to vector<8x32xf32>
    %388 = vector.extract_strided_slice %383 {offsets = [0, 0], sizes = [8, 32], strides = [1, 1]} : vector<8x96xf32> to vector<8x32xf32>
    %389 = arith.addf %387, %388 : vector<8x32xf32>
    %390 = vector.extract_strided_slice %386 {offsets = [0, 32], sizes = [8, 32], strides = [1, 1]} : vector<8x96xf32> to vector<8x32xf32>
    %391 = vector.extract_strided_slice %383 {offsets = [0, 32], sizes = [8, 32], strides = [1, 1]} : vector<8x96xf32> to vector<8x32xf32>
    %392 = arith.addf %390, %391 : vector<8x32xf32>
    %393 = vector.extract_strided_slice %383 {offsets = [0, 64], sizes = [8, 32], strides = [1, 1]} : vector<8x96xf32> to vector<8x32xf32>
    %394 = vector.broadcast %19 : vector<1x32xf32> to vector<8x32xf32>
    %395 = arith.addf %393, %394 : vector<8x32xf32>
    %396 = arith.negf %389 : vector<8x32xf32>
    %397 = math.exp %396 : vector<8x32xf32>
    %cst_130 = arith.constant 1.000000e+00 : f32
    %398 = vector.broadcast %cst_130 : f32 to vector<8x32xf32>
    %399 = arith.addf %398, %397 : vector<8x32xf32>
    %400 = arith.divf %398, %399 : vector<8x32xf32>
    %401 = arith.negf %392 : vector<8x32xf32>
    %402 = math.exp %401 : vector<8x32xf32>
    %cst_131 = arith.constant 1.000000e+00 : f32
    %403 = vector.broadcast %cst_131 : f32 to vector<8x32xf32>
    %404 = arith.addf %403, %402 : vector<8x32xf32>
    %405 = arith.divf %403, %404 : vector<8x32xf32>
    %406 = vector.extract_strided_slice %386 {offsets = [0, 64], sizes = [8, 32], strides = [1, 1]} : vector<8x96xf32> to vector<8x32xf32>
    %407 = arith.mulf %400, %395 : vector<8x32xf32>
    %408 = arith.addf %406, %407 : vector<8x32xf32>
    %409 = math.tanh %408 : vector<8x32xf32>
    %c5_132 = arith.constant 5 : index
    %c0_133 = arith.constant 0 : index
    %c0_134 = arith.constant 0 : index
    %410 = vector.load %arg1[%c5_132, %c0_133, %c0_134] : memref<8x8x1xf32, #tpu.memory_space<vmem>>, vector<1x8x1xf32>
    %411 = vector.shape_cast %410 : vector<1x8x1xf32> to vector<8x1xf32>
    %412 = arith.subf %342, %409 : vector<8x32xf32>
    %413 = arith.mulf %405, %412 : vector<8x32xf32>
    %414 = arith.addf %409, %413 : vector<8x32xf32>
    %415 = arith.subf %414, %342 : vector<8x32xf32>
    %416 = vector.broadcast %411 : vector<8x1xf32> to vector<8x32xf32>
    %417 = arith.mulf %416, %415 : vector<8x32xf32>
    %418 = arith.addf %342, %417 : vector<8x32xf32>
    %c0_135 = arith.constant 0 : index
    %c40_136 = arith.constant 40 : index
    %c0_137 = arith.constant 0 : index
    %419 = vector.load %arg11[%c0_135, %c40_136, %c0_137] : memref<2x64x32xf32, #tpu.memory_space<vmem>>, vector<1x8x32xf32>
    %420 = vector.shape_cast %419 : vector<1x8x32xf32> to vector<8x32xf32>
    %421 = vector.shape_cast %418 : vector<8x32xf32> to vector<1x8x32xf32>
    tpu.vector_store %arg11[%c0_135, %c40_136, %c0_137], %421 {strides = array<i32>} : memref<2x64x32xf32, #tpu.memory_space<vmem>>, vector<1x8x32xf32>,
    %c1_138 = arith.constant 1 : index
    %c16_139 = arith.constant 16 : index
    %c0_140 = arith.constant 0 : index
    %422 = vector.load %arg12[%c1_138, %c16_139, %c0_140] : memref<2x64x96xf32, #tpu.memory_space<vmem>>, vector<1x8x96xf32>
    %423 = vector.shape_cast %422 : vector<1x8x96xf32> to vector<8x96xf32>
    %424 = vector.extract_strided_slice %423 {offsets = [0, 0], sizes = [8, 32], strides = [1, 1]} : vector<8x96xf32> to vector<8x32xf32>
    %425 = vector.extract_strided_slice %384 {offsets = [0, 0], sizes = [8, 32], strides = [1, 1]} : vector<8x96xf32> to vector<8x32xf32>
    %426 = arith.addf %424, %425 : vector<8x32xf32>
    %427 = vector.extract_strided_slice %423 {offsets = [0, 32], sizes = [8, 32], strides = [1, 1]} : vector<8x96xf32> to vector<8x32xf32>
    %428 = vector.extract_strided_slice %384 {offsets = [0, 32], sizes = [8, 32], strides = [1, 1]} : vector<8x96xf32> to vector<8x32xf32>
    %429 = arith.addf %427, %428 : vector<8x32xf32>
    %430 = vector.extract_strided_slice %384 {offsets = [0, 64], sizes = [8, 32], strides = [1, 1]} : vector<8x96xf32> to vector<8x32xf32>
    %431 = vector.broadcast %20 : vector<1x32xf32> to vector<8x32xf32>
    %432 = arith.addf %430, %431 : vector<8x32xf32>
    %433 = arith.negf %426 : vector<8x32xf32>
    %434 = math.exp %433 : vector<8x32xf32>
    %cst_141 = arith.constant 1.000000e+00 : f32
    %435 = vector.broadcast %cst_141 : f32 to vector<8x32xf32>
    %436 = arith.addf %435, %434 : vector<8x32xf32>
    %437 = arith.divf %435, %436 : vector<8x32xf32>
    %438 = arith.negf %429 : vector<8x32xf32>
    %439 = math.exp %438 : vector<8x32xf32>
    %cst_142 = arith.constant 1.000000e+00 : f32
    %440 = vector.broadcast %cst_142 : f32 to vector<8x32xf32>
    %441 = arith.addf %440, %439 : vector<8x32xf32>
    %442 = arith.divf %440, %441 : vector<8x32xf32>
    %443 = vector.extract_strided_slice %423 {offsets = [0, 64], sizes = [8, 32], strides = [1, 1]} : vector<8x96xf32> to vector<8x32xf32>
    %444 = arith.mulf %437, %432 : vector<8x32xf32>
    %445 = arith.addf %443, %444 : vector<8x32xf32>
    %446 = math.tanh %445 : vector<8x32xf32>
    %c2_143 = arith.constant 2 : index
    %c0_144 = arith.constant 0 : index
    %c0_145 = arith.constant 0 : index
    %447 = vector.load %arg1[%c2_143, %c0_144, %c0_145] : memref<8x8x1xf32, #tpu.memory_space<vmem>>, vector<1x8x1xf32>
    %448 = vector.shape_cast %447 : vector<1x8x1xf32> to vector<8x1xf32>
    %449 = arith.subf %379, %446 : vector<8x32xf32>
    %450 = arith.mulf %442, %449 : vector<8x32xf32>
    %451 = arith.addf %446, %450 : vector<8x32xf32>
    %452 = arith.subf %451, %379 : vector<8x32xf32>
    %453 = vector.broadcast %448 : vector<8x1xf32> to vector<8x32xf32>
    %454 = arith.mulf %453, %452 : vector<8x32xf32>
    %455 = arith.addf %379, %454 : vector<8x32xf32>
    %c1_146 = arith.constant 1 : index
    %c16_147 = arith.constant 16 : index
    %c0_148 = arith.constant 0 : index
    %456 = vector.load %arg11[%c1_146, %c16_147, %c0_148] : memref<2x64x32xf32, #tpu.memory_space<vmem>>, vector<1x8x32xf32>
    %457 = vector.shape_cast %456 : vector<1x8x32xf32> to vector<8x32xf32>
    %458 = vector.shape_cast %455 : vector<8x32xf32> to vector<1x8x32xf32>
    tpu.vector_store %arg11[%c1_146, %c16_147, %c0_148], %458 {strides = array<i32>} : memref<2x64x32xf32, #tpu.memory_space<vmem>>, vector<1x8x32xf32>,
    %cst_149 = arith.constant dense<0.000000e+00> : vector<8x96xf32>
    %459 = tpu.matmul %418, %15, %cst_149 {dimension_numbers = #tpu.dot_dimension_numbers<[1], [0], [0], [1], [0, 0, 1, 1], [], []>} : vector<8x32xf32>, vector<32x96xf32>, vector<8x96xf32> -> vector<8x96xf32>
    %cst_150 = arith.constant dense<0.000000e+00> : vector<8x96xf32>
    %460 = tpu.matmul %455, %17, %cst_150 {dimension_numbers = #tpu.dot_dimension_numbers<[1], [0], [0], [1], [0, 0, 1, 1], [], []>} : vector<8x32xf32>, vector<32x96xf32>, vector<8x96xf32> -> vector<8x96xf32>
    %c0_151 = arith.constant 0 : index
    %c48_152 = arith.constant 48 : index
    %c0_153 = arith.constant 0 : index
    %461 = vector.load %arg12[%c0_151, %c48_152, %c0_153] : memref<2x64x96xf32, #tpu.memory_space<vmem>>, vector<1x8x96xf32>
    %462 = vector.shape_cast %461 : vector<1x8x96xf32> to vector<8x96xf32>
    %463 = vector.extract_strided_slice %462 {offsets = [0, 0], sizes = [8, 32], strides = [1, 1]} : vector<8x96xf32> to vector<8x32xf32>
    %464 = vector.extract_strided_slice %459 {offsets = [0, 0], sizes = [8, 32], strides = [1, 1]} : vector<8x96xf32> to vector<8x32xf32>
    %465 = arith.addf %463, %464 : vector<8x32xf32>
    %466 = vector.extract_strided_slice %462 {offsets = [0, 32], sizes = [8, 32], strides = [1, 1]} : vector<8x96xf32> to vector<8x32xf32>
    %467 = vector.extract_strided_slice %459 {offsets = [0, 32], sizes = [8, 32], strides = [1, 1]} : vector<8x96xf32> to vector<8x32xf32>
    %468 = arith.addf %466, %467 : vector<8x32xf32>
    %469 = vector.extract_strided_slice %459 {offsets = [0, 64], sizes = [8, 32], strides = [1, 1]} : vector<8x96xf32> to vector<8x32xf32>
    %470 = vector.broadcast %19 : vector<1x32xf32> to vector<8x32xf32>
    %471 = arith.addf %469, %470 : vector<8x32xf32>
    %472 = arith.negf %465 : vector<8x32xf32>
    %473 = math.exp %472 : vector<8x32xf32>
    %cst_154 = arith.constant 1.000000e+00 : f32
    %474 = vector.broadcast %cst_154 : f32 to vector<8x32xf32>
    %475 = arith.addf %474, %473 : vector<8x32xf32>
    %476 = arith.divf %474, %475 : vector<8x32xf32>
    %477 = arith.negf %468 : vector<8x32xf32>
    %478 = math.exp %477 : vector<8x32xf32>
    %cst_155 = arith.constant 1.000000e+00 : f32
    %479 = vector.broadcast %cst_155 : f32 to vector<8x32xf32>
    %480 = arith.addf %479, %478 : vector<8x32xf32>
    %481 = arith.divf %479, %480 : vector<8x32xf32>
    %482 = vector.extract_strided_slice %462 {offsets = [0, 64], sizes = [8, 32], strides = [1, 1]} : vector<8x96xf32> to vector<8x32xf32>
    %483 = arith.mulf %476, %471 : vector<8x32xf32>
    %484 = arith.addf %482, %483 : vector<8x32xf32>
    %485 = math.tanh %484 : vector<8x32xf32>
    %c6_156 = arith.constant 6 : index
    %c0_157 = arith.constant 0 : index
    %c0_158 = arith.constant 0 : index
    %486 = vector.load %arg1[%c6_156, %c0_157, %c0_158] : memref<8x8x1xf32, #tpu.memory_space<vmem>>, vector<1x8x1xf32>
    %487 = vector.shape_cast %486 : vector<1x8x1xf32> to vector<8x1xf32>
    %488 = arith.subf %418, %485 : vector<8x32xf32>
    %489 = arith.mulf %481, %488 : vector<8x32xf32>
    %490 = arith.addf %485, %489 : vector<8x32xf32>
    %491 = arith.subf %490, %418 : vector<8x32xf32>
    %492 = vector.broadcast %487 : vector<8x1xf32> to vector<8x32xf32>
    %493 = arith.mulf %492, %491 : vector<8x32xf32>
    %494 = arith.addf %418, %493 : vector<8x32xf32>
    %c0_159 = arith.constant 0 : index
    %c48_160 = arith.constant 48 : index
    %c0_161 = arith.constant 0 : index
    %495 = vector.load %arg11[%c0_159, %c48_160, %c0_161] : memref<2x64x32xf32, #tpu.memory_space<vmem>>, vector<1x8x32xf32>
    %496 = vector.shape_cast %495 : vector<1x8x32xf32> to vector<8x32xf32>
    %497 = vector.shape_cast %494 : vector<8x32xf32> to vector<1x8x32xf32>
    tpu.vector_store %arg11[%c0_159, %c48_160, %c0_161], %497 {strides = array<i32>} : memref<2x64x32xf32, #tpu.memory_space<vmem>>, vector<1x8x32xf32>,
    %c1_162 = arith.constant 1 : index
    %c8_163 = arith.constant 8 : index
    %c0_164 = arith.constant 0 : index
    %498 = vector.load %arg12[%c1_162, %c8_163, %c0_164] : memref<2x64x96xf32, #tpu.memory_space<vmem>>, vector<1x8x96xf32>
    %499 = vector.shape_cast %498 : vector<1x8x96xf32> to vector<8x96xf32>
    %500 = vector.extract_strided_slice %499 {offsets = [0, 0], sizes = [8, 32], strides = [1, 1]} : vector<8x96xf32> to vector<8x32xf32>
    %501 = vector.extract_strided_slice %460 {offsets = [0, 0], sizes = [8, 32], strides = [1, 1]} : vector<8x96xf32> to vector<8x32xf32>
    %502 = arith.addf %500, %501 : vector<8x32xf32>
    %503 = vector.extract_strided_slice %499 {offsets = [0, 32], sizes = [8, 32], strides = [1, 1]} : vector<8x96xf32> to vector<8x32xf32>
    %504 = vector.extract_strided_slice %460 {offsets = [0, 32], sizes = [8, 32], strides = [1, 1]} : vector<8x96xf32> to vector<8x32xf32>
    %505 = arith.addf %503, %504 : vector<8x32xf32>
    %506 = vector.extract_strided_slice %460 {offsets = [0, 64], sizes = [8, 32], strides = [1, 1]} : vector<8x96xf32> to vector<8x32xf32>
    %507 = vector.broadcast %20 : vector<1x32xf32> to vector<8x32xf32>
    %508 = arith.addf %506, %507 : vector<8x32xf32>
    %509 = arith.negf %502 : vector<8x32xf32>
    %510 = math.exp %509 : vector<8x32xf32>
    %cst_165 = arith.constant 1.000000e+00 : f32
    %511 = vector.broadcast %cst_165 : f32 to vector<8x32xf32>
    %512 = arith.addf %511, %510 : vector<8x32xf32>
    %513 = arith.divf %511, %512 : vector<8x32xf32>
    %514 = arith.negf %505 : vector<8x32xf32>
    %515 = math.exp %514 : vector<8x32xf32>
    %cst_166 = arith.constant 1.000000e+00 : f32
    %516 = vector.broadcast %cst_166 : f32 to vector<8x32xf32>
    %517 = arith.addf %516, %515 : vector<8x32xf32>
    %518 = arith.divf %516, %517 : vector<8x32xf32>
    %519 = vector.extract_strided_slice %499 {offsets = [0, 64], sizes = [8, 32], strides = [1, 1]} : vector<8x96xf32> to vector<8x32xf32>
    %520 = arith.mulf %513, %508 : vector<8x32xf32>
    %521 = arith.addf %519, %520 : vector<8x32xf32>
    %522 = math.tanh %521 : vector<8x32xf32>
    %c1_167 = arith.constant 1 : index
    %c0_168 = arith.constant 0 : index
    %c0_169 = arith.constant 0 : index
    %523 = vector.load %arg1[%c1_167, %c0_168, %c0_169] : memref<8x8x1xf32, #tpu.memory_space<vmem>>, vector<1x8x1xf32>
    %524 = vector.shape_cast %523 : vector<1x8x1xf32> to vector<8x1xf32>
    %525 = arith.subf %455, %522 : vector<8x32xf32>
    %526 = arith.mulf %518, %525 : vector<8x32xf32>
    %527 = arith.addf %522, %526 : vector<8x32xf32>
    %528 = arith.subf %527, %455 : vector<8x32xf32>
    %529 = vector.broadcast %524 : vector<8x1xf32> to vector<8x32xf32>
    %530 = arith.mulf %529, %528 : vector<8x32xf32>
    %531 = arith.addf %455, %530 : vector<8x32xf32>
    %c1_170 = arith.constant 1 : index
    %c8_171 = arith.constant 8 : index
    %c0_172 = arith.constant 0 : index
    %532 = vector.load %arg11[%c1_170, %c8_171, %c0_172] : memref<2x64x32xf32, #tpu.memory_space<vmem>>, vector<1x8x32xf32>
    %533 = vector.shape_cast %532 : vector<1x8x32xf32> to vector<8x32xf32>
    %534 = vector.shape_cast %531 : vector<8x32xf32> to vector<1x8x32xf32>
    tpu.vector_store %arg11[%c1_170, %c8_171, %c0_172], %534 {strides = array<i32>} : memref<2x64x32xf32, #tpu.memory_space<vmem>>, vector<1x8x32xf32>,
    %cst_173 = arith.constant dense<0.000000e+00> : vector<8x96xf32>
    %535 = tpu.matmul %494, %15, %cst_173 {dimension_numbers = #tpu.dot_dimension_numbers<[1], [0], [0], [1], [0, 0, 1, 1], [], []>} : vector<8x32xf32>, vector<32x96xf32>, vector<8x96xf32> -> vector<8x96xf32>
    %cst_174 = arith.constant dense<0.000000e+00> : vector<8x96xf32>
    %536 = tpu.matmul %531, %17, %cst_174 {dimension_numbers = #tpu.dot_dimension_numbers<[1], [0], [0], [1], [0, 0, 1, 1], [], []>} : vector<8x32xf32>, vector<32x96xf32>, vector<8x96xf32> -> vector<8x96xf32>
    %c0_175 = arith.constant 0 : index
    %c56_176 = arith.constant 56 : index
    %c0_177 = arith.constant 0 : index
    %537 = vector.load %arg12[%c0_175, %c56_176, %c0_177] : memref<2x64x96xf32, #tpu.memory_space<vmem>>, vector<1x8x96xf32>
    %538 = vector.shape_cast %537 : vector<1x8x96xf32> to vector<8x96xf32>
    %539 = vector.extract_strided_slice %538 {offsets = [0, 0], sizes = [8, 32], strides = [1, 1]} : vector<8x96xf32> to vector<8x32xf32>
    %540 = vector.extract_strided_slice %535 {offsets = [0, 0], sizes = [8, 32], strides = [1, 1]} : vector<8x96xf32> to vector<8x32xf32>
    %541 = arith.addf %539, %540 : vector<8x32xf32>
    %542 = vector.extract_strided_slice %538 {offsets = [0, 32], sizes = [8, 32], strides = [1, 1]} : vector<8x96xf32> to vector<8x32xf32>
    %543 = vector.extract_strided_slice %535 {offsets = [0, 32], sizes = [8, 32], strides = [1, 1]} : vector<8x96xf32> to vector<8x32xf32>
    %544 = arith.addf %542, %543 : vector<8x32xf32>
    %545 = vector.extract_strided_slice %535 {offsets = [0, 64], sizes = [8, 32], strides = [1, 1]} : vector<8x96xf32> to vector<8x32xf32>
    %546 = vector.broadcast %19 : vector<1x32xf32> to vector<8x32xf32>
    %547 = arith.addf %545, %546 : vector<8x32xf32>
    %548 = arith.negf %541 : vector<8x32xf32>
    %549 = math.exp %548 : vector<8x32xf32>
    %cst_178 = arith.constant 1.000000e+00 : f32
    %550 = vector.broadcast %cst_178 : f32 to vector<8x32xf32>
    %551 = arith.addf %550, %549 : vector<8x32xf32>
    %552 = arith.divf %550, %551 : vector<8x32xf32>
    %553 = arith.negf %544 : vector<8x32xf32>
    %554 = math.exp %553 : vector<8x32xf32>
    %cst_179 = arith.constant 1.000000e+00 : f32
    %555 = vector.broadcast %cst_179 : f32 to vector<8x32xf32>
    %556 = arith.addf %555, %554 : vector<8x32xf32>
    %557 = arith.divf %555, %556 : vector<8x32xf32>
    %558 = vector.extract_strided_slice %538 {offsets = [0, 64], sizes = [8, 32], strides = [1, 1]} : vector<8x96xf32> to vector<8x32xf32>
    %559 = arith.mulf %552, %547 : vector<8x32xf32>
    %560 = arith.addf %558, %559 : vector<8x32xf32>
    %561 = math.tanh %560 : vector<8x32xf32>
    %c7_180 = arith.constant 7 : index
    %c0_181 = arith.constant 0 : index
    %c0_182 = arith.constant 0 : index
    %562 = vector.load %arg1[%c7_180, %c0_181, %c0_182] : memref<8x8x1xf32, #tpu.memory_space<vmem>>, vector<1x8x1xf32>
    %563 = vector.shape_cast %562 : vector<1x8x1xf32> to vector<8x1xf32>
    %564 = arith.subf %494, %561 : vector<8x32xf32>
    %565 = arith.mulf %557, %564 : vector<8x32xf32>
    %566 = arith.addf %561, %565 : vector<8x32xf32>
    %567 = arith.subf %566, %494 : vector<8x32xf32>
    %568 = vector.broadcast %563 : vector<8x1xf32> to vector<8x32xf32>
    %569 = arith.mulf %568, %567 : vector<8x32xf32>
    %570 = arith.addf %494, %569 : vector<8x32xf32>
    %c0_183 = arith.constant 0 : index
    %c56_184 = arith.constant 56 : index
    %c0_185 = arith.constant 0 : index
    %571 = vector.load %arg11[%c0_183, %c56_184, %c0_185] : memref<2x64x32xf32, #tpu.memory_space<vmem>>, vector<1x8x32xf32>
    %572 = vector.shape_cast %571 : vector<1x8x32xf32> to vector<8x32xf32>
    %573 = vector.shape_cast %570 : vector<8x32xf32> to vector<1x8x32xf32>
    tpu.vector_store %arg11[%c0_183, %c56_184, %c0_185], %573 {strides = array<i32>} : memref<2x64x32xf32, #tpu.memory_space<vmem>>, vector<1x8x32xf32>,
    %c1_186 = arith.constant 1 : index
    %c0_187 = arith.constant 0 : index
    %c0_188 = arith.constant 0 : index
    %574 = vector.load %arg12[%c1_186, %c0_187, %c0_188] : memref<2x64x96xf32, #tpu.memory_space<vmem>>, vector<1x8x96xf32>
    %575 = vector.shape_cast %574 : vector<1x8x96xf32> to vector<8x96xf32>
    %576 = vector.extract_strided_slice %575 {offsets = [0, 0], sizes = [8, 32], strides = [1, 1]} : vector<8x96xf32> to vector<8x32xf32>
    %577 = vector.extract_strided_slice %536 {offsets = [0, 0], sizes = [8, 32], strides = [1, 1]} : vector<8x96xf32> to vector<8x32xf32>
    %578 = arith.addf %576, %577 : vector<8x32xf32>
    %579 = vector.extract_strided_slice %575 {offsets = [0, 32], sizes = [8, 32], strides = [1, 1]} : vector<8x96xf32> to vector<8x32xf32>
    %580 = vector.extract_strided_slice %536 {offsets = [0, 32], sizes = [8, 32], strides = [1, 1]} : vector<8x96xf32> to vector<8x32xf32>
    %581 = arith.addf %579, %580 : vector<8x32xf32>
    %582 = vector.extract_strided_slice %536 {offsets = [0, 64], sizes = [8, 32], strides = [1, 1]} : vector<8x96xf32> to vector<8x32xf32>
    %583 = vector.broadcast %20 : vector<1x32xf32> to vector<8x32xf32>
    %584 = arith.addf %582, %583 : vector<8x32xf32>
    %585 = arith.negf %578 : vector<8x32xf32>
    %586 = math.exp %585 : vector<8x32xf32>
    %cst_189 = arith.constant 1.000000e+00 : f32
    %587 = vector.broadcast %cst_189 : f32 to vector<8x32xf32>
    %588 = arith.addf %587, %586 : vector<8x32xf32>
    %589 = arith.divf %587, %588 : vector<8x32xf32>
    %590 = arith.negf %581 : vector<8x32xf32>
    %591 = math.exp %590 : vector<8x32xf32>
    %cst_190 = arith.constant 1.000000e+00 : f32
    %592 = vector.broadcast %cst_190 : f32 to vector<8x32xf32>
    %593 = arith.addf %592, %591 : vector<8x32xf32>
    %594 = arith.divf %592, %593 : vector<8x32xf32>
    %595 = vector.extract_strided_slice %575 {offsets = [0, 64], sizes = [8, 32], strides = [1, 1]} : vector<8x96xf32> to vector<8x32xf32>
    %596 = arith.mulf %589, %584 : vector<8x32xf32>
    %597 = arith.addf %595, %596 : vector<8x32xf32>
    %598 = math.tanh %597 : vector<8x32xf32>
    %c0_191 = arith.constant 0 : index
    %c0_192 = arith.constant 0 : index
    %c0_193 = arith.constant 0 : index
    %599 = vector.load %arg1[%c0_191, %c0_192, %c0_193] : memref<8x8x1xf32, #tpu.memory_space<vmem>>, vector<1x8x1xf32>
    %600 = vector.shape_cast %599 : vector<1x8x1xf32> to vector<8x1xf32>
    %601 = arith.subf %531, %598 : vector<8x32xf32>
    %602 = arith.mulf %594, %601 : vector<8x32xf32>
    %603 = arith.addf %598, %602 : vector<8x32xf32>
    %604 = arith.subf %603, %531 : vector<8x32xf32>
    %605 = vector.broadcast %600 : vector<8x1xf32> to vector<8x32xf32>
    %606 = arith.mulf %605, %604 : vector<8x32xf32>
    %607 = arith.addf %531, %606 : vector<8x32xf32>
    %c1_194 = arith.constant 1 : index
    %c0_195 = arith.constant 0 : index
    %c0_196 = arith.constant 0 : index
    %608 = vector.load %arg11[%c1_194, %c0_195, %c0_196] : memref<2x64x32xf32, #tpu.memory_space<vmem>>, vector<1x8x32xf32>
    %609 = vector.shape_cast %608 : vector<1x8x32xf32> to vector<8x32xf32>
    %610 = vector.shape_cast %607 : vector<8x32xf32> to vector<1x8x32xf32>
    tpu.vector_store %arg11[%c1_194, %c0_195, %c0_196], %610 {strides = array<i32>} : memref<2x64x32xf32, #tpu.memory_space<vmem>>, vector<1x8x32xf32>,
    %c0_197 = arith.constant 0 : index
    %c0_198 = arith.constant 0 : index
    %611 = vector.load %arg8[%c0_197, %c0_198] : memref<1x192xf32, #tpu.memory_space<vmem>>, vector<1x192xf32>
    %c0_199 = arith.constant 0 : index
    %c0_200 = arith.constant 0 : index
    %c0_201 = arith.constant 0 : index
    %612 = vector.load %arg11[%c0_199, %c0_200, %c0_201] : memref<2x64x32xf32, #tpu.memory_space<vmem>>, vector<1x64x32xf32>
    %613 = vector.shape_cast %612 : vector<1x64x32xf32> to vector<64x32xf32>
    %c0_202 = arith.constant 0 : index
    %c0_203 = arith.constant 0 : index
    %c0_204 = arith.constant 0 : index
    %614 = vector.load %arg6[%c0_202, %c0_203, %c0_204] : memref<2x32x192xf32, #tpu.memory_space<vmem>>, vector<1x32x192xf32>
    %615 = vector.shape_cast %614 : vector<1x32x192xf32> to vector<32x192xf32>
    %cst_205 = arith.constant dense<0.000000e+00> : vector<64x192xf32>
    %616 = tpu.matmul %613, %615, %cst_205 {dimension_numbers = #tpu.dot_dimension_numbers<[1], [0], [0], [1], [0, 0, 1, 1], [], []>} : vector<64x32xf32>, vector<32x192xf32>, vector<64x192xf32> -> vector<64x192xf32>
    %617 = vector.broadcast %611 : vector<1x192xf32> to vector<64x192xf32>
    %618 = arith.addf %617, %616 : vector<64x192xf32>
    %c1_206 = arith.constant 1 : index
    %c0_207 = arith.constant 0 : index
    %c0_208 = arith.constant 0 : index
    %619 = vector.load %arg11[%c1_206, %c0_207, %c0_208] : memref<2x64x32xf32, #tpu.memory_space<vmem>>, vector<1x64x32xf32>
    %620 = vector.shape_cast %619 : vector<1x64x32xf32> to vector<64x32xf32>
    %c1_209 = arith.constant 1 : index
    %c0_210 = arith.constant 0 : index
    %c0_211 = arith.constant 0 : index
    %621 = vector.load %arg6[%c1_209, %c0_210, %c0_211] : memref<2x32x192xf32, #tpu.memory_space<vmem>>, vector<1x32x192xf32>
    %622 = vector.shape_cast %621 : vector<1x32x192xf32> to vector<32x192xf32>
    %cst_212 = arith.constant dense<0.000000e+00> : vector<64x192xf32>
    %623 = tpu.matmul %620, %622, %cst_212 {dimension_numbers = #tpu.dot_dimension_numbers<[1], [0], [0], [1], [0, 0, 1, 1], [], []>} : vector<64x32xf32>, vector<32x192xf32>, vector<64x192xf32> -> vector<64x192xf32>
    %624 = arith.addf %618, %623 : vector<64x192xf32>
    %625 = vector.extract_strided_slice %624 {offsets = [0, 0], sizes = [64, 96], strides = [1, 1]} : vector<64x192xf32> to vector<64x96xf32>
    %c0_213 = arith.constant 0 : index
    %c0_214 = arith.constant 0 : index
    %c0_215 = arith.constant 0 : index
    %626 = vector.load %arg12[%c0_213, %c0_214, %c0_215] : memref<2x64x96xf32, #tpu.memory_space<vmem>>, vector<1x64x96xf32>
    %627 = vector.shape_cast %626 : vector<1x64x96xf32> to vector<64x96xf32>
    %628 = vector.shape_cast %625 : vector<64x96xf32> to vector<1x64x96xf32>
    tpu.vector_store %arg12[%c0_213, %c0_214, %c0_215], %628 {strides = array<i32>} : memref<2x64x96xf32, #tpu.memory_space<vmem>>, vector<1x64x96xf32>,
    %629 = vector.extract_strided_slice %624 {offsets = [0, 96], sizes = [64, 96], strides = [1, 1]} : vector<64x192xf32> to vector<64x96xf32>
    %c1_216 = arith.constant 1 : index
    %c0_217 = arith.constant 0 : index
    %c0_218 = arith.constant 0 : index
    %630 = vector.load %arg12[%c1_216, %c0_217, %c0_218] : memref<2x64x96xf32, #tpu.memory_space<vmem>>, vector<1x64x96xf32>
    %631 = vector.shape_cast %630 : vector<1x64x96xf32> to vector<64x96xf32>
    %632 = vector.shape_cast %629 : vector<64x96xf32> to vector<1x64x96xf32>
    tpu.vector_store %arg12[%c1_216, %c0_217, %c0_218], %632 {strides = array<i32>} : memref<2x64x96xf32, #tpu.memory_space<vmem>>, vector<1x64x96xf32>,
    %c0_219 = arith.constant 0 : index
    %c0_220 = arith.constant 0 : index
    %c0_221 = arith.constant 0 : index
    %633 = vector.load %arg7[%c0_219, %c0_220, %c0_221] : memref<2x32x96xf32, #tpu.memory_space<vmem>>, vector<1x32x96xf32>
    %634 = vector.shape_cast %633 : vector<1x32x96xf32> to vector<32x96xf32>
    %c1_222 = arith.constant 1 : index
    %c0_223 = arith.constant 0 : index
    %c0_224 = arith.constant 0 : index
    %635 = vector.load %arg7[%c1_222, %c0_223, %c0_224] : memref<2x32x96xf32, #tpu.memory_space<vmem>>, vector<1x32x96xf32>
    %636 = vector.shape_cast %635 : vector<1x32x96xf32> to vector<32x96xf32>
    %c0_225 = arith.constant 0 : index
    %c0_226 = arith.constant 0 : index
    %637 = vector.load %arg9[%c0_225, %c0_226] : memref<1x64xf32, #tpu.memory_space<vmem>>, vector<1x64xf32>
    %638 = vector.extract_strided_slice %637 {offsets = [0, 0], sizes = [1, 32], strides = [1, 1]} : vector<1x64xf32> to vector<1x32xf32>
    %639 = vector.extract_strided_slice %637 {offsets = [0, 32], sizes = [1, 32], strides = [1, 1]} : vector<1x64xf32> to vector<1x32xf32>
    %c0_227 = arith.constant 0 : index
    %c0_228 = arith.constant 0 : index
    %c0_229 = arith.constant 0 : index
    %640 = vector.load %arg12[%c0_227, %c0_228, %c0_229] : memref<2x64x96xf32, #tpu.memory_space<vmem>>, vector<1x8x96xf32>
    %641 = vector.shape_cast %640 : vector<1x8x96xf32> to vector<8x96xf32>
    %642 = vector.extract_strided_slice %641 {offsets = [0, 0], sizes = [8, 32], strides = [1, 1]} : vector<8x96xf32> to vector<8x32xf32>
    %643 = vector.extract_strided_slice %641 {offsets = [0, 32], sizes = [8, 32], strides = [1, 1]} : vector<8x96xf32> to vector<8x32xf32>
    %644 = arith.negf %642 : vector<8x32xf32>
    %645 = math.exp %644 : vector<8x32xf32>
    %cst_230 = arith.constant 1.000000e+00 : f32
    %646 = vector.broadcast %cst_230 : f32 to vector<8x32xf32>
    %647 = arith.addf %646, %645 : vector<8x32xf32>
    %648 = arith.divf %646, %647 : vector<8x32xf32>
    %649 = arith.negf %643 : vector<8x32xf32>
    %650 = math.exp %649 : vector<8x32xf32>
    %cst_231 = arith.constant 1.000000e+00 : f32
    %651 = vector.broadcast %cst_231 : f32 to vector<8x32xf32>
    %652 = arith.addf %651, %650 : vector<8x32xf32>
    %653 = arith.divf %651, %652 : vector<8x32xf32>
    %654 = vector.extract_strided_slice %641 {offsets = [0, 64], sizes = [8, 32], strides = [1, 1]} : vector<8x96xf32> to vector<8x32xf32>
    %655 = vector.broadcast %638 : vector<1x32xf32> to vector<8x32xf32>
    %656 = arith.mulf %648, %655 : vector<8x32xf32>
    %657 = arith.addf %654, %656 : vector<8x32xf32>
    %658 = math.tanh %657 : vector<8x32xf32>
    %c0_232 = arith.constant 0 : index
    %c0_233 = arith.constant 0 : index
    %c0_234 = arith.constant 0 : index
    %659 = vector.load %arg1[%c0_232, %c0_233, %c0_234] : memref<8x8x1xf32, #tpu.memory_space<vmem>>, vector<1x8x1xf32>
    %660 = vector.shape_cast %659 : vector<1x8x1xf32> to vector<8x1xf32>
    %cst_235 = arith.constant 1.000000e+00 : f32
    %661 = vector.broadcast %cst_235 : f32 to vector<8x32xf32>
    %662 = arith.subf %661, %653 : vector<8x32xf32>
    %663 = arith.mulf %662, %658 : vector<8x32xf32>
    %664 = vector.broadcast %660 : vector<8x1xf32> to vector<8x32xf32>
    %665 = arith.mulf %664, %663 : vector<8x32xf32>
    %c1_236 = arith.constant 1 : index
    %c56_237 = arith.constant 56 : index
    %c0_238 = arith.constant 0 : index
    %666 = vector.load %arg12[%c1_236, %c56_237, %c0_238] : memref<2x64x96xf32, #tpu.memory_space<vmem>>, vector<1x8x96xf32>
    %667 = vector.shape_cast %666 : vector<1x8x96xf32> to vector<8x96xf32>
    %668 = vector.extract_strided_slice %667 {offsets = [0, 0], sizes = [8, 32], strides = [1, 1]} : vector<8x96xf32> to vector<8x32xf32>
    %669 = vector.extract_strided_slice %667 {offsets = [0, 32], sizes = [8, 32], strides = [1, 1]} : vector<8x96xf32> to vector<8x32xf32>
    %670 = arith.negf %668 : vector<8x32xf32>
    %671 = math.exp %670 : vector<8x32xf32>
    %cst_239 = arith.constant 1.000000e+00 : f32
    %672 = vector.broadcast %cst_239 : f32 to vector<8x32xf32>
    %673 = arith.addf %672, %671 : vector<8x32xf32>
    %674 = arith.divf %672, %673 : vector<8x32xf32>
    %675 = arith.negf %669 : vector<8x32xf32>
    %676 = math.exp %675 : vector<8x32xf32>
    %cst_240 = arith.constant 1.000000e+00 : f32
    %677 = vector.broadcast %cst_240 : f32 to vector<8x32xf32>
    %678 = arith.addf %677, %676 : vector<8x32xf32>
    %679 = arith.divf %677, %678 : vector<8x32xf32>
    %680 = vector.extract_strided_slice %667 {offsets = [0, 64], sizes = [8, 32], strides = [1, 1]} : vector<8x96xf32> to vector<8x32xf32>
    %681 = vector.broadcast %639 : vector<1x32xf32> to vector<8x32xf32>
    %682 = arith.mulf %674, %681 : vector<8x32xf32>
    %683 = arith.addf %680, %682 : vector<8x32xf32>
    %684 = math.tanh %683 : vector<8x32xf32>
    %c7_241 = arith.constant 7 : index
    %c0_242 = arith.constant 0 : index
    %c0_243 = arith.constant 0 : index
    %685 = vector.load %arg1[%c7_241, %c0_242, %c0_243] : memref<8x8x1xf32, #tpu.memory_space<vmem>>, vector<1x8x1xf32>
    %686 = vector.shape_cast %685 : vector<1x8x1xf32> to vector<8x1xf32>
    %cst_244 = arith.constant 1.000000e+00 : f32
    %687 = vector.broadcast %cst_244 : f32 to vector<8x32xf32>
    %688 = arith.subf %687, %679 : vector<8x32xf32>
    %689 = arith.mulf %688, %684 : vector<8x32xf32>
    %690 = vector.broadcast %686 : vector<8x1xf32> to vector<8x32xf32>
    %691 = arith.mulf %690, %689 : vector<8x32xf32>
    %cst_245 = arith.constant dense<0.000000e+00> : vector<8x96xf32>
    %692 = tpu.matmul %665, %634, %cst_245 {dimension_numbers = #tpu.dot_dimension_numbers<[1], [0], [0], [1], [0, 0, 1, 1], [], []>} : vector<8x32xf32>, vector<32x96xf32>, vector<8x96xf32> -> vector<8x96xf32>
    %cst_246 = arith.constant dense<0.000000e+00> : vector<8x96xf32>
    %693 = tpu.matmul %691, %636, %cst_246 {dimension_numbers = #tpu.dot_dimension_numbers<[1], [0], [0], [1], [0, 0, 1, 1], [], []>} : vector<8x32xf32>, vector<32x96xf32>, vector<8x96xf32> -> vector<8x96xf32>
    %c0_247 = arith.constant 0 : index
    %c8_248 = arith.constant 8 : index
    %c0_249 = arith.constant 0 : index
    %694 = vector.load %arg12[%c0_247, %c8_248, %c0_249] : memref<2x64x96xf32, #tpu.memory_space<vmem>>, vector<1x8x96xf32>
    %695 = vector.shape_cast %694 : vector<1x8x96xf32> to vector<8x96xf32>
    %696 = vector.extract_strided_slice %695 {offsets = [0, 0], sizes = [8, 32], strides = [1, 1]} : vector<8x96xf32> to vector<8x32xf32>
    %697 = vector.extract_strided_slice %692 {offsets = [0, 0], sizes = [8, 32], strides = [1, 1]} : vector<8x96xf32> to vector<8x32xf32>
    %698 = arith.addf %696, %697 : vector<8x32xf32>
    %699 = vector.extract_strided_slice %695 {offsets = [0, 32], sizes = [8, 32], strides = [1, 1]} : vector<8x96xf32> to vector<8x32xf32>
    %700 = vector.extract_strided_slice %692 {offsets = [0, 32], sizes = [8, 32], strides = [1, 1]} : vector<8x96xf32> to vector<8x32xf32>
    %701 = arith.addf %699, %700 : vector<8x32xf32>
    %702 = vector.extract_strided_slice %692 {offsets = [0, 64], sizes = [8, 32], strides = [1, 1]} : vector<8x96xf32> to vector<8x32xf32>
    %703 = vector.broadcast %638 : vector<1x32xf32> to vector<8x32xf32>
    %704 = arith.addf %702, %703 : vector<8x32xf32>
    %705 = arith.negf %698 : vector<8x32xf32>
    %706 = math.exp %705 : vector<8x32xf32>
    %cst_250 = arith.constant 1.000000e+00 : f32
    %707 = vector.broadcast %cst_250 : f32 to vector<8x32xf32>
    %708 = arith.addf %707, %706 : vector<8x32xf32>
    %709 = arith.divf %707, %708 : vector<8x32xf32>
    %710 = arith.negf %701 : vector<8x32xf32>
    %711 = math.exp %710 : vector<8x32xf32>
    %cst_251 = arith.constant 1.000000e+00 : f32
    %712 = vector.broadcast %cst_251 : f32 to vector<8x32xf32>
    %713 = arith.addf %712, %711 : vector<8x32xf32>
    %714 = arith.divf %712, %713 : vector<8x32xf32>
    %715 = vector.extract_strided_slice %695 {offsets = [0, 64], sizes = [8, 32], strides = [1, 1]} : vector<8x96xf32> to vector<8x32xf32>
    %716 = arith.mulf %709, %704 : vector<8x32xf32>
    %717 = arith.addf %715, %716 : vector<8x32xf32>
    %718 = math.tanh %717 : vector<8x32xf32>
    %c1_252 = arith.constant 1 : index
    %c0_253 = arith.constant 0 : index
    %c0_254 = arith.constant 0 : index
    %719 = vector.load %arg1[%c1_252, %c0_253, %c0_254] : memref<8x8x1xf32, #tpu.memory_space<vmem>>, vector<1x8x1xf32>
    %720 = vector.shape_cast %719 : vector<1x8x1xf32> to vector<8x1xf32>
    %721 = arith.subf %665, %718 : vector<8x32xf32>
    %722 = arith.mulf %714, %721 : vector<8x32xf32>
    %723 = arith.addf %718, %722 : vector<8x32xf32>
    %724 = arith.subf %723, %665 : vector<8x32xf32>
    %725 = vector.broadcast %720 : vector<8x1xf32> to vector<8x32xf32>
    %726 = arith.mulf %725, %724 : vector<8x32xf32>
    %727 = arith.addf %665, %726 : vector<8x32xf32>
    %c1_255 = arith.constant 1 : index
    %c48_256 = arith.constant 48 : index
    %c0_257 = arith.constant 0 : index
    %728 = vector.load %arg12[%c1_255, %c48_256, %c0_257] : memref<2x64x96xf32, #tpu.memory_space<vmem>>, vector<1x8x96xf32>
    %729 = vector.shape_cast %728 : vector<1x8x96xf32> to vector<8x96xf32>
    %730 = vector.extract_strided_slice %729 {offsets = [0, 0], sizes = [8, 32], strides = [1, 1]} : vector<8x96xf32> to vector<8x32xf32>
    %731 = vector.extract_strided_slice %693 {offsets = [0, 0], sizes = [8, 32], strides = [1, 1]} : vector<8x96xf32> to vector<8x32xf32>
    %732 = arith.addf %730, %731 : vector<8x32xf32>
    %733 = vector.extract_strided_slice %729 {offsets = [0, 32], sizes = [8, 32], strides = [1, 1]} : vector<8x96xf32> to vector<8x32xf32>
    %734 = vector.extract_strided_slice %693 {offsets = [0, 32], sizes = [8, 32], strides = [1, 1]} : vector<8x96xf32> to vector<8x32xf32>
    %735 = arith.addf %733, %734 : vector<8x32xf32>
    %736 = vector.extract_strided_slice %693 {offsets = [0, 64], sizes = [8, 32], strides = [1, 1]} : vector<8x96xf32> to vector<8x32xf32>
    %737 = vector.broadcast %639 : vector<1x32xf32> to vector<8x32xf32>
    %738 = arith.addf %736, %737 : vector<8x32xf32>
    %739 = arith.negf %732 : vector<8x32xf32>
    %740 = math.exp %739 : vector<8x32xf32>
    %cst_258 = arith.constant 1.000000e+00 : f32
    %741 = vector.broadcast %cst_258 : f32 to vector<8x32xf32>
    %742 = arith.addf %741, %740 : vector<8x32xf32>
    %743 = arith.divf %741, %742 : vector<8x32xf32>
    %744 = arith.negf %735 : vector<8x32xf32>
    %745 = math.exp %744 : vector<8x32xf32>
    %cst_259 = arith.constant 1.000000e+00 : f32
    %746 = vector.broadcast %cst_259 : f32 to vector<8x32xf32>
    %747 = arith.addf %746, %745 : vector<8x32xf32>
    %748 = arith.divf %746, %747 : vector<8x32xf32>
    %749 = vector.extract_strided_slice %729 {offsets = [0, 64], sizes = [8, 32], strides = [1, 1]} : vector<8x96xf32> to vector<8x32xf32>
    %750 = arith.mulf %743, %738 : vector<8x32xf32>
    %751 = arith.addf %749, %750 : vector<8x32xf32>
    %752 = math.tanh %751 : vector<8x32xf32>
    %c6_260 = arith.constant 6 : index
    %c0_261 = arith.constant 0 : index
    %c0_262 = arith.constant 0 : index
    %753 = vector.load %arg1[%c6_260, %c0_261, %c0_262] : memref<8x8x1xf32, #tpu.memory_space<vmem>>, vector<1x8x1xf32>
    %754 = vector.shape_cast %753 : vector<1x8x1xf32> to vector<8x1xf32>
    %755 = arith.subf %691, %752 : vector<8x32xf32>
    %756 = arith.mulf %748, %755 : vector<8x32xf32>
    %757 = arith.addf %752, %756 : vector<8x32xf32>
    %758 = arith.subf %757, %691 : vector<8x32xf32>
    %759 = vector.broadcast %754 : vector<8x1xf32> to vector<8x32xf32>
    %760 = arith.mulf %759, %758 : vector<8x32xf32>
    %761 = arith.addf %691, %760 : vector<8x32xf32>
    %cst_263 = arith.constant dense<0.000000e+00> : vector<8x96xf32>
    %762 = tpu.matmul %727, %634, %cst_263 {dimension_numbers = #tpu.dot_dimension_numbers<[1], [0], [0], [1], [0, 0, 1, 1], [], []>} : vector<8x32xf32>, vector<32x96xf32>, vector<8x96xf32> -> vector<8x96xf32>
    %cst_264 = arith.constant dense<0.000000e+00> : vector<8x96xf32>
    %763 = tpu.matmul %761, %636, %cst_264 {dimension_numbers = #tpu.dot_dimension_numbers<[1], [0], [0], [1], [0, 0, 1, 1], [], []>} : vector<8x32xf32>, vector<32x96xf32>, vector<8x96xf32> -> vector<8x96xf32>
    %c0_265 = arith.constant 0 : index
    %c16_266 = arith.constant 16 : index
    %c0_267 = arith.constant 0 : index
    %764 = vector.load %arg12[%c0_265, %c16_266, %c0_267] : memref<2x64x96xf32, #tpu.memory_space<vmem>>, vector<1x8x96xf32>
    %765 = vector.shape_cast %764 : vector<1x8x96xf32> to vector<8x96xf32>
    %766 = vector.extract_strided_slice %765 {offsets = [0, 0], sizes = [8, 32], strides = [1, 1]} : vector<8x96xf32> to vector<8x32xf32>
    %767 = vector.extract_strided_slice %762 {offsets = [0, 0], sizes = [8, 32], strides = [1, 1]} : vector<8x96xf32> to vector<8x32xf32>
    %768 = arith.addf %766, %767 : vector<8x32xf32>
    %769 = vector.extract_strided_slice %765 {offsets = [0, 32], sizes = [8, 32], strides = [1, 1]} : vector<8x96xf32> to vector<8x32xf32>
    %770 = vector.extract_strided_slice %762 {offsets = [0, 32], sizes = [8, 32], strides = [1, 1]} : vector<8x96xf32> to vector<8x32xf32>
    %771 = arith.addf %769, %770 : vector<8x32xf32>
    %772 = vector.extract_strided_slice %762 {offsets = [0, 64], sizes = [8, 32], strides = [1, 1]} : vector<8x96xf32> to vector<8x32xf32>
    %773 = vector.broadcast %638 : vector<1x32xf32> to vector<8x32xf32>
    %774 = arith.addf %772, %773 : vector<8x32xf32>
    %775 = arith.negf %768 : vector<8x32xf32>
    %776 = math.exp %775 : vector<8x32xf32>
    %cst_268 = arith.constant 1.000000e+00 : f32
    %777 = vector.broadcast %cst_268 : f32 to vector<8x32xf32>
    %778 = arith.addf %777, %776 : vector<8x32xf32>
    %779 = arith.divf %777, %778 : vector<8x32xf32>
    %780 = arith.negf %771 : vector<8x32xf32>
    %781 = math.exp %780 : vector<8x32xf32>
    %cst_269 = arith.constant 1.000000e+00 : f32
    %782 = vector.broadcast %cst_269 : f32 to vector<8x32xf32>
    %783 = arith.addf %782, %781 : vector<8x32xf32>
    %784 = arith.divf %782, %783 : vector<8x32xf32>
    %785 = vector.extract_strided_slice %765 {offsets = [0, 64], sizes = [8, 32], strides = [1, 1]} : vector<8x96xf32> to vector<8x32xf32>
    %786 = arith.mulf %779, %774 : vector<8x32xf32>
    %787 = arith.addf %785, %786 : vector<8x32xf32>
    %788 = math.tanh %787 : vector<8x32xf32>
    %c2_270 = arith.constant 2 : index
    %c0_271 = arith.constant 0 : index
    %c0_272 = arith.constant 0 : index
    %789 = vector.load %arg1[%c2_270, %c0_271, %c0_272] : memref<8x8x1xf32, #tpu.memory_space<vmem>>, vector<1x8x1xf32>
    %790 = vector.shape_cast %789 : vector<1x8x1xf32> to vector<8x1xf32>
    %791 = arith.subf %727, %788 : vector<8x32xf32>
    %792 = arith.mulf %784, %791 : vector<8x32xf32>
    %793 = arith.addf %788, %792 : vector<8x32xf32>
    %794 = arith.subf %793, %727 : vector<8x32xf32>
    %795 = vector.broadcast %790 : vector<8x1xf32> to vector<8x32xf32>
    %796 = arith.mulf %795, %794 : vector<8x32xf32>
    %797 = arith.addf %727, %796 : vector<8x32xf32>
    %c1_273 = arith.constant 1 : index
    %c40_274 = arith.constant 40 : index
    %c0_275 = arith.constant 0 : index
    %798 = vector.load %arg12[%c1_273, %c40_274, %c0_275] : memref<2x64x96xf32, #tpu.memory_space<vmem>>, vector<1x8x96xf32>
    %799 = vector.shape_cast %798 : vector<1x8x96xf32> to vector<8x96xf32>
    %800 = vector.extract_strided_slice %799 {offsets = [0, 0], sizes = [8, 32], strides = [1, 1]} : vector<8x96xf32> to vector<8x32xf32>
    %801 = vector.extract_strided_slice %763 {offsets = [0, 0], sizes = [8, 32], strides = [1, 1]} : vector<8x96xf32> to vector<8x32xf32>
    %802 = arith.addf %800, %801 : vector<8x32xf32>
    %803 = vector.extract_strided_slice %799 {offsets = [0, 32], sizes = [8, 32], strides = [1, 1]} : vector<8x96xf32> to vector<8x32xf32>
    %804 = vector.extract_strided_slice %763 {offsets = [0, 32], sizes = [8, 32], strides = [1, 1]} : vector<8x96xf32> to vector<8x32xf32>
    %805 = arith.addf %803, %804 : vector<8x32xf32>
    %806 = vector.extract_strided_slice %763 {offsets = [0, 64], sizes = [8, 32], strides = [1, 1]} : vector<8x96xf32> to vector<8x32xf32>
    %807 = vector.broadcast %639 : vector<1x32xf32> to vector<8x32xf32>
    %808 = arith.addf %806, %807 : vector<8x32xf32>
    %809 = arith.negf %802 : vector<8x32xf32>
    %810 = math.exp %809 : vector<8x32xf32>
    %cst_276 = arith.constant 1.000000e+00 : f32
    %811 = vector.broadcast %cst_276 : f32 to vector<8x32xf32>
    %812 = arith.addf %811, %810 : vector<8x32xf32>
    %813 = arith.divf %811, %812 : vector<8x32xf32>
    %814 = arith.negf %805 : vector<8x32xf32>
    %815 = math.exp %814 : vector<8x32xf32>
    %cst_277 = arith.constant 1.000000e+00 : f32
    %816 = vector.broadcast %cst_277 : f32 to vector<8x32xf32>
    %817 = arith.addf %816, %815 : vector<8x32xf32>
    %818 = arith.divf %816, %817 : vector<8x32xf32>
    %819 = vector.extract_strided_slice %799 {offsets = [0, 64], sizes = [8, 32], strides = [1, 1]} : vector<8x96xf32> to vector<8x32xf32>
    %820 = arith.mulf %813, %808 : vector<8x32xf32>
    %821 = arith.addf %819, %820 : vector<8x32xf32>
    %822 = math.tanh %821 : vector<8x32xf32>
    %c5_278 = arith.constant 5 : index
    %c0_279 = arith.constant 0 : index
    %c0_280 = arith.constant 0 : index
    %823 = vector.load %arg1[%c5_278, %c0_279, %c0_280] : memref<8x8x1xf32, #tpu.memory_space<vmem>>, vector<1x8x1xf32>
    %824 = vector.shape_cast %823 : vector<1x8x1xf32> to vector<8x1xf32>
    %825 = arith.subf %761, %822 : vector<8x32xf32>
    %826 = arith.mulf %818, %825 : vector<8x32xf32>
    %827 = arith.addf %822, %826 : vector<8x32xf32>
    %828 = arith.subf %827, %761 : vector<8x32xf32>
    %829 = vector.broadcast %824 : vector<8x1xf32> to vector<8x32xf32>
    %830 = arith.mulf %829, %828 : vector<8x32xf32>
    %831 = arith.addf %761, %830 : vector<8x32xf32>
    %cst_281 = arith.constant dense<0.000000e+00> : vector<8x96xf32>
    %832 = tpu.matmul %797, %634, %cst_281 {dimension_numbers = #tpu.dot_dimension_numbers<[1], [0], [0], [1], [0, 0, 1, 1], [], []>} : vector<8x32xf32>, vector<32x96xf32>, vector<8x96xf32> -> vector<8x96xf32>
    %cst_282 = arith.constant dense<0.000000e+00> : vector<8x96xf32>
    %833 = tpu.matmul %831, %636, %cst_282 {dimension_numbers = #tpu.dot_dimension_numbers<[1], [0], [0], [1], [0, 0, 1, 1], [], []>} : vector<8x32xf32>, vector<32x96xf32>, vector<8x96xf32> -> vector<8x96xf32>
    %c0_283 = arith.constant 0 : index
    %c24_284 = arith.constant 24 : index
    %c0_285 = arith.constant 0 : index
    %834 = vector.load %arg12[%c0_283, %c24_284, %c0_285] : memref<2x64x96xf32, #tpu.memory_space<vmem>>, vector<1x8x96xf32>
    %835 = vector.shape_cast %834 : vector<1x8x96xf32> to vector<8x96xf32>
    %836 = vector.extract_strided_slice %835 {offsets = [0, 0], sizes = [8, 32], strides = [1, 1]} : vector<8x96xf32> to vector<8x32xf32>
    %837 = vector.extract_strided_slice %832 {offsets = [0, 0], sizes = [8, 32], strides = [1, 1]} : vector<8x96xf32> to vector<8x32xf32>
    %838 = arith.addf %836, %837 : vector<8x32xf32>
    %839 = vector.extract_strided_slice %835 {offsets = [0, 32], sizes = [8, 32], strides = [1, 1]} : vector<8x96xf32> to vector<8x32xf32>
    %840 = vector.extract_strided_slice %832 {offsets = [0, 32], sizes = [8, 32], strides = [1, 1]} : vector<8x96xf32> to vector<8x32xf32>
    %841 = arith.addf %839, %840 : vector<8x32xf32>
    %842 = vector.extract_strided_slice %832 {offsets = [0, 64], sizes = [8, 32], strides = [1, 1]} : vector<8x96xf32> to vector<8x32xf32>
    %843 = vector.broadcast %638 : vector<1x32xf32> to vector<8x32xf32>
    %844 = arith.addf %842, %843 : vector<8x32xf32>
    %845 = arith.negf %838 : vector<8x32xf32>
    %846 = math.exp %845 : vector<8x32xf32>
    %cst_286 = arith.constant 1.000000e+00 : f32
    %847 = vector.broadcast %cst_286 : f32 to vector<8x32xf32>
    %848 = arith.addf %847, %846 : vector<8x32xf32>
    %849 = arith.divf %847, %848 : vector<8x32xf32>
    %850 = arith.negf %841 : vector<8x32xf32>
    %851 = math.exp %850 : vector<8x32xf32>
    %cst_287 = arith.constant 1.000000e+00 : f32
    %852 = vector.broadcast %cst_287 : f32 to vector<8x32xf32>
    %853 = arith.addf %852, %851 : vector<8x32xf32>
    %854 = arith.divf %852, %853 : vector<8x32xf32>
    %855 = vector.extract_strided_slice %835 {offsets = [0, 64], sizes = [8, 32], strides = [1, 1]} : vector<8x96xf32> to vector<8x32xf32>
    %856 = arith.mulf %849, %844 : vector<8x32xf32>
    %857 = arith.addf %855, %856 : vector<8x32xf32>
    %858 = math.tanh %857 : vector<8x32xf32>
    %c3_288 = arith.constant 3 : index
    %c0_289 = arith.constant 0 : index
    %c0_290 = arith.constant 0 : index
    %859 = vector.load %arg1[%c3_288, %c0_289, %c0_290] : memref<8x8x1xf32, #tpu.memory_space<vmem>>, vector<1x8x1xf32>
    %860 = vector.shape_cast %859 : vector<1x8x1xf32> to vector<8x1xf32>
    %861 = arith.subf %797, %858 : vector<8x32xf32>
    %862 = arith.mulf %854, %861 : vector<8x32xf32>
    %863 = arith.addf %858, %862 : vector<8x32xf32>
    %864 = arith.subf %863, %797 : vector<8x32xf32>
    %865 = vector.broadcast %860 : vector<8x1xf32> to vector<8x32xf32>
    %866 = arith.mulf %865, %864 : vector<8x32xf32>
    %867 = arith.addf %797, %866 : vector<8x32xf32>
    %c1_291 = arith.constant 1 : index
    %c32_292 = arith.constant 32 : index
    %c0_293 = arith.constant 0 : index
    %868 = vector.load %arg12[%c1_291, %c32_292, %c0_293] : memref<2x64x96xf32, #tpu.memory_space<vmem>>, vector<1x8x96xf32>
    %869 = vector.shape_cast %868 : vector<1x8x96xf32> to vector<8x96xf32>
    %870 = vector.extract_strided_slice %869 {offsets = [0, 0], sizes = [8, 32], strides = [1, 1]} : vector<8x96xf32> to vector<8x32xf32>
    %871 = vector.extract_strided_slice %833 {offsets = [0, 0], sizes = [8, 32], strides = [1, 1]} : vector<8x96xf32> to vector<8x32xf32>
    %872 = arith.addf %870, %871 : vector<8x32xf32>
    %873 = vector.extract_strided_slice %869 {offsets = [0, 32], sizes = [8, 32], strides = [1, 1]} : vector<8x96xf32> to vector<8x32xf32>
    %874 = vector.extract_strided_slice %833 {offsets = [0, 32], sizes = [8, 32], strides = [1, 1]} : vector<8x96xf32> to vector<8x32xf32>
    %875 = arith.addf %873, %874 : vector<8x32xf32>
    %876 = vector.extract_strided_slice %833 {offsets = [0, 64], sizes = [8, 32], strides = [1, 1]} : vector<8x96xf32> to vector<8x32xf32>
    %877 = vector.broadcast %639 : vector<1x32xf32> to vector<8x32xf32>
    %878 = arith.addf %876, %877 : vector<8x32xf32>
    %879 = arith.negf %872 : vector<8x32xf32>
    %880 = math.exp %879 : vector<8x32xf32>
    %cst_294 = arith.constant 1.000000e+00 : f32
    %881 = vector.broadcast %cst_294 : f32 to vector<8x32xf32>
    %882 = arith.addf %881, %880 : vector<8x32xf32>
    %883 = arith.divf %881, %882 : vector<8x32xf32>
    %884 = arith.negf %875 : vector<8x32xf32>
    %885 = math.exp %884 : vector<8x32xf32>
    %cst_295 = arith.constant 1.000000e+00 : f32
    %886 = vector.broadcast %cst_295 : f32 to vector<8x32xf32>
    %887 = arith.addf %886, %885 : vector<8x32xf32>
    %888 = arith.divf %886, %887 : vector<8x32xf32>
    %889 = vector.extract_strided_slice %869 {offsets = [0, 64], sizes = [8, 32], strides = [1, 1]} : vector<8x96xf32> to vector<8x32xf32>
    %890 = arith.mulf %883, %878 : vector<8x32xf32>
    %891 = arith.addf %889, %890 : vector<8x32xf32>
    %892 = math.tanh %891 : vector<8x32xf32>
    %c4_296 = arith.constant 4 : index
    %c0_297 = arith.constant 0 : index
    %c0_298 = arith.constant 0 : index
    %893 = vector.load %arg1[%c4_296, %c0_297, %c0_298] : memref<8x8x1xf32, #tpu.memory_space<vmem>>, vector<1x8x1xf32>
    %894 = vector.shape_cast %893 : vector<1x8x1xf32> to vector<8x1xf32>
    %895 = arith.subf %831, %892 : vector<8x32xf32>
    %896 = arith.mulf %888, %895 : vector<8x32xf32>
    %897 = arith.addf %892, %896 : vector<8x32xf32>
    %898 = arith.subf %897, %831 : vector<8x32xf32>
    %899 = vector.broadcast %894 : vector<8x1xf32> to vector<8x32xf32>
    %900 = arith.mulf %899, %898 : vector<8x32xf32>
    %901 = arith.addf %831, %900 : vector<8x32xf32>
    %cst_299 = arith.constant dense<0.000000e+00> : vector<8x96xf32>
    %902 = tpu.matmul %867, %634, %cst_299 {dimension_numbers = #tpu.dot_dimension_numbers<[1], [0], [0], [1], [0, 0, 1, 1], [], []>} : vector<8x32xf32>, vector<32x96xf32>, vector<8x96xf32> -> vector<8x96xf32>
    %cst_300 = arith.constant dense<0.000000e+00> : vector<8x96xf32>
    %903 = tpu.matmul %901, %636, %cst_300 {dimension_numbers = #tpu.dot_dimension_numbers<[1], [0], [0], [1], [0, 0, 1, 1], [], []>} : vector<8x32xf32>, vector<32x96xf32>, vector<8x96xf32> -> vector<8x96xf32>
    %c0_301 = arith.constant 0 : index
    %c32_302 = arith.constant 32 : index
    %c0_303 = arith.constant 0 : index
    %904 = vector.load %arg12[%c0_301, %c32_302, %c0_303] : memref<2x64x96xf32, #tpu.memory_space<vmem>>, vector<1x8x96xf32>
    %905 = vector.shape_cast %904 : vector<1x8x96xf32> to vector<8x96xf32>
    %906 = vector.extract_strided_slice %905 {offsets = [0, 0], sizes = [8, 32], strides = [1, 1]} : vector<8x96xf32> to vector<8x32xf32>
    %907 = vector.extract_strided_slice %902 {offsets = [0, 0], sizes = [8, 32], strides = [1, 1]} : vector<8x96xf32> to vector<8x32xf32>
    %908 = arith.addf %906, %907 : vector<8x32xf32>
    %909 = vector.extract_strided_slice %905 {offsets = [0, 32], sizes = [8, 32], strides = [1, 1]} : vector<8x96xf32> to vector<8x32xf32>
    %910 = vector.extract_strided_slice %902 {offsets = [0, 32], sizes = [8, 32], strides = [1, 1]} : vector<8x96xf32> to vector<8x32xf32>
    %911 = arith.addf %909, %910 : vector<8x32xf32>
    %912 = vector.extract_strided_slice %902 {offsets = [0, 64], sizes = [8, 32], strides = [1, 1]} : vector<8x96xf32> to vector<8x32xf32>
    %913 = vector.broadcast %638 : vector<1x32xf32> to vector<8x32xf32>
    %914 = arith.addf %912, %913 : vector<8x32xf32>
    %915 = arith.negf %908 : vector<8x32xf32>
    %916 = math.exp %915 : vector<8x32xf32>
    %cst_304 = arith.constant 1.000000e+00 : f32
    %917 = vector.broadcast %cst_304 : f32 to vector<8x32xf32>
    %918 = arith.addf %917, %916 : vector<8x32xf32>
    %919 = arith.divf %917, %918 : vector<8x32xf32>
    %920 = arith.negf %911 : vector<8x32xf32>
    %921 = math.exp %920 : vector<8x32xf32>
    %cst_305 = arith.constant 1.000000e+00 : f32
    %922 = vector.broadcast %cst_305 : f32 to vector<8x32xf32>
    %923 = arith.addf %922, %921 : vector<8x32xf32>
    %924 = arith.divf %922, %923 : vector<8x32xf32>
    %925 = vector.extract_strided_slice %905 {offsets = [0, 64], sizes = [8, 32], strides = [1, 1]} : vector<8x96xf32> to vector<8x32xf32>
    %926 = arith.mulf %919, %914 : vector<8x32xf32>
    %927 = arith.addf %925, %926 : vector<8x32xf32>
    %928 = math.tanh %927 : vector<8x32xf32>
    %c4_306 = arith.constant 4 : index
    %c0_307 = arith.constant 0 : index
    %c0_308 = arith.constant 0 : index
    %929 = vector.load %arg1[%c4_306, %c0_307, %c0_308] : memref<8x8x1xf32, #tpu.memory_space<vmem>>, vector<1x8x1xf32>
    %930 = vector.shape_cast %929 : vector<1x8x1xf32> to vector<8x1xf32>
    %931 = arith.subf %867, %928 : vector<8x32xf32>
    %932 = arith.mulf %924, %931 : vector<8x32xf32>
    %933 = arith.addf %928, %932 : vector<8x32xf32>
    %934 = arith.subf %933, %867 : vector<8x32xf32>
    %935 = vector.broadcast %930 : vector<8x1xf32> to vector<8x32xf32>
    %936 = arith.mulf %935, %934 : vector<8x32xf32>
    %937 = arith.addf %867, %936 : vector<8x32xf32>
    %c1_309 = arith.constant 1 : index
    %c24_310 = arith.constant 24 : index
    %c0_311 = arith.constant 0 : index
    %938 = vector.load %arg12[%c1_309, %c24_310, %c0_311] : memref<2x64x96xf32, #tpu.memory_space<vmem>>, vector<1x8x96xf32>
    %939 = vector.shape_cast %938 : vector<1x8x96xf32> to vector<8x96xf32>
    %940 = vector.extract_strided_slice %939 {offsets = [0, 0], sizes = [8, 32], strides = [1, 1]} : vector<8x96xf32> to vector<8x32xf32>
    %941 = vector.extract_strided_slice %903 {offsets = [0, 0], sizes = [8, 32], strides = [1, 1]} : vector<8x96xf32> to vector<8x32xf32>
    %942 = arith.addf %940, %941 : vector<8x32xf32>
    %943 = vector.extract_strided_slice %939 {offsets = [0, 32], sizes = [8, 32], strides = [1, 1]} : vector<8x96xf32> to vector<8x32xf32>
    %944 = vector.extract_strided_slice %903 {offsets = [0, 32], sizes = [8, 32], strides = [1, 1]} : vector<8x96xf32> to vector<8x32xf32>
    %945 = arith.addf %943, %944 : vector<8x32xf32>
    %946 = vector.extract_strided_slice %903 {offsets = [0, 64], sizes = [8, 32], strides = [1, 1]} : vector<8x96xf32> to vector<8x32xf32>
    %947 = vector.broadcast %639 : vector<1x32xf32> to vector<8x32xf32>
    %948 = arith.addf %946, %947 : vector<8x32xf32>
    %949 = arith.negf %942 : vector<8x32xf32>
    %950 = math.exp %949 : vector<8x32xf32>
    %cst_312 = arith.constant 1.000000e+00 : f32
    %951 = vector.broadcast %cst_312 : f32 to vector<8x32xf32>
    %952 = arith.addf %951, %950 : vector<8x32xf32>
    %953 = arith.divf %951, %952 : vector<8x32xf32>
    %954 = arith.negf %945 : vector<8x32xf32>
    %955 = math.exp %954 : vector<8x32xf32>
    %cst_313 = arith.constant 1.000000e+00 : f32
    %956 = vector.broadcast %cst_313 : f32 to vector<8x32xf32>
    %957 = arith.addf %956, %955 : vector<8x32xf32>
    %958 = arith.divf %956, %957 : vector<8x32xf32>
    %959 = vector.extract_strided_slice %939 {offsets = [0, 64], sizes = [8, 32], strides = [1, 1]} : vector<8x96xf32> to vector<8x32xf32>
    %960 = arith.mulf %953, %948 : vector<8x32xf32>
    %961 = arith.addf %959, %960 : vector<8x32xf32>
    %962 = math.tanh %961 : vector<8x32xf32>
    %c3_314 = arith.constant 3 : index
    %c0_315 = arith.constant 0 : index
    %c0_316 = arith.constant 0 : index
    %963 = vector.load %arg1[%c3_314, %c0_315, %c0_316] : memref<8x8x1xf32, #tpu.memory_space<vmem>>, vector<1x8x1xf32>
    %964 = vector.shape_cast %963 : vector<1x8x1xf32> to vector<8x1xf32>
    %965 = arith.subf %901, %962 : vector<8x32xf32>
    %966 = arith.mulf %958, %965 : vector<8x32xf32>
    %967 = arith.addf %962, %966 : vector<8x32xf32>
    %968 = arith.subf %967, %901 : vector<8x32xf32>
    %969 = vector.broadcast %964 : vector<8x1xf32> to vector<8x32xf32>
    %970 = arith.mulf %969, %968 : vector<8x32xf32>
    %971 = arith.addf %901, %970 : vector<8x32xf32>
    %cst_317 = arith.constant dense<0.000000e+00> : vector<8x96xf32>
    %972 = tpu.matmul %937, %634, %cst_317 {dimension_numbers = #tpu.dot_dimension_numbers<[1], [0], [0], [1], [0, 0, 1, 1], [], []>} : vector<8x32xf32>, vector<32x96xf32>, vector<8x96xf32> -> vector<8x96xf32>
    %cst_318 = arith.constant dense<0.000000e+00> : vector<8x96xf32>
    %973 = tpu.matmul %971, %636, %cst_318 {dimension_numbers = #tpu.dot_dimension_numbers<[1], [0], [0], [1], [0, 0, 1, 1], [], []>} : vector<8x32xf32>, vector<32x96xf32>, vector<8x96xf32> -> vector<8x96xf32>
    %c0_319 = arith.constant 0 : index
    %c40_320 = arith.constant 40 : index
    %c0_321 = arith.constant 0 : index
    %974 = vector.load %arg12[%c0_319, %c40_320, %c0_321] : memref<2x64x96xf32, #tpu.memory_space<vmem>>, vector<1x8x96xf32>
    %975 = vector.shape_cast %974 : vector<1x8x96xf32> to vector<8x96xf32>
    %976 = vector.extract_strided_slice %975 {offsets = [0, 0], sizes = [8, 32], strides = [1, 1]} : vector<8x96xf32> to vector<8x32xf32>
    %977 = vector.extract_strided_slice %972 {offsets = [0, 0], sizes = [8, 32], strides = [1, 1]} : vector<8x96xf32> to vector<8x32xf32>
    %978 = arith.addf %976, %977 : vector<8x32xf32>
    %979 = vector.extract_strided_slice %975 {offsets = [0, 32], sizes = [8, 32], strides = [1, 1]} : vector<8x96xf32> to vector<8x32xf32>
    %980 = vector.extract_strided_slice %972 {offsets = [0, 32], sizes = [8, 32], strides = [1, 1]} : vector<8x96xf32> to vector<8x32xf32>
    %981 = arith.addf %979, %980 : vector<8x32xf32>
    %982 = vector.extract_strided_slice %972 {offsets = [0, 64], sizes = [8, 32], strides = [1, 1]} : vector<8x96xf32> to vector<8x32xf32>
    %983 = vector.broadcast %638 : vector<1x32xf32> to vector<8x32xf32>
    %984 = arith.addf %982, %983 : vector<8x32xf32>
    %985 = arith.negf %978 : vector<8x32xf32>
    %986 = math.exp %985 : vector<8x32xf32>
    %cst_322 = arith.constant 1.000000e+00 : f32
    %987 = vector.broadcast %cst_322 : f32 to vector<8x32xf32>
    %988 = arith.addf %987, %986 : vector<8x32xf32>
    %989 = arith.divf %987, %988 : vector<8x32xf32>
    %990 = arith.negf %981 : vector<8x32xf32>
    %991 = math.exp %990 : vector<8x32xf32>
    %cst_323 = arith.constant 1.000000e+00 : f32
    %992 = vector.broadcast %cst_323 : f32 to vector<8x32xf32>
    %993 = arith.addf %992, %991 : vector<8x32xf32>
    %994 = arith.divf %992, %993 : vector<8x32xf32>
    %995 = vector.extract_strided_slice %975 {offsets = [0, 64], sizes = [8, 32], strides = [1, 1]} : vector<8x96xf32> to vector<8x32xf32>
    %996 = arith.mulf %989, %984 : vector<8x32xf32>
    %997 = arith.addf %995, %996 : vector<8x32xf32>
    %998 = math.tanh %997 : vector<8x32xf32>
    %c5_324 = arith.constant 5 : index
    %c0_325 = arith.constant 0 : index
    %c0_326 = arith.constant 0 : index
    %999 = vector.load %arg1[%c5_324, %c0_325, %c0_326] : memref<8x8x1xf32, #tpu.memory_space<vmem>>, vector<1x8x1xf32>
    %1000 = vector.shape_cast %999 : vector<1x8x1xf32> to vector<8x1xf32>
    %1001 = arith.subf %937, %998 : vector<8x32xf32>
    %1002 = arith.mulf %994, %1001 : vector<8x32xf32>
    %1003 = arith.addf %998, %1002 : vector<8x32xf32>
    %1004 = arith.subf %1003, %937 : vector<8x32xf32>
    %1005 = vector.broadcast %1000 : vector<8x1xf32> to vector<8x32xf32>
    %1006 = arith.mulf %1005, %1004 : vector<8x32xf32>
    %1007 = arith.addf %937, %1006 : vector<8x32xf32>
    %c1_327 = arith.constant 1 : index
    %c16_328 = arith.constant 16 : index
    %c0_329 = arith.constant 0 : index
    %1008 = vector.load %arg12[%c1_327, %c16_328, %c0_329] : memref<2x64x96xf32, #tpu.memory_space<vmem>>, vector<1x8x96xf32>
    %1009 = vector.shape_cast %1008 : vector<1x8x96xf32> to vector<8x96xf32>
    %1010 = vector.extract_strided_slice %1009 {offsets = [0, 0], sizes = [8, 32], strides = [1, 1]} : vector<8x96xf32> to vector<8x32xf32>
    %1011 = vector.extract_strided_slice %973 {offsets = [0, 0], sizes = [8, 32], strides = [1, 1]} : vector<8x96xf32> to vector<8x32xf32>
    %1012 = arith.addf %1010, %1011 : vector<8x32xf32>
    %1013 = vector.extract_strided_slice %1009 {offsets = [0, 32], sizes = [8, 32], strides = [1, 1]} : vector<8x96xf32> to vector<8x32xf32>
    %1014 = vector.extract_strided_slice %973 {offsets = [0, 32], sizes = [8, 32], strides = [1, 1]} : vector<8x96xf32> to vector<8x32xf32>
    %1015 = arith.addf %1013, %1014 : vector<8x32xf32>
    %1016 = vector.extract_strided_slice %973 {offsets = [0, 64], sizes = [8, 32], strides = [1, 1]} : vector<8x96xf32> to vector<8x32xf32>
    %1017 = vector.broadcast %639 : vector<1x32xf32> to vector<8x32xf32>
    %1018 = arith.addf %1016, %1017 : vector<8x32xf32>
    %1019 = arith.negf %1012 : vector<8x32xf32>
    %1020 = math.exp %1019 : vector<8x32xf32>
    %cst_330 = arith.constant 1.000000e+00 : f32
    %1021 = vector.broadcast %cst_330 : f32 to vector<8x32xf32>
    %1022 = arith.addf %1021, %1020 : vector<8x32xf32>
    %1023 = arith.divf %1021, %1022 : vector<8x32xf32>
    %1024 = arith.negf %1015 : vector<8x32xf32>
    %1025 = math.exp %1024 : vector<8x32xf32>
    %cst_331 = arith.constant 1.000000e+00 : f32
    %1026 = vector.broadcast %cst_331 : f32 to vector<8x32xf32>
    %1027 = arith.addf %1026, %1025 : vector<8x32xf32>
    %1028 = arith.divf %1026, %1027 : vector<8x32xf32>
    %1029 = vector.extract_strided_slice %1009 {offsets = [0, 64], sizes = [8, 32], strides = [1, 1]} : vector<8x96xf32> to vector<8x32xf32>
    %1030 = arith.mulf %1023, %1018 : vector<8x32xf32>
    %1031 = arith.addf %1029, %1030 : vector<8x32xf32>
    %1032 = math.tanh %1031 : vector<8x32xf32>
    %c2_332 = arith.constant 2 : index
    %c0_333 = arith.constant 0 : index
    %c0_334 = arith.constant 0 : index
    %1033 = vector.load %arg1[%c2_332, %c0_333, %c0_334] : memref<8x8x1xf32, #tpu.memory_space<vmem>>, vector<1x8x1xf32>
    %1034 = vector.shape_cast %1033 : vector<1x8x1xf32> to vector<8x1xf32>
    %1035 = arith.subf %971, %1032 : vector<8x32xf32>
    %1036 = arith.mulf %1028, %1035 : vector<8x32xf32>
    %1037 = arith.addf %1032, %1036 : vector<8x32xf32>
    %1038 = arith.subf %1037, %971 : vector<8x32xf32>
    %1039 = vector.broadcast %1034 : vector<8x1xf32> to vector<8x32xf32>
    %1040 = arith.mulf %1039, %1038 : vector<8x32xf32>
    %1041 = arith.addf %971, %1040 : vector<8x32xf32>
    %cst_335 = arith.constant dense<0.000000e+00> : vector<8x96xf32>
    %1042 = tpu.matmul %1007, %634, %cst_335 {dimension_numbers = #tpu.dot_dimension_numbers<[1], [0], [0], [1], [0, 0, 1, 1], [], []>} : vector<8x32xf32>, vector<32x96xf32>, vector<8x96xf32> -> vector<8x96xf32>
    %cst_336 = arith.constant dense<0.000000e+00> : vector<8x96xf32>
    %1043 = tpu.matmul %1041, %636, %cst_336 {dimension_numbers = #tpu.dot_dimension_numbers<[1], [0], [0], [1], [0, 0, 1, 1], [], []>} : vector<8x32xf32>, vector<32x96xf32>, vector<8x96xf32> -> vector<8x96xf32>
    %c0_337 = arith.constant 0 : index
    %c48_338 = arith.constant 48 : index
    %c0_339 = arith.constant 0 : index
    %1044 = vector.load %arg12[%c0_337, %c48_338, %c0_339] : memref<2x64x96xf32, #tpu.memory_space<vmem>>, vector<1x8x96xf32>
    %1045 = vector.shape_cast %1044 : vector<1x8x96xf32> to vector<8x96xf32>
    %1046 = vector.extract_strided_slice %1045 {offsets = [0, 0], sizes = [8, 32], strides = [1, 1]} : vector<8x96xf32> to vector<8x32xf32>
    %1047 = vector.extract_strided_slice %1042 {offsets = [0, 0], sizes = [8, 32], strides = [1, 1]} : vector<8x96xf32> to vector<8x32xf32>
    %1048 = arith.addf %1046, %1047 : vector<8x32xf32>
    %1049 = vector.extract_strided_slice %1045 {offsets = [0, 32], sizes = [8, 32], strides = [1, 1]} : vector<8x96xf32> to vector<8x32xf32>
    %1050 = vector.extract_strided_slice %1042 {offsets = [0, 32], sizes = [8, 32], strides = [1, 1]} : vector<8x96xf32> to vector<8x32xf32>
    %1051 = arith.addf %1049, %1050 : vector<8x32xf32>
    %1052 = vector.extract_strided_slice %1042 {offsets = [0, 64], sizes = [8, 32], strides = [1, 1]} : vector<8x96xf32> to vector<8x32xf32>
    %1053 = vector.broadcast %638 : vector<1x32xf32> to vector<8x32xf32>
    %1054 = arith.addf %1052, %1053 : vector<8x32xf32>
    %1055 = arith.negf %1048 : vector<8x32xf32>
    %1056 = math.exp %1055 : vector<8x32xf32>
    %cst_340 = arith.constant 1.000000e+00 : f32
    %1057 = vector.broadcast %cst_340 : f32 to vector<8x32xf32>
    %1058 = arith.addf %1057, %1056 : vector<8x32xf32>
    %1059 = arith.divf %1057, %1058 : vector<8x32xf32>
    %1060 = arith.negf %1051 : vector<8x32xf32>
    %1061 = math.exp %1060 : vector<8x32xf32>
    %cst_341 = arith.constant 1.000000e+00 : f32
    %1062 = vector.broadcast %cst_341 : f32 to vector<8x32xf32>
    %1063 = arith.addf %1062, %1061 : vector<8x32xf32>
    %1064 = arith.divf %1062, %1063 : vector<8x32xf32>
    %1065 = vector.extract_strided_slice %1045 {offsets = [0, 64], sizes = [8, 32], strides = [1, 1]} : vector<8x96xf32> to vector<8x32xf32>
    %1066 = arith.mulf %1059, %1054 : vector<8x32xf32>
    %1067 = arith.addf %1065, %1066 : vector<8x32xf32>
    %1068 = math.tanh %1067 : vector<8x32xf32>
    %c6_342 = arith.constant 6 : index
    %c0_343 = arith.constant 0 : index
    %c0_344 = arith.constant 0 : index
    %1069 = vector.load %arg1[%c6_342, %c0_343, %c0_344] : memref<8x8x1xf32, #tpu.memory_space<vmem>>, vector<1x8x1xf32>
    %1070 = vector.shape_cast %1069 : vector<1x8x1xf32> to vector<8x1xf32>
    %1071 = arith.subf %1007, %1068 : vector<8x32xf32>
    %1072 = arith.mulf %1064, %1071 : vector<8x32xf32>
    %1073 = arith.addf %1068, %1072 : vector<8x32xf32>
    %1074 = arith.subf %1073, %1007 : vector<8x32xf32>
    %1075 = vector.broadcast %1070 : vector<8x1xf32> to vector<8x32xf32>
    %1076 = arith.mulf %1075, %1074 : vector<8x32xf32>
    %1077 = arith.addf %1007, %1076 : vector<8x32xf32>
    %c1_345 = arith.constant 1 : index
    %c8_346 = arith.constant 8 : index
    %c0_347 = arith.constant 0 : index
    %1078 = vector.load %arg12[%c1_345, %c8_346, %c0_347] : memref<2x64x96xf32, #tpu.memory_space<vmem>>, vector<1x8x96xf32>
    %1079 = vector.shape_cast %1078 : vector<1x8x96xf32> to vector<8x96xf32>
    %1080 = vector.extract_strided_slice %1079 {offsets = [0, 0], sizes = [8, 32], strides = [1, 1]} : vector<8x96xf32> to vector<8x32xf32>
    %1081 = vector.extract_strided_slice %1043 {offsets = [0, 0], sizes = [8, 32], strides = [1, 1]} : vector<8x96xf32> to vector<8x32xf32>
    %1082 = arith.addf %1080, %1081 : vector<8x32xf32>
    %1083 = vector.extract_strided_slice %1079 {offsets = [0, 32], sizes = [8, 32], strides = [1, 1]} : vector<8x96xf32> to vector<8x32xf32>
    %1084 = vector.extract_strided_slice %1043 {offsets = [0, 32], sizes = [8, 32], strides = [1, 1]} : vector<8x96xf32> to vector<8x32xf32>
    %1085 = arith.addf %1083, %1084 : vector<8x32xf32>
    %1086 = vector.extract_strided_slice %1043 {offsets = [0, 64], sizes = [8, 32], strides = [1, 1]} : vector<8x96xf32> to vector<8x32xf32>
    %1087 = vector.broadcast %639 : vector<1x32xf32> to vector<8x32xf32>
    %1088 = arith.addf %1086, %1087 : vector<8x32xf32>
    %1089 = arith.negf %1082 : vector<8x32xf32>
    %1090 = math.exp %1089 : vector<8x32xf32>
    %cst_348 = arith.constant 1.000000e+00 : f32
    %1091 = vector.broadcast %cst_348 : f32 to vector<8x32xf32>
    %1092 = arith.addf %1091, %1090 : vector<8x32xf32>
    %1093 = arith.divf %1091, %1092 : vector<8x32xf32>
    %1094 = arith.negf %1085 : vector<8x32xf32>
    %1095 = math.exp %1094 : vector<8x32xf32>
    %cst_349 = arith.constant 1.000000e+00 : f32
    %1096 = vector.broadcast %cst_349 : f32 to vector<8x32xf32>
    %1097 = arith.addf %1096, %1095 : vector<8x32xf32>
    %1098 = arith.divf %1096, %1097 : vector<8x32xf32>
    %1099 = vector.extract_strided_slice %1079 {offsets = [0, 64], sizes = [8, 32], strides = [1, 1]} : vector<8x96xf32> to vector<8x32xf32>
    %1100 = arith.mulf %1093, %1088 : vector<8x32xf32>
    %1101 = arith.addf %1099, %1100 : vector<8x32xf32>
    %1102 = math.tanh %1101 : vector<8x32xf32>
    %c1_350 = arith.constant 1 : index
    %c0_351 = arith.constant 0 : index
    %c0_352 = arith.constant 0 : index
    %1103 = vector.load %arg1[%c1_350, %c0_351, %c0_352] : memref<8x8x1xf32, #tpu.memory_space<vmem>>, vector<1x8x1xf32>
    %1104 = vector.shape_cast %1103 : vector<1x8x1xf32> to vector<8x1xf32>
    %1105 = arith.subf %1041, %1102 : vector<8x32xf32>
    %1106 = arith.mulf %1098, %1105 : vector<8x32xf32>
    %1107 = arith.addf %1102, %1106 : vector<8x32xf32>
    %1108 = arith.subf %1107, %1041 : vector<8x32xf32>
    %1109 = vector.broadcast %1104 : vector<8x1xf32> to vector<8x32xf32>
    %1110 = arith.mulf %1109, %1108 : vector<8x32xf32>
    %1111 = arith.addf %1041, %1110 : vector<8x32xf32>
    %cst_353 = arith.constant dense<0.000000e+00> : vector<8x96xf32>
    %1112 = tpu.matmul %1077, %634, %cst_353 {dimension_numbers = #tpu.dot_dimension_numbers<[1], [0], [0], [1], [0, 0, 1, 1], [], []>} : vector<8x32xf32>, vector<32x96xf32>, vector<8x96xf32> -> vector<8x96xf32>
    %cst_354 = arith.constant dense<0.000000e+00> : vector<8x96xf32>
    %1113 = tpu.matmul %1111, %636, %cst_354 {dimension_numbers = #tpu.dot_dimension_numbers<[1], [0], [0], [1], [0, 0, 1, 1], [], []>} : vector<8x32xf32>, vector<32x96xf32>, vector<8x96xf32> -> vector<8x96xf32>
    %c0_355 = arith.constant 0 : index
    %c56_356 = arith.constant 56 : index
    %c0_357 = arith.constant 0 : index
    %1114 = vector.load %arg12[%c0_355, %c56_356, %c0_357] : memref<2x64x96xf32, #tpu.memory_space<vmem>>, vector<1x8x96xf32>
    %1115 = vector.shape_cast %1114 : vector<1x8x96xf32> to vector<8x96xf32>
    %1116 = vector.extract_strided_slice %1115 {offsets = [0, 0], sizes = [8, 32], strides = [1, 1]} : vector<8x96xf32> to vector<8x32xf32>
    %1117 = vector.extract_strided_slice %1112 {offsets = [0, 0], sizes = [8, 32], strides = [1, 1]} : vector<8x96xf32> to vector<8x32xf32>
    %1118 = arith.addf %1116, %1117 : vector<8x32xf32>
    %1119 = vector.extract_strided_slice %1115 {offsets = [0, 32], sizes = [8, 32], strides = [1, 1]} : vector<8x96xf32> to vector<8x32xf32>
    %1120 = vector.extract_strided_slice %1112 {offsets = [0, 32], sizes = [8, 32], strides = [1, 1]} : vector<8x96xf32> to vector<8x32xf32>
    %1121 = arith.addf %1119, %1120 : vector<8x32xf32>
    %1122 = vector.extract_strided_slice %1112 {offsets = [0, 64], sizes = [8, 32], strides = [1, 1]} : vector<8x96xf32> to vector<8x32xf32>
    %1123 = vector.broadcast %638 : vector<1x32xf32> to vector<8x32xf32>
    %1124 = arith.addf %1122, %1123 : vector<8x32xf32>
    %1125 = arith.negf %1118 : vector<8x32xf32>
    %1126 = math.exp %1125 : vector<8x32xf32>
    %cst_358 = arith.constant 1.000000e+00 : f32
    %1127 = vector.broadcast %cst_358 : f32 to vector<8x32xf32>
    %1128 = arith.addf %1127, %1126 : vector<8x32xf32>
    %1129 = arith.divf %1127, %1128 : vector<8x32xf32>
    %1130 = arith.negf %1121 : vector<8x32xf32>
    %1131 = math.exp %1130 : vector<8x32xf32>
    %cst_359 = arith.constant 1.000000e+00 : f32
    %1132 = vector.broadcast %cst_359 : f32 to vector<8x32xf32>
    %1133 = arith.addf %1132, %1131 : vector<8x32xf32>
    %1134 = arith.divf %1132, %1133 : vector<8x32xf32>
    %1135 = vector.extract_strided_slice %1115 {offsets = [0, 64], sizes = [8, 32], strides = [1, 1]} : vector<8x96xf32> to vector<8x32xf32>
    %1136 = arith.mulf %1129, %1124 : vector<8x32xf32>
    %1137 = arith.addf %1135, %1136 : vector<8x32xf32>
    %1138 = math.tanh %1137 : vector<8x32xf32>
    %c7_360 = arith.constant 7 : index
    %c0_361 = arith.constant 0 : index
    %c0_362 = arith.constant 0 : index
    %1139 = vector.load %arg1[%c7_360, %c0_361, %c0_362] : memref<8x8x1xf32, #tpu.memory_space<vmem>>, vector<1x8x1xf32>
    %1140 = vector.shape_cast %1139 : vector<1x8x1xf32> to vector<8x1xf32>
    %1141 = arith.subf %1077, %1138 : vector<8x32xf32>
    %1142 = arith.mulf %1134, %1141 : vector<8x32xf32>
    %1143 = arith.addf %1138, %1142 : vector<8x32xf32>
    %1144 = arith.subf %1143, %1077 : vector<8x32xf32>
    %1145 = vector.broadcast %1140 : vector<8x1xf32> to vector<8x32xf32>
    %1146 = arith.mulf %1145, %1144 : vector<8x32xf32>
    %1147 = arith.addf %1077, %1146 : vector<8x32xf32>
    %c1_363 = arith.constant 1 : index
    %c0_364 = arith.constant 0 : index
    %c0_365 = arith.constant 0 : index
    %1148 = vector.load %arg12[%c1_363, %c0_364, %c0_365] : memref<2x64x96xf32, #tpu.memory_space<vmem>>, vector<1x8x96xf32>
    %1149 = vector.shape_cast %1148 : vector<1x8x96xf32> to vector<8x96xf32>
    %1150 = vector.extract_strided_slice %1149 {offsets = [0, 0], sizes = [8, 32], strides = [1, 1]} : vector<8x96xf32> to vector<8x32xf32>
    %1151 = vector.extract_strided_slice %1113 {offsets = [0, 0], sizes = [8, 32], strides = [1, 1]} : vector<8x96xf32> to vector<8x32xf32>
    %1152 = arith.addf %1150, %1151 : vector<8x32xf32>
    %1153 = vector.extract_strided_slice %1149 {offsets = [0, 32], sizes = [8, 32], strides = [1, 1]} : vector<8x96xf32> to vector<8x32xf32>
    %1154 = vector.extract_strided_slice %1113 {offsets = [0, 32], sizes = [8, 32], strides = [1, 1]} : vector<8x96xf32> to vector<8x32xf32>
    %1155 = arith.addf %1153, %1154 : vector<8x32xf32>
    %1156 = vector.extract_strided_slice %1113 {offsets = [0, 64], sizes = [8, 32], strides = [1, 1]} : vector<8x96xf32> to vector<8x32xf32>
    %1157 = vector.broadcast %639 : vector<1x32xf32> to vector<8x32xf32>
    %1158 = arith.addf %1156, %1157 : vector<8x32xf32>
    %1159 = arith.negf %1152 : vector<8x32xf32>
    %1160 = math.exp %1159 : vector<8x32xf32>
    %cst_366 = arith.constant 1.000000e+00 : f32
    %1161 = vector.broadcast %cst_366 : f32 to vector<8x32xf32>
    %1162 = arith.addf %1161, %1160 : vector<8x32xf32>
    %1163 = arith.divf %1161, %1162 : vector<8x32xf32>
    %1164 = arith.negf %1155 : vector<8x32xf32>
    %1165 = math.exp %1164 : vector<8x32xf32>
    %cst_367 = arith.constant 1.000000e+00 : f32
    %1166 = vector.broadcast %cst_367 : f32 to vector<8x32xf32>
    %1167 = arith.addf %1166, %1165 : vector<8x32xf32>
    %1168 = arith.divf %1166, %1167 : vector<8x32xf32>
    %1169 = vector.extract_strided_slice %1149 {offsets = [0, 64], sizes = [8, 32], strides = [1, 1]} : vector<8x96xf32> to vector<8x32xf32>
    %1170 = arith.mulf %1163, %1158 : vector<8x32xf32>
    %1171 = arith.addf %1169, %1170 : vector<8x32xf32>
    %1172 = math.tanh %1171 : vector<8x32xf32>
    %c0_368 = arith.constant 0 : index
    %c0_369 = arith.constant 0 : index
    %c0_370 = arith.constant 0 : index
    %1173 = vector.load %arg1[%c0_368, %c0_369, %c0_370] : memref<8x8x1xf32, #tpu.memory_space<vmem>>, vector<1x8x1xf32>
    %1174 = vector.shape_cast %1173 : vector<1x8x1xf32> to vector<8x1xf32>
    %1175 = arith.subf %1111, %1172 : vector<8x32xf32>
    %1176 = arith.mulf %1168, %1175 : vector<8x32xf32>
    %1177 = arith.addf %1172, %1176 : vector<8x32xf32>
    %1178 = arith.subf %1177, %1111 : vector<8x32xf32>
    %1179 = vector.broadcast %1174 : vector<8x1xf32> to vector<8x32xf32>
    %1180 = arith.mulf %1179, %1178 : vector<8x32xf32>
    %1181 = arith.addf %1111, %1180 : vector<8x32xf32>
    %1182 = tpu.concatenate %1147, %1181 in 1 : vector<8x32xf32>, vector<8x32xf32> -> vector<8x64xf32>
    %c0_371 = arith.constant 0 : index
    %c0_372 = arith.constant 0 : index
    %1183 = vector.load %arg10[%c0_371, %c0_372] : memref<8x64xf32, #tpu.memory_space<vmem>>, vector<8x64xf32>
    tpu.vector_store %arg10[%c0_371, %c0_372], %1182 {strides = array<i32>} : memref<8x64xf32, #tpu.memory_space<vmem>>, vector<8x64xf32>,
    return
  }
}

</mosaic_0001>

<llo_original>
// kernel: utterance_encoder_forward.1
$region0: #{utterance_encoder_forward.1}
  #allocation0 [shape = 'u32[]', space=smem, size = 0x4, offset = 0x4, fixed_abs, tag = 'smem constant byte address 0x4 - core index']
  #allocation1 [shape = 'u32[144,128]{1,0:T(1,128)}', space=vmem, size = 0x12000, scoped, tag = 'internal scratch']
  #allocation2 [shape = 'f32[2,64,32]{2,1,0:T(8,128)}', space=vmem, size = 0x10000, scoped, tag = 'scratch operand']
  #allocation3 [shape = 'f32[2,64,96]{2,1,0:T(8,128)}', space=vmem, size = 0x10000, scoped, tag = 'scratch operand']
  %s0 = inlined_call_operand.vmem [shape: f32[64,16], index: 0, kind: input, shape index: {}]
  %s1 = inlined_call_operand.vmem [shape: f32[8,8,1], index: 1, kind: input, shape index: {}]
  %s2 = inlined_call_operand.hbm [shape: f32[16,192], index: 2, kind: input, shape index: {}]
  %s3 = inlined_call_operand.vmem [shape: f32[2,32,96], index: 3, kind: input, shape index: {}]
  %s4 = inlined_call_operand.vmem [shape: f32[1,192], index: 4, kind: input, shape index: {}]
  %s5 = inlined_call_operand.vmem [shape: f32[1,64], index: 5, kind: input, shape index: {}]
  %s6 = inlined_call_operand.vmem [shape: f32[2,32,192], index: 6, kind: input, shape index: {}]
  %s7 = inlined_call_operand.hbm [shape: f32[2,32,96], index: 7, kind: input, shape index: {}]
  %s8 = inlined_call_operand.vmem [shape: f32[1,192], index: 8, kind: input, shape index: {}]
  %s9 = inlined_call_operand.vmem [shape: f32[1,64], index: 9, kind: input, shape index: {}]
  %s10 = inlined_call_operand.hbm [shape: f32[8,64], index: 10, kind: output, shape index: {}]
  %s11 = sld [smem:[#allocation0]]
  $region58: #{utterance_encoder_forward.1} parent=0
    _
  %s13 = ssub.s32 1, %s11
  %s14 = scalar_select 0, %s13, %s11
  $region1: #{utterance_encoder_forward.1} parent=0
    #allocation4 [shape = 'u8[16384]{0}', space=vmem, size = 0x4000, scoped, tag = 'input window, operand 2, single buffered']
    #allocation5 [shape = 's32[1]{0}', space=sflag, size = 0x4, scoped, tag = 'scoped memory for utterance_encoder_forward.1']
    #allocation6 [shape = 's32[1]{0}', space=sflag, size = 0x4, scoped, tag = 'scoped memory for utterance_encoder_forward.1']
    #allocation7 [shape = 'u8[32768]{0}', space=vmem, size = 0x8000, scoped, tag = 'input window, operand 7, single buffered']
    #allocation8 [shape = 's32[1]{0}', space=sflag, size = 0x4, scoped, tag = 'scoped memory for utterance_encoder_forward.1']
    #allocation9 [shape = 'u8[4096]{0}', space=vmem, size = 0x1000, scoped, tag = 'output window, operand 0, single buffered']
    %15 = vsyncpa [#allocation5], 0
    %16 = vsyncpa [#allocation8], 0
    %17 = vsyncpa [#allocation6], 0
    // Predicated region
    $region2: #{utterance_encoder_forward.1} parent=1 // pred_check
      _
    $region3: #{utterance_encoder_forward.1} parent=1 // pred_check_branch
      %19 = sbr.rel (0) target = $region5
    $region4: #{utterance_encoder_forward.1} parent=1 // pred_region
      _
    $region5: #{utterance_encoder_forward.1} parent=1 // pred_fallthru
      _
    // Predicated region
    $region6: #{utterance_encoder_forward.1} parent=1 // pred_check
      _
    $region7: #{utterance_encoder_forward.1} parent=1 // pred_check_branch
      %21 = sbr.rel (0) target = $region9
    $region8: #{utterance_encoder_forward.1} parent=1 // pred_region
      _
    $region9: #{utterance_encoder_forward.1} parent=1 // pred_fallthru
      _
    // Predicated region
    $region10: #{utterance_encoder_forward.1} parent=1 // pred_check
      _
    $region11: #{utterance_encoder_forward.1} parent=1 // pred_check_branch
      %23 = sbr.rel (0) target = $region13
    $region12: #{utterance_encoder_forward.1} parent=1 // pred_region
      %s25 = ssub.s32 512, 512
      %26 = vsyncadd [#allocation5], %s25
      %s27 = sshll.u32 [#allocation4], 4
      %s28 = int_to_ptr.vmem [resolvable:$true] %s27
      %33 = dma.hbm_to_vmem [thread:$0]  %s2, 512, %s28, [#allocation5], 256, 256, 16
    $region13: #{utterance_encoder_forward.1} parent=1 // pred_fallthru
      _
    // Predicated region
    $region14: #{utterance_encoder_forward.1} parent=1 // pred_check
      _
    $region15: #{utterance_encoder_forward.1} parent=1 // pred_check_branch
      %35 = sbr.rel (0) target = $region17
    $region16: #{utterance_encoder_forward.1} parent=1 // pred_region
      _
    $region17: #{utterance_encoder_forward.1} parent=1 // pred_fallthru
      _
    // Predicated region
    $region18: #{utterance_encoder_forward.1} parent=1 // pred_check
      _
    $region19: #{utterance_encoder_forward.1} parent=1 // pred_check_branch
      %37 = sbr.rel (0) target = $region21
    $region20: #{utterance_encoder_forward.1} parent=1 // pred_region
      _
    $region21: #{utterance_encoder_forward.1} parent=1 // pred_fallthru
      _
    // Predicated region
    $region22: #{utterance_encoder_forward.1} parent=1 // pred_check
      _
    $region23: #{utterance_encoder_forward.1} parent=1 // pred_check_branch
      %39 = sbr.rel (0) target = $region25
    $region24: #{utterance_encoder_forward.1} parent=1 // pred_region
      _
    $region25: #{utterance_encoder_forward.1} parent=1 // pred_fallthru
      _
    // Predicated region
    $region26: #{utterance_encoder_forward.1} parent=1 // pred_check
      _
    $region27: #{utterance_encoder_forward.1} parent=1 // pred_check_branch
      %41 = sbr.rel (0) target = $region29
    $region28: #{utterance_encoder_forward.1} parent=1 // pred_region
      _
    $region29: #{utterance_encoder_forward.1} parent=1 // pred_fallthru
      _
    // Predicated region
    $region30: #{utterance_encoder_forward.1} parent=1 // pred_check
      _
    $region31: #{utterance_encoder_forward.1} parent=1 // pred_check_branch
      %43 = sbr.rel (0) target = $region33
    $region32: #{utterance_encoder_forward.1} parent=1 // pred_region
      %s45 = ssub.s32 1024, 1024
      %46 = vsyncadd [#allocation8], %s45
      %s47 = sshll.u32 [#allocation7], 4
      %s48 = int_to_ptr.vmem [resolvable:$true] %s47
      %53 = dma.hbm_to_vmem [thread:$0]  %s7, 1024, %s48, [#allocation8], 128, 128, 8
    $region33: #{utterance_encoder_forward.1} parent=1 // pred_fallthru
      _
    // Predicated region
    $region34: #{utterance_encoder_forward.1} parent=1 // pred_check
      _
    $region35: #{utterance_encoder_forward.1} parent=1 // pred_check_branch
      %55 = sbr.rel (0) target = $region37
    $region36: #{utterance_encoder_forward.1} parent=1 // pred_region
      _
    $region37: #{utterance_encoder_forward.1} parent=1 // pred_fallthru
      _
    // Predicated region
    $region38: #{utterance_encoder_forward.1} parent=1 // pred_check
      _
    $region39: #{utterance_encoder_forward.1} parent=1 // pred_check_branch
      %57 = sbr.rel (0) target = $region41
    $region40: #{utterance_encoder_forward.1} parent=1 // pred_region
      _
    $region41: #{utterance_encoder_forward.1} parent=1 // pred_fallthru
      _
    // Predicated region
    $region42: #{utterance_encoder_forward.1} parent=1 // pred_check
      _
    $region43: #{utterance_encoder_forward.1} parent=1 // pred_check_branch
      %59 = sbr.rel (0) target = $region45
    $region44: #{utterance_encoder_forward.1} parent=1 // pred_region
      %60 = dma.done [#allocation5], 512
    $region45: #{utterance_encoder_forward.1} parent=1 // pred_fallthru
      _
    // Predicated region
    $region46: #{utterance_encoder_forward.1} parent=1 // pred_check
      _
    $region47: #{utterance_encoder_forward.1} parent=1 // pred_check_branch
      %62 = sbr.rel (0) target = $region49
    $region48: #{utterance_encoder_forward.1} parent=1 // pred_region
      %63 = dma.done [#allocation8], 1024
    $region49: #{utterance_encoder_forward.1} parent=1 // pred_fallthru
      _
    %v64 = vld [vmem:[%s4] sm:$0x3]
    %v65 = vld [vmem:[%s0] sm:$0xff]
    %v66 = vld [vmem:[%s0 + $0x8] sm:$0xff]
    %v67 = vld [vmem:[%s0 + $0x10] sm:$0xff]
    %v68 = vld [vmem:[%s0 + $0x18] sm:$0xff]
    %v69 = vld [vmem:[%s0 + $0x20] sm:$0xff]
    %v70 = vld [vmem:[%s0 + $0x28] sm:$0xff]
    %v71 = vld [vmem:[%s0 + $0x30] sm:$0xff]
    %v72 = vld [vmem:[%s0 + $0x38] sm:$0xff]
    %v73 = vld [vmem:[#allocation4] sm:$0xff]
    %v74 = vld [vmem:[#allocation4 + $0x8] sm:$0xff]
    %v75 = vld [vmem:[#allocation4 + $0x10] sm:$0xff]
    %v76 = vld [vmem:[#allocation4 + $0x18] sm:$0xff]
    %v78 = vlaneseq
    %v79 = vshrl.u32 %v78, 7
    %v80 = vsub.s32 0, %v79
    %v81 = vrot.slane %v64, %v80
    %v82 = vlaneseq
    %v83 = vshrl.u32 %v82, 7
    %v84 = vsub.s32 1, %v83
    %v85 = vrot.slane %v64, %v84
    %vm88 = vcmask 130048
    %v90 = vsel %vm88, %v65, 0
    %v93 = vsel %vm88, %v66, 0
    %v96 = vsel %vm88, %v67, 0
    %v99 = vsel %vm88, %v68, 0
    %v102 = vsel %vm88, %v69, 0
    %v105 = vsel %vm88, %v70, 0
    %v108 = vsel %vm88, %v71, 0
    %v111 = vsel %vm88, %v72, 0
    %113 = vmatprep.subr.mxu0 0.0
    %114 = vmatpush1.msra.mxu0 0.0
    %115 = vmatprep.subr.mxu0 0.0
    %116 = vmatpush1.msra.mxu0 0.0
    %117 = vmatprep.subr.mxu0 0.0
    %118 = vmatpush1.msra.mxu0 0.0
    %119 = vmatprep.subr.mxu0 0.0
    %120 = vmatpush1.msra.mxu0 0.0
    %121 = vmatprep.subr.mxu0 0.0
    %122 = vmatpush1.msra.mxu0 0.0
    %123 = vmatprep.subr.mxu0 0.0
    %124 = vmatpush1.msra.mxu0 0.0
    %125 = vmatprep.subr.mxu0 0.0
    %126 = vmatpush1.msra.mxu0 0.0
    %127 = vmatprep.subr.mxu0 0.0
    %128 = vmatpush1.msra.mxu0 0.0
    %129 = vmatprep.subr.mxu0 0.0
    %130 = vmatpush1.msra.mxu0 0.0
    %131 = vmatprep.subr.mxu0 0.0
    %132 = vmatpush1.msra.mxu0 0.0
    %133 = vmatprep.subr.mxu0 0.0
    %134 = vmatpush1.msra.mxu0 0.0
    %135 = vmatprep.subr.mxu0 0.0
    %136 = vmatpush1.msra.mxu0 0.0
    %137 = vmatprep.subr.mxu0 0.0
    %138 = vmatpush1.msra.mxu0 0.0
    %139 = vmatprep.subr.mxu0 0.0
    %140 = vmatpush1.msra.mxu0 0.0
    %141 = vmatprep.subr.mxu0 %v76
    %142 = vmatpush1.msra.mxu0 %v75
    %143 = vmatprep.subr.mxu0 %v74
    %144 = vmatpush1.msra.mxu0 %v73
    %145 = vmatprep.subr.mxu0 0.0
    %146 = vmatpush2.msra.mxu0 0.0
    %147 = vmatprep.subr.mxu0 0.0
    %148 = vmatpush2.msra.mxu0 0.0
    %149 = vmatprep.subr.mxu0 0.0
    %150 = vmatpush2.msra.mxu0 0.0
    %151 = vmatprep.subr.mxu0 0.0
    %152 = vmatpush2.msra.mxu0 0.0
    %153 = vmatprep.subr.mxu0 0.0
    %154 = vmatpush2.msra.mxu0 0.0
    %155 = vmatprep.subr.mxu0 0.0
    %156 = vmatpush2.msra.mxu0 0.0
    %157 = vmatprep.subr.mxu0 0.0
    %158 = vmatpush2.msra.mxu0 0.0
    %159 = vmatprep.subr.mxu0 0.0
    %160 = vmatpush2.msra.mxu0 0.0
    %161 = vmatprep.subr.mxu0 0.0
    %162 = vmatpush2.msra.mxu0 0.0
    %163 = vmatprep.subr.mxu0 0.0
    %164 = vmatpush2.msra.mxu0 0.0
    %165 = vmatprep.subr.mxu0 0.0
    %166 = vmatpush2.msra.mxu0 0.0
    %167 = vmatprep.subr.mxu0 0.0
    %168 = vmatpush2.msra.mxu0 0.0
    %169 = vmatprep.subr.mxu0 0.0
    %170 = vmatpush2.msra.mxu0 0.0
    %171 = vmatprep.subr.mxu0 0.0
    %172 = vmatpush2.msra.mxu0 0.0
    %173 = vmatprep.subr.mxu0 0.0
    %174 = vmatpush2.msra.mxu0 0.0
    %175 = vmatprep.subr.mxu0 0.0
    %176 = vmatpush2.msra.mxu0 0.0
    %177 = vmatprep.mubr.f32.mxu0 0.0
    %178 = vmatmul.mubr.f32.gmra.mxu0 %v90
    %v179 = vpop.f32.mrf.mxu0
    %v180 = vadd.f32 %v81, %v179
    %v181 = vpop.f32.mrf.mxu0
    %v182 = vadd.f32 %v85, %v181
    %183 = vmatprep.mubr.f32.mxu0 0.0
    %184 = vmatmul.mubr.f32.gmra.mxu0 %v93
    %v185 = vpop.f32.mrf.mxu0
    %v186 = vadd.f32 %v81, %v185
    %v187 = vpop.f32.mrf.mxu0
    %v188 = vadd.f32 %v85, %v187
    %189 = vmatprep.mubr.f32.mxu0 0.0
    %190 = vmatmul.mubr.f32.gmra.mxu0 %v96
    %v191 = vpop.f32.mrf.mxu0
    %v192 = vadd.f32 %v81, %v191
    %v193 = vpop.f32.mrf.mxu0
    %v194 = vadd.f32 %v85, %v193
    %195 = vmatprep.mubr.f32.mxu0 0.0
    %196 = vmatmul.mubr.f32.gmra.mxu0 %v99
    %v197 = vpop.f32.mrf.mxu0
    %v198 = vadd.f32 %v81, %v197
    %v199 = vpop.f32.mrf.mxu0
    %v200 = vadd.f32 %v85, %v199
    %201 = vmatprep.mubr.f32.mxu0 0.0
    %202 = vmatmul.mubr.f32.gmra.mxu0 %v102
    %v203 = vpop.f32.mrf.mxu0
    %v204 = vadd.f32 %v81, %v203
    %v205 = vpop.f32.mrf.mxu0
    %v206 = vadd.f32 %v85, %v205
    %207 = vmatprep.mubr.f32.mxu0 0.0
    %208 = vmatmul.mubr.f32.gmra.mxu0 %v105
    %v209 = vpop.f32.mrf.mxu0
    %v210 = vadd.f32 %v81, %v209
    %v211 = vpop.f32.mrf.mxu0
    %v212 = vadd.f32 %v85, %v211
    %213 = vmatprep.mubr.f32.mxu0 0.0
    %214 = vmatmul.mubr.f32.gmra.mxu0 %v108
    %v215 = vpop.f32.mrf.mxu0
    %v216 = vadd.f32 %v81, %v215
    %v217 = vpop.f32.mrf.mxu0
    %v218 = vadd.f32 %v85, %v217
    %219 = vmatprep.mubr.f32.mxu0 0.0
    %220 = vmatmul.mubr.f32.gmra.mxu0 %v111
    %v221 = vpop.f32.mrf.mxu0
    %v222 = vadd.f32 %v81, %v221
    %v223 = vpop.f32.mrf.mxu0
    %v224 = vadd.f32 %v85, %v223
    %225 = vdwg.mxu0
    %vm226 = vcmask 785408
    %227 = vst.msk [vmem:[#allocation3] sm:$0xff] %vm226, %v180
    %228 = vst.msk [vmem:[#allocation3 + $0x8] sm:$0xff] %vm226, %v186
    %229 = vst.msk [vmem:[#allocation3 + $0x10] sm:$0xff] %vm226, %v192
    %230 = vst.msk [vmem:[#allocation3 + $0x18] sm:$0xff] %vm226, %v198
    %231 = vst.msk [vmem:[#allocation3 + $0x20] sm:$0xff] %vm226, %v204
    %232 = vst.msk [vmem:[#allocation3 + $0x28] sm:$0xff] %vm226, %v210
    %233 = vst.msk [vmem:[#allocation3 + $0x30] sm:$0xff] %vm226, %v216
    %234 = vst.msk [vmem:[#allocation3 + $0x38] sm:$0xff] %vm226, %v222
    %251 = vrot.lane.b32.xlu0 %v180, 32
    %v252 = vpop.permute.xlu0 %251
    %253 = vrot.lane.b32.xlu0 %v182, 32
    %v254 = vpop.permute.xlu0 %253
    %255 = vrot.lane.b32.xlu0 %v186, 32
    %v256 = vpop.permute.xlu0 %255
    %257 = vrot.lane.b32.xlu0 %v188, 32
    %v258 = vpop.permute.xlu0 %257
    %259 = vrot.lane.b32.xlu0 %v192, 32
    %v260 = vpop.permute.xlu0 %259
    %261 = vrot.lane.b32.xlu0 %v194, 32
    %v262 = vpop.permute.xlu0 %261
    %263 = vrot.lane.b32.xlu0 %v198, 32
    %v264 = vpop.permute.xlu0 %263
    %265 = vrot.lane.b32.xlu0 %v200, 32
    %v266 = vpop.permute.xlu0 %265
    %267 = vrot.lane.b32.xlu0 %v204, 32
    %v268 = vpop.permute.xlu0 %267
    %269 = vrot.lane.b32.xlu0 %v206, 32
    %v270 = vpop.permute.xlu0 %269
    %271 = vrot.lane.b32.xlu0 %v210, 32
    %v272 = vpop.permute.xlu0 %271
    %273 = vrot.lane.b32.xlu0 %v212, 32
    %v274 = vpop.permute.xlu0 %273
    %275 = vrot.lane.b32.xlu0 %v216, 32
    %v276 = vpop.permute.xlu0 %275
    %277 = vrot.lane.b32.xlu0 %v218, 32
    %v278 = vpop.permute.xlu0 %277
    %279 = vrot.lane.b32.xlu0 %v222, 32
    %v280 = vpop.permute.xlu0 %279
    %281 = vrot.lane.b32.xlu0 %v224, 32
    %v282 = vpop.permute.xlu0 %281
    %vm283 = vcmask 261120
    %v284 = vsel %vm283, %v252, %v254
    %v285 = vsel %vm283, %v256, %v258
    %v286 = vsel %vm283, %v260, %v262
    %v287 = vsel %vm283, %v264, %v266
    %v288 = vsel %vm283, %v268, %v270
    %v289 = vsel %vm283, %v272, %v274
    %v290 = vsel %vm283, %v276, %v278
    %v291 = vsel %vm283, %v280, %v282
    %s300 = scalar_lea.vmem [#allocation3], 64
    %301 = vst.msk [vmem:[%s300] sm:$0xff] %vm226, %v284
    %302 = vst.msk [vmem:[%s300 + $0x8] sm:$0xff] %vm226, %v285
    %303 = vst.msk [vmem:[%s300 + $0x10] sm:$0xff] %vm226, %v286
    %304 = vst.msk [vmem:[%s300 + $0x18] sm:$0xff] %vm226, %v287
    %305 = vst.msk [vmem:[%s300 + $0x20] sm:$0xff] %vm226, %v288
    %306 = vst.msk [vmem:[%s300 + $0x28] sm:$0xff] %vm226, %v289
    %307 = vst.msk [vmem:[%s300 + $0x30] sm:$0xff] %vm226, %v290
    %308 = vst.msk [vmem:[%s300 + $0x38] sm:$0xff] %vm226, %v291
    %v309 = vld [vmem:[%s3] sm:$0xff]
    %v310 = vld [vmem:[%s3 + $0x8] sm:$0xff]
    %v311 = vld [vmem:[%s3 + $0x10] sm:$0xff]
    %v312 = vld [vmem:[%s3 + $0x18] sm:$0xff]
    %s313 = scalar_lea.vmem %s3, 32
    %v314 = vld [vmem:[%s313] sm:$0xff]
    %v315 = vld [vmem:[%s313 + $0x8] sm:$0xff]
    %v316 = vld [vmem:[%s313 + $0x10] sm:$0xff]
    %v317 = vld [vmem:[%s313 + $0x18] sm:$0xff]
    %v318 = vld [vmem:[%s5] sm:$0x1]
    %v319 = vld [vmem:[#allocation3] sm:$0xff]
    %v320 = vxor.u32 %v319, 2147483648
    %v321 = vmul.f32 %v320, 1.442695
    %v322 = vpow.pop %v321
    %v323 = vadd.f32 %v322, 1.0
    %v324 = vrcp.pop %v323
    %v325 = vmul.f32 1.0, %v324
    %v327 = vlaneseq
    %v328 = vshrl.u32 %v327, 7
    %v329 = vsub.s32 0, %v328
    %v330 = vrot.slane %v318, %v329
    %v332 = vmul.f32 %v325, %v330
    %334 = vrot.lane.b32.xlu0 %v332, 64
    %v335 = vpop.permute.xlu0 %334
    %v337 = vadd.f32 %v319, %v335
    %v338 = vtanh.pop %v337
    %v339 = vld [vmem:[%s1] sm:$0xff]
    %v340 = vsub.f32 1.0, %v325
    %342 = vrot.lane.b32.xlu0 %v338, 96
    %v343 = vpop.permute.xlu0 %342
    %v345 = vmul.f32 %v340, %v343
    %347 = vset.pattern.permute.xlu0 0
    %348 = vperm.xlu0 %347, %v339
    %v349 = vpop.permute.xlu0 %348
    %v351 = vmul.f32 %v349, %v345
    %353 = vrot.lane.b32.xlu0 %v351, 96
    %v354 = vpop.permute.xlu0 %353
    %356 = vst.msk [vmem:[#allocation2] sm:$0xff] %vm283, %v354
    %v357 = vld [vmem:[%s300 + $0x38] sm:$0xff]
    %v358 = vxor.u32 %v357, 2147483648
    %v359 = vmul.f32 %v358, 1.442695
    %v360 = vpow.pop %v359
    %v361 = vadd.f32 %v360, 1.0
    %v362 = vrcp.pop %v361
    %v363 = vmul.f32 1.0, %v362
    %364 = vrot.lane.b32.xlu0 %v330, 96
    %v365 = vpop.permute.xlu0 %364
    %v367 = vmul.f32 %v363, %v365
    %369 = vrot.lane.b32.xlu0 %v367, 64
    %v370 = vpop.permute.xlu0 %369
    %v372 = vadd.f32 %v357, %v370
    %v373 = vtanh.pop %v372
    %s374 = scalar_lea.vmem %s1, 56
    %v375 = vld [vmem:[%s374] sm:$0xff]
    %v376 = vsub.f32 1.0, %v363
    %378 = vrot.lane.b32.xlu0 %v373, 96
    %v379 = vpop.permute.xlu0 %378
    %v381 = vmul.f32 %v376, %v379
    %383 = vset.pattern.permute.xlu0 0
    %384 = vperm.xlu0 %383, %v375
    %v385 = vpop.permute.xlu0 %384
    %v387 = vmul.f32 %v385, %v381
    %389 = vrot.lane.b32.xlu0 %v387, 96
    %v390 = vpop.permute.xlu0 %389
    %s392 = scalar_lea.vmem [#allocation2], 64
    %393 = vst.msk [vmem:[%s392 + $0x38] sm:$0xff] %vm283, %v390
    %v394 = vsel %vm283, %v354, 0
    %396 = vmatprep.subr.mxu0 0.0
    %397 = vmatpush1.msra.mxu0 0.0
    %398 = vmatprep.subr.mxu0 0.0
    %399 = vmatpush1.msra.mxu0 0.0
    %400 = vmatprep.subr.mxu0 0.0
    %401 = vmatpush1.msra.mxu0 0.0
    %402 = vmatprep.subr.mxu0 0.0
    %403 = vmatpush1.msra.mxu0 0.0
    %404 = vmatprep.subr.mxu0 0.0
    %405 = vmatpush1.msra.mxu0 0.0
    %406 = vmatprep.subr.mxu0 0.0
    %407 = vmatpush1.msra.mxu0 0.0
    %408 = vmatprep.subr.mxu0 0.0
    %409 = vmatpush1.msra.mxu0 0.0
    %410 = vmatprep.subr.mxu0 0.0
    %411 = vmatpush1.msra.mxu0 0.0
    %412 = vmatprep.subr.mxu0 0.0
    %413 = vmatpush1.msra.mxu0 0.0
    %414 = vmatprep.subr.mxu0 0.0
    %415 = vmatpush1.msra.mxu0 0.0
    %416 = vmatprep.subr.mxu0 0.0
    %417 = vmatpush1.msra.mxu0 0.0
    %418 = vmatprep.subr.mxu0 0.0
    %419 = vmatpush1.msra.mxu0 0.0
    %420 = vmatprep.subr.mxu0 0.0
    %421 = vmatpush1.msra.mxu0 %v312
    %422 = vmatprep.subr.mxu0 0.0
    %423 = vmatpush1.msra.mxu0 %v311
    %424 = vmatprep.subr.mxu0 0.0
    %425 = vmatpush1.msra.mxu0 %v310
    %426 = vmatprep.subr.mxu0 0.0
    %427 = vmatpush1.msra.mxu0 %v309
    %428 = vmatprep.subr.mxu0 0.0
    %429 = vmatpush2.msra.mxu0 0.0
    %430 = vmatprep.subr.mxu0 0.0
    %431 = vmatpush2.msra.mxu0 0.0
    %432 = vmatprep.subr.mxu0 0.0
    %433 = vmatpush2.msra.mxu0 0.0
    %434 = vmatprep.subr.mxu0 0.0
    %435 = vmatpush2.msra.mxu0 0.0
    %436 = vmatprep.subr.mxu0 0.0
    %437 = vmatpush2.msra.mxu0 0.0
    %438 = vmatprep.subr.mxu0 0.0
    %439 = vmatpush2.msra.mxu0 0.0
    %440 = vmatprep.subr.mxu0 0.0
    %441 = vmatpush2.msra.mxu0 0.0
    %442 = vmatprep.subr.mxu0 0.0
    %443 = vmatpush2.msra.mxu0 0.0
    %444 = vmatprep.subr.mxu0 0.0
    %445 = vmatpush2.msra.mxu0 0.0
    %446 = vmatprep.subr.mxu0 0.0
    %447 = vmatpush2.msra.mxu0 0.0
    %448 = vmatprep.subr.mxu0 0.0
    %449 = vmatpush2.msra.mxu0 0.0
    %450 = vmatprep.subr.mxu0 0.0
    %451 = vmatpush2.msra.mxu0 0.0
    %452 = vmatprep.subr.mxu0 0.0
    %453 = vmatpush2.msra.mxu0 0.0
    %454 = vmatprep.subr.mxu0 0.0
    %455 = vmatpush2.msra.mxu0 0.0
    %456 = vmatprep.subr.mxu0 0.0
    %457 = vmatpush2.msra.mxu0 0.0
    %458 = vmatprep.subr.mxu0 0.0
    %459 = vmatpush2.msra.mxu0 0.0
    %460 = vmatprep.mubr.f32.mxu0 0.0
    %461 = vmatmul.mubr.f32.gmra.mxu0 %v394
    %v462 = vpop.f32.mrf.mxu0
    %v463 = vadd.f32 0.0, %v462
    %v464 = vpop.f32.mrf.mxu0
    %465 = vdwg.mxu0
    %v466 = vsel %vm283, %v390, 0
    %468 = vmatprep.subr.mxu0 0.0
    %469 = vmatpush1.msra.mxu0 0.0
    %470 = vmatprep.subr.mxu0 0.0
    %471 = vmatpush1.msra.mxu0 0.0
    %472 = vmatprep.subr.mxu0 0.0
    %473 = vmatpush1.msra.mxu0 0.0
    %474 = vmatprep.subr.mxu0 0.0
    %475 = vmatpush1.msra.mxu0 0.0
    %476 = vmatprep.subr.mxu0 0.0
    %477 = vmatpush1.msra.mxu0 0.0
    %478 = vmatprep.subr.mxu0 0.0
    %479 = vmatpush1.msra.mxu0 0.0
    %480 = vmatprep.subr.mxu0 0.0
    %481 = vmatpush1.msra.mxu0 0.0
    %482 = vmatprep.subr.mxu0 0.0
    %483 = vmatpush1.msra.mxu0 0.0
    %484 = vmatprep.subr.mxu0 0.0
    %485 = vmatpush1.msra.mxu0 0.0
    %486 = vmatprep.subr.mxu0 0.0
    %487 = vmatpush1.msra.mxu0 0.0
    %488 = vmatprep.subr.mxu0 0.0
    %489 = vmatpush1.msra.mxu0 0.0
    %490 = vmatprep.subr.mxu0 0.0
    %491 = vmatpush1.msra.mxu0 0.0
    %492 = vmatprep.subr.mxu0 0.0
    %493 = vmatpush1.msra.mxu0 %v317
    %494 = vmatprep.subr.mxu0 0.0
    %495 = vmatpush1.msra.mxu0 %v316
    %496 = vmatprep.subr.mxu0 0.0
    %497 = vmatpush1.msra.mxu0 %v315
    %498 = vmatprep.subr.mxu0 0.0
    %499 = vmatpush1.msra.mxu0 %v314
    %500 = vmatprep.subr.mxu0 0.0
    %501 = vmatpush2.msra.mxu0 0.0
    %502 = vmatprep.subr.mxu0 0.0
    %503 = vmatpush2.msra.mxu0 0.0
    %504 = vmatprep.subr.mxu0 0.0
    %505 = vmatpush2.msra.mxu0 0.0
    %506 = vmatprep.subr.mxu0 0.0
    %507 = vmatpush2.msra.mxu0 0.0
    %508 = vmatprep.subr.mxu0 0.0
    %509 = vmatpush2.msra.mxu0 0.0
    %510 = vmatprep.subr.mxu0 0.0
    %511 = vmatpush2.msra.mxu0 0.0
    %512 = vmatprep.subr.mxu0 0.0
    %513 = vmatpush2.msra.mxu0 0.0
    %514 = vmatprep.subr.mxu0 0.0
    %515 = vmatpush2.msra.mxu0 0.0
    %516 = vmatprep.subr.mxu0 0.0
    %517 = vmatpush2.msra.mxu0 0.0
    %518 = vmatprep.subr.mxu0 0.0
    %519 = vmatpush2.msra.mxu0 0.0
    %520 = vmatprep.subr.mxu0 0.0
    %521 = vmatpush2.msra.mxu0 0.0
    %522 = vmatprep.subr.mxu0 0.0
    %523 = vmatpush2.msra.mxu0 0.0
    %524 = vmatprep.subr.mxu0 0.0
    %525 = vmatpush2.msra.mxu0 0.0
    %526 = vmatprep.subr.mxu0 0.0
    %527 = vmatpush2.msra.mxu0 0.0
    %528 = vmatprep.subr.mxu0 0.0
    %529 = vmatpush2.msra.mxu0 0.0
    %530 = vmatprep.subr.mxu0 0.0
    %531 = vmatpush2.msra.mxu0 0.0
    %532 = vmatprep.mubr.f32.mxu0 0.0
    %533 = vmatmul.mubr.f32.gmra.mxu0 %v466
    %v534 = vpop.f32.mrf.mxu0
    %v535 = vadd.f32 0.0, %v534
    %v536 = vpop.f32.mrf.mxu0
    %537 = vdwg.mxu0
    %v538 = vld [vmem:[#allocation3 + $0x8] sm:$0xff]
    %v539 = vadd.f32 %v538, %v463
    %540 = vrot.lane.b32.xlu0 %v330, 64
    %v541 = vpop.permute.xlu0 %540
    %v543 = vadd.f32 %v463, %v541
    %v544 = vxor.u32 %v539, 2147483648
    %v545 = vmul.f32 %v544, 1.442695
    %v546 = vpow.pop %v545
    %v547 = vadd.f32 %v546, 1.0
    %v548 = vrcp.pop %v547
    %v549 = vmul.f32 1.0, %v548
    %551 = vrot.lane.b32.xlu0 %v543, 64
    %v552 = vpop.permute.xlu0 %551
    %v554 = vmul.f32 %v549, %v552
    %556 = vrot.lane.b32.xlu0 %v554, 64
    %v557 = vpop.permute.xlu0 %556
    %v559 = vadd.f32 %v538, %v557
    %v560 = vtanh.pop %v559
    %s561 = scalar_lea.vmem %s1, 8
    %v562 = vld [vmem:[%s561] sm:$0xff]
    %564 = vrot.lane.b32.xlu0 %v560, 96
    %v565 = vpop.permute.xlu0 %564
    %v567 = vsub.f32 %v351, %v565
    %v568 = vmul.f32 %v549, %v567
    %570 = vrot.lane.b32.xlu0 %v568, 32
    %v571 = vpop.permute.xlu0 %570
    %v573 = vadd.f32 %v560, %v571
    %574 = vrot.lane.b32.xlu0 %v351, 32
    %v575 = vpop.permute.xlu0 %574
    %v577 = vsub.f32 %v573, %v575
    %579 = vset.pattern.permute.xlu0 0
    %580 = vperm.xlu0 %579, %v562
    %v581 = vpop.permute.xlu0 %580
    %v583 = vmul.f32 %v581, %v577
    %585 = vrot.lane.b32.xlu0 %v583, 96
    %v586 = vpop.permute.xlu0 %585
    %v588 = vadd.f32 %v351, %v586
    %590 = vrot.lane.b32.xlu0 %v588, 96
    %v591 = vpop.permute.xlu0 %590
    %593 = vst.msk [vmem:[#allocation2 + $0x8] sm:$0xff] %vm283, %v591
    %v594 = vld [vmem:[%s300 + $0x30] sm:$0xff]
    %v595 = vadd.f32 %v594, %v535
    %596 = vrot.lane.b32.xlu0 %v330, 32
    %v597 = vpop.permute.xlu0 %596
    %v599 = vadd.f32 %v535, %v597
    %v600 = vxor.u32 %v595, 2147483648
    %v601 = vmul.f32 %v600, 1.442695
    %v602 = vpow.pop %v601
    %v603 = vadd.f32 %v602, 1.0
    %v604 = vrcp.pop %v603
    %v605 = vmul.f32 1.0, %v604
    %607 = vrot.lane.b32.xlu0 %v599, 64
    %v608 = vpop.permute.xlu0 %607
    %v610 = vmul.f32 %v605, %v608
    %612 = vrot.lane.b32.xlu0 %v610, 64
    %v613 = vpop.permute.xlu0 %612
    %v615 = vadd.f32 %v594, %v613
    %v616 = vtanh.pop %v615
    %s617 = scalar_lea.vmem %s1, 48
    %v618 = vld [vmem:[%s617] sm:$0xff]
    %620 = vrot.lane.b32.xlu0 %v616, 96
    %v621 = vpop.permute.xlu0 %620
    %v623 = vsub.f32 %v387, %v621
    %v624 = vmul.f32 %v605, %v623
    %626 = vrot.lane.b32.xlu0 %v624, 32
    %v627 = vpop.permute.xlu0 %626
    %v629 = vadd.f32 %v616, %v627
    %630 = vrot.lane.b32.xlu0 %v387, 32
    %v631 = vpop.permute.xlu0 %630
    %v633 = vsub.f32 %v629, %v631
    %635 = vset.pattern.permute.xlu0 0
    %636 = vperm.xlu0 %635, %v618
    %v637 = vpop.permute.xlu0 %636
    %v639 = vmul.f32 %v637, %v633
    %641 = vrot.lane.b32.xlu0 %v639, 96
    %v642 = vpop.permute.xlu0 %641
    %v644 = vadd.f32 %v387, %v642
    %646 = vrot.lane.b32.xlu0 %v644, 96
    %v647 = vpop.permute.xlu0 %646
    %649 = vst.msk [vmem:[%s392 + $0x30] sm:$0xff] %vm283, %v647
    %v650 = vsel %vm283, %v591, 0
    %652 = vmatprep.subr.mxu0 0.0
    %653 = vmatpush1.msra.mxu0 0.0
    %654 = vmatprep.subr.mxu0 0.0
    %655 = vmatpush1.msra.mxu0 0.0
    %656 = vmatprep.subr.mxu0 0.0
    %657 = vmatpush1.msra.mxu0 0.0
    %658 = vmatprep.subr.mxu0 0.0
    %659 = vmatpush1.msra.mxu0 0.0
    %660 = vmatprep.subr.mxu0 0.0
    %661 = vmatpush1.msra.mxu0 0.0
    %662 = vmatprep.subr.mxu0 0.0
    %663 = vmatpush1.msra.mxu0 0.0
    %664 = vmatprep.subr.mxu0 0.0
    %665 = vmatpush1.msra.mxu0 0.0
    %666 = vmatprep.subr.mxu0 0.0
    %667 = vmatpush1.msra.mxu0 0.0
    %668 = vmatprep.subr.mxu0 0.0
    %669 = vmatpush1.msra.mxu0 0.0
    %670 = vmatprep.subr.mxu0 0.0
    %671 = vmatpush1.msra.mxu0 0.0
    %672 = vmatprep.subr.mxu0 0.0
    %673 = vmatpush1.msra.mxu0 0.0
    %674 = vmatprep.subr.mxu0 0.0
    %675 = vmatpush1.msra.mxu0 0.0
    %676 = vmatprep.subr.mxu0 0.0
    %677 = vmatpush1.msra.mxu0 %v312
    %678 = vmatprep.subr.mxu0 0.0
    %679 = vmatpush1.msra.mxu0 %v311
    %680 = vmatprep.subr.mxu0 0.0
    %681 = vmatpush1.msra.mxu0 %v310
    %682 = vmatprep.subr.mxu0 0.0
    %683 = vmatpush1.msra.mxu0 %v309
    %684 = vmatprep.subr.mxu0 0.0
    %685 = vmatpush2.msra.mxu0 0.0
    %686 = vmatprep.subr.mxu0 0.0
    %687 = vmatpush2.msra.mxu0 0.0
    %688 = vmatprep.subr.mxu0 0.0
    %689 = vmatpush2.msra.mxu0 0.0
    %690 = vmatprep.subr.mxu0 0.0
    %691 = vmatpush2.msra.mxu0 0.0
    %692 = vmatprep.subr.mxu0 0.0
    %693 = vmatpush2.msra.mxu0 0.0
    %694 = vmatprep.subr.mxu0 0.0
    %695 = vmatpush2.msra.mxu0 0.0
    %696 = vmatprep.subr.mxu0 0.0
    %697 = vmatpush2.msra.mxu0 0.0
    %698 = vmatprep.subr.mxu0 0.0
    %699 = vmatpush2.msra.mxu0 0.0
    %700 = vmatprep.subr.mxu0 0.0
    %701 = vmatpush2.msra.mxu0 0.0
    %702 = vmatprep.subr.mxu0 0.0
    %703 = vmatpush2.msra.mxu0 0.0
    %704 = vmatprep.subr.mxu0 0.0
    %705 = vmatpush2.msra.mxu0 0.0
    %706 = vmatprep.subr.mxu0 0.0
    %707 = vmatpush2.msra.mxu0 0.0
    %708 = vmatprep.subr.mxu0 0.0
    %709 = vmatpush2.msra.mxu0 0.0
    %710 = vmatprep.subr.mxu0 0.0
    %711 = vmatpush2.msra.mxu0 0.0
    %712 = vmatprep.subr.mxu0 0.0
    %713 = vmatpush2.msra.mxu0 0.0
    %714 = vmatprep.subr.mxu0 0.0
    %715 = vmatpush2.msra.mxu0 0.0
    %716 = vmatprep.mubr.f32.mxu0 0.0
    %717 = vmatmul.mubr.f32.gmra.mxu0 %v650
    %v718 = vpop.f32.mrf.mxu0
    %v719 = vadd.f32 0.0, %v718
    %v720 = vpop.f32.mrf.mxu0
    %721 = vdwg.mxu0
    %v722 = vsel %vm283, %v647, 0
    %724 = vmatprep.subr.mxu0 0.0
    %725 = vmatpush1.msra.mxu0 0.0
    %726 = vmatprep.subr.mxu0 0.0
    %727 = vmatpush1.msra.mxu0 0.0
    %728 = vmatprep.subr.mxu0 0.0
    %729 = vmatpush1.msra.mxu0 0.0
    %730 = vmatprep.subr.mxu0 0.0
    %731 = vmatpush1.msra.mxu0 0.0
    %732 = vmatprep.subr.mxu0 0.0
    %733 = vmatpush1.msra.mxu0 0.0
    %734 = vmatprep.subr.mxu0 0.0
    %735 = vmatpush1.msra.mxu0 0.0
    %736 = vmatprep.subr.mxu0 0.0
    %737 = vmatpush1.msra.mxu0 0.0
    %738 = vmatprep.subr.mxu0 0.0
    %739 = vmatpush1.msra.mxu0 0.0
    %740 = vmatprep.subr.mxu0 0.0
    %741 = vmatpush1.msra.mxu0 0.0
    %742 = vmatprep.subr.mxu0 0.0
    %743 = vmatpush1.msra.mxu0 0.0
    %744 = vmatprep.subr.mxu0 0.0
    %745 = vmatpush1.msra.mxu0 0.0
    %746 = vmatprep.subr.mxu0 0.0
    %747 = vmatpush1.msra.mxu0 0.0
    %748 = vmatprep.subr.mxu0 0.0
    %749 = vmatpush1.msra.mxu0 %v317
    %750 = vmatprep.subr.mxu0 0.0
    %751 = vmatpush1.msra.mxu0 %v316
    %752 = vmatprep.subr.mxu0 0.0
    %753 = vmatpush1.msra.mxu0 %v315
    %754 = vmatprep.subr.mxu0 0.0
    %755 = vmatpush1.msra.mxu0 %v314
    %756 = vmatprep.subr.mxu0 0.0
    %757 = vmatpush2.msra.mxu0 0.0
    %758 = vmatprep.subr.mxu0 0.0
    %759 = vmatpush2.msra.mxu0 0.0
    %760 = vmatprep.subr.mxu0 0.0
    %761 = vmatpush2.msra.mxu0 0.0
    %762 = vmatprep.subr.mxu0 0.0
    %763 = vmatpush2.msra.mxu0 0.0
    %764 = vmatprep.subr.mxu0 0.0
    %765 = vmatpush2.msra.mxu0 0.0
    %766 = vmatprep.subr.mxu0 0.0
    %767 = vmatpush2.msra.mxu0 0.0
    %768 = vmatprep.subr.mxu0 0.0
    %769 = vmatpush2.msra.mxu0 0.0
    %770 = vmatprep.subr.mxu0 0.0
    %771 = vmatpush2.msra.mxu0 0.0
    %772 = vmatprep.subr.mxu0 0.0
    %773 = vmatpush2.msra.mxu0 0.0
    %774 = vmatprep.subr.mxu0 0.0
    %775 = vmatpush2.msra.mxu0 0.0
    %776 = vmatprep.subr.mxu0 0.0
    %777 = vmatpush2.msra.mxu0 0.0
    %778 = vmatprep.subr.mxu0 0.0
    %779 = vmatpush2.msra.mxu0 0.0
    %780 = vmatprep.subr.mxu0 0.0
    %781 = vmatpush2.msra.mxu0 0.0
    %782 = vmatprep.subr.mxu0 0.0
    %783 = vmatpush2.msra.mxu0 0.0
    %784 = vmatprep.subr.mxu0 0.0
    %785 = vmatpush2.msra.mxu0 0.0
    %786 = vmatprep.subr.mxu0 0.0
    %787 = vmatpush2.msra.mxu0 0.0
    %788 = vmatprep.mubr.f32.mxu0 0.0
    %789 = vmatmul.mubr.f32.gmra.mxu0 %v722
    %v790 = vpop.f32.mrf.mxu0
    %v791 = vadd.f32 0.0, %v790
    %v792 = vpop.f32.mrf.mxu0
    %793 = vdwg.mxu0
    %v794 = vld [vmem:[#allocation3 + $0x10] sm:$0xff]
    %v795 = vadd.f32 %v794, %v719
    %v796 = vadd.f32 %v719, %v541
    %v797 = vxor.u32 %v795, 2147483648
    %v798 = vmul.f32 %v797, 1.442695
    %v799 = vpow.pop %v798
    %v800 = vadd.f32 %v799, 1.0
    %v801 = vrcp.pop %v800
    %v802 = vmul.f32 1.0, %v801
    %804 = vrot.lane.b32.xlu0 %v796, 64
    %v805 = vpop.permute.xlu0 %804
    %v807 = vmul.f32 %v802, %v805
    %809 = vrot.lane.b32.xlu0 %v807, 64
    %v810 = vpop.permute.xlu0 %809
    %v812 = vadd.f32 %v794, %v810
    %v813 = vtanh.pop %v812
    %s814 = scalar_lea.vmem %s1, 16
    %v815 = vld [vmem:[%s814] sm:$0xff]
    %817 = vrot.lane.b32.xlu0 %v813, 96
    %v818 = vpop.permute.xlu0 %817
    %v820 = vsub.f32 %v588, %v818
    %v821 = vmul.f32 %v802, %v820
    %823 = vrot.lane.b32.xlu0 %v821, 32
    %v824 = vpop.permute.xlu0 %823
    %v826 = vadd.f32 %v813, %v824
    %827 = vrot.lane.b32.xlu0 %v588, 32
    %v828 = vpop.permute.xlu0 %827
    %v830 = vsub.f32 %v826, %v828
    %832 = vset.pattern.permute.xlu0 0
    %833 = vperm.xlu0 %832, %v815
    %v834 = vpop.permute.xlu0 %833
    %v836 = vmul.f32 %v834, %v830
    %838 = vrot.lane.b32.xlu0 %v836, 96
    %v839 = vpop.permute.xlu0 %838
    %v841 = vadd.f32 %v588, %v839
    %843 = vrot.lane.b32.xlu0 %v841, 96
    %v844 = vpop.permute.xlu0 %843
    %846 = vst.msk [vmem:[#allocation2 + $0x10] sm:$0xff] %vm283, %v844
    %v847 = vld [vmem:[%s300 + $0x28] sm:$0xff]
    %v848 = vadd.f32 %v847, %v791
    %v849 = vadd.f32 %v791, %v597
    %v850 = vxor.u32 %v848, 2147483648
    %v851 = vmul.f32 %v850, 1.442695
    %v852 = vpow.pop %v851
    %v853 = vadd.f32 %v852, 1.0
    %v854 = vrcp.pop %v853
    %v855 = vmul.f32 1.0, %v854
    %857 = vrot.lane.b32.xlu0 %v849, 64
    %v858 = vpop.permute.xlu0 %857
    %v860 = vmul.f32 %v855, %v858
    %862 = vrot.lane.b32.xlu0 %v860, 64
    %v863 = vpop.permute.xlu0 %862
    %v865 = vadd.f32 %v847, %v863
    %v866 = vtanh.pop %v865
    %s867 = scalar_lea.vmem %s1, 40
    %v868 = vld [vmem:[%s867] sm:$0xff]
    %870 = vrot.lane.b32.xlu0 %v866, 96
    %v871 = vpop.permute.xlu0 %870
    %v873 = vsub.f32 %v644, %v871
    %v874 = vmul.f32 %v855, %v873
    %876 = vrot.lane.b32.xlu0 %v874, 32
    %v877 = vpop.permute.xlu0 %876
    %v879 = vadd.f32 %v866, %v877
    %880 = vrot.lane.b32.xlu0 %v644, 32
    %v881 = vpop.permute.xlu0 %880
    %v883 = vsub.f32 %v879, %v881
    %885 = vset.pattern.permute.xlu0 0
    %886 = vperm.xlu0 %885, %v868
    %v887 = vpop.permute.xlu0 %886
    %v889 = vmul.f32 %v887, %v883
    %891 = vrot.lane.b32.xlu0 %v889, 96
    %v892 = vpop.permute.xlu0 %891
    %v894 = vadd.f32 %v644, %v892
    %896 = vrot.lane.b32.xlu0 %v894, 96
    %v897 = vpop.permute.xlu0 %896
    %899 = vst.msk [vmem:[%s392 + $0x28] sm:$0xff] %vm283, %v897
    %v900 = vsel %vm283, %v844, 0
    %902 = vmatprep.subr.mxu0 0.0
    %903 = vmatpush1.msra.mxu0 0.0
    %904 = vmatprep.subr.mxu0 0.0
    %905 = vmatpush1.msra.mxu0 0.0
    %906 = vmatprep.subr.mxu0 0.0
    %907 = vmatpush1.msra.mxu0 0.0
    %908 = vmatprep.subr.mxu0 0.0
    %909 = vmatpush1.msra.mxu0 0.0
    %910 = vmatprep.subr.mxu0 0.0
    %911 = vmatpush1.msra.mxu0 0.0
    %912 = vmatprep.subr.mxu0 0.0
    %913 = vmatpush1.msra.mxu0 0.0
    %914 = vmatprep.subr.mxu0 0.0
    %915 = vmatpush1.msra.mxu0 0.0
    %916 = vmatprep.subr.mxu0 0.0
    %917 = vmatpush1.msra.mxu0 0.0
    %918 = vmatprep.subr.mxu0 0.0
    %919 = vmatpush1.msra.mxu0 0.0
    %920 = vmatprep.subr.mxu0 0.0
    %921 = vmatpush1.msra.mxu0 0.0
    %922 = vmatprep.subr.mxu0 0.0
    %923 = vmatpush1.msra.mxu0 0.0
    %924 = vmatprep.subr.mxu0 0.0
    %925 = vmatpush1.msra.mxu0 0.0
    %926 = vmatprep.subr.mxu0 0.0
    %927 = vmatpush1.msra.mxu0 %v312
    %928 = vmatprep.subr.mxu0 0.0
    %929 = vmatpush1.msra.mxu0 %v311
    %930 = vmatprep.subr.mxu0 0.0
    %931 = vmatpush1.msra.mxu0 %v310
    %932 = vmatprep.subr.mxu0 0.0
    %933 = vmatpush1.msra.mxu0 %v309
    %934 = vmatprep.subr.mxu0 0.0
    %935 = vmatpush2.msra.mxu0 0.0
    %936 = vmatprep.subr.mxu0 0.0
    %937 = vmatpush2.msra.mxu0 0.0
    %938 = vmatprep.subr.mxu0 0.0
    %939 = vmatpush2.msra.mxu0 0.0
    %940 = vmatprep.subr.mxu0 0.0
    %941 = vmatpush2.msra.mxu0 0.0
    %942 = vmatprep.subr.mxu0 0.0
    %943 = vmatpush2.msra.mxu0 0.0
    %944 = vmatprep.subr.mxu0 0.0
    %945 = vmatpush2.msra.mxu0 0.0
    %946 = vmatprep.subr.mxu0 0.0
    %947 = vmatpush2.msra.mxu0 0.0
    %948 = vmatprep.subr.mxu0 0.0
    %949 = vmatpush2.msra.mxu0 0.0
    %950 = vmatprep.subr.mxu0 0.0
    %951 = vmatpush2.msra.mxu0 0.0
    %952 = vmatprep.subr.mxu0 0.0
    %953 = vmatpush2.msra.mxu0 0.0
    %954 = vmatprep.subr.mxu0 0.0
    %955 = vmatpush2.msra.mxu0 0.0
    %956 = vmatprep.subr.mxu0 0.0
    %957 = vmatpush2.msra.mxu0 0.0
    %958 = vmatprep.subr.mxu0 0.0
    %959 = vmatpush2.msra.mxu0 0.0
    %960 = vmatprep.subr.mxu0 0.0
    %961 = vmatpush2.msra.mxu0 0.0
    %962 = vmatprep.subr.mxu0 0.0
    %963 = vmatpush2.msra.mxu0 0.0
    %964 = vmatprep.subr.mxu0 0.0
    %965 = vmatpush2.msra.mxu0 0.0
    %966 = vmatprep.mubr.f32.mxu0 0.0
    %967 = vmatmul.mubr.f32.gmra.mxu0 %v900
    %v968 = vpop.f32.mrf.mxu0
    %v969 = vadd.f32 0.0, %v968
    %v970 = vpop.f32.mrf.mxu0
    %971 = vdwg.mxu0
    %v972 = vsel %vm283, %v897, 0
    %974 = vmatprep.subr.mxu0 0.0
    %975 = vmatpush1.msra.mxu0 0.0
    %976 = vmatprep.subr.mxu0 0.0
    %977 = vmatpush1.msra.mxu0 0.0
    %978 = vmatprep.subr.mxu0 0.0
    %979 = vmatpush1.msra.mxu0 0.0
    %980 = vmatprep.subr.mxu0 0.0
    %981 = vmatpush1.msra.mxu0 0.0
    %982 = vmatprep.subr.mxu0 0.0
    %983 = vmatpush1.msra.mxu0 0.0
    %984 = vmatprep.subr.mxu0 0.0
    %985 = vmatpush1.msra.mxu0 0.0
    %986 = vmatprep.subr.mxu0 0.0
    %987 = vmatpush1.msra.mxu0 0.0
    %988 = vmatprep.subr.mxu0 0.0
    %989 = vmatpush1.msra.mxu0 0.0
    %990 = vmatprep.subr.mxu0 0.0
    %991 = vmatpush1.msra.mxu0 0.0
    %992 = vmatprep.subr.mxu0 0.0
    %993 = vmatpush1.msra.mxu0 0.0
    %994 = vmatprep.subr.mxu0 0.0
    %995 = vmatpush1.msra.mxu0 0.0
    %996 = vmatprep.subr.mxu0 0.0
    %997 = vmatpush1.msra.mxu0 0.0
    %998 = vmatprep.subr.mxu0 0.0
    %999 = vmatpush1.msra.mxu0 %v317
    %1000 = vmatprep.subr.mxu0 0.0
    %1001 = vmatpush1.msra.mxu0 %v316
    %1002 = vmatprep.subr.mxu0 0.0
    %1003 = vmatpush1.msra.mxu0 %v315
    %1004 = vmatprep.subr.mxu0 0.0
    %1005 = vmatpush1.msra.mxu0 %v314
    %1006 = vmatprep.subr.mxu0 0.0
    %1007 = vmatpush2.msra.mxu0 0.0
    %1008 = vmatprep.subr.mxu0 0.0
    %1009 = vmatpush2.msra.mxu0 0.0
    %1010 = vmatprep.subr.mxu0 0.0
    %1011 = vmatpush2.msra.mxu0 0.0
    %1012 = vmatprep.subr.mxu0 0.0
    %1013 = vmatpush2.msra.mxu0 0.0
    %1014 = vmatprep.subr.mxu0 0.0
    %1015 = vmatpush2.msra.mxu0 0.0
    %1016 = vmatprep.subr.mxu0 0.0
    %1017 = vmatpush2.msra.mxu0 0.0
    %1018 = vmatprep.subr.mxu0 0.0
    %1019 = vmatpush2.msra.mxu0 0.0
    %1020 = vmatprep.subr.mxu0 0.0
    %1021 = vmatpush2.msra.mxu0 0.0
    %1022 = vmatprep.subr.mxu0 0.0
    %1023 = vmatpush2.msra.mxu0 0.0
    %1024 = vmatprep.subr.mxu0 0.0
    %1025 = vmatpush2.msra.mxu0 0.0
    %1026 = vmatprep.subr.mxu0 0.0
    %1027 = vmatpush2.msra.mxu0 0.0
    %1028 = vmatprep.subr.mxu0 0.0
    %1029 = vmatpush2.msra.mxu0 0.0
    %1030 = vmatprep.subr.mxu0 0.0
    %1031 = vmatpush2.msra.mxu0 0.0
    %1032 = vmatprep.subr.mxu0 0.0
    %1033 = vmatpush2.msra.mxu0 0.0
    %1034 = vmatprep.subr.mxu0 0.0
    %1035 = vmatpush2.msra.mxu0 0.0
    %1036 = vmatprep.subr.mxu0 0.0
    %1037 = vmatpush2.msra.mxu0 0.0
    %1038 = vmatprep.mubr.f32.mxu0 0.0
    %1039 = vmatmul.mubr.f32.gmra.mxu0 %v972
    %v1040 = vpop.f32.mrf.mxu0
    %v1041 = vadd.f32 0.0, %v1040
    %v1042 = vpop.f32.mrf.mxu0
    %1043 = vdwg.mxu0
    %v1044 = vld [vmem:[#allocation3 + $0x18] sm:$0xff]
    %v1045 = vadd.f32 %v1044, %v969
    %v1046 = vadd.f32 %v969, %v541
    %v1047 = vxor.u32 %v1045, 2147483648
    %v1048 = vmul.f32 %v1047, 1.442695
    %v1049 = vpow.pop %v1048
    %v1050 = vadd.f32 %v1049, 1.0
    %v1051 = vrcp.pop %v1050
    %v1052 = vmul.f32 1.0, %v1051
    %1054 = vrot.lane.b32.xlu0 %v1046, 64
    %v1055 = vpop.permute.xlu0 %1054
    %v1057 = vmul.f32 %v1052, %v1055
    %1059 = vrot.lane.b32.xlu0 %v1057, 64
    %v1060 = vpop.permute.xlu0 %1059
    %v1062 = vadd.f32 %v1044, %v1060
    %v1063 = vtanh.pop %v1062
    %s1064 = scalar_lea.vmem %s1, 24
    %v1065 = vld [vmem:[%s1064] sm:$0xff]
    %1067 = vrot.lane.b32.xlu0 %v1063, 96
    %v1068 = vpop.permute.xlu0 %1067
    %v1070 = vsub.f32 %v841, %v1068
    %v1071 = vmul.f32 %v1052, %v1070
    %1073 = vrot.lane.b32.xlu0 %v1071, 32
    %v1074 = vpop.permute.xlu0 %1073
    %v1076 = vadd.f32 %v1063, %v1074
    %1077 = vrot.lane.b32.xlu0 %v841, 32
    %v1078 = vpop.permute.xlu0 %1077
    %v1080 = vsub.f32 %v1076, %v1078
    %1082 = vset.pattern.permute.xlu0 0
    %1083 = vperm.xlu0 %1082, %v1065
    %v1084 = vpop.permute.xlu0 %1083
    %v1086 = vmul.f32 %v1084, %v1080
    %1088 = vrot.lane.b32.xlu0 %v1086, 96
    %v1089 = vpop.permute.xlu0 %1088
    %v1091 = vadd.f32 %v841, %v1089
    %1093 = vrot.lane.b32.xlu0 %v1091, 96
    %v1094 = vpop.permute.xlu0 %1093
    %1096 = vst.msk [vmem:[#allocation2 + $0x18] sm:$0xff] %vm283, %v1094
    %v1097 = vld [vmem:[%s300 + $0x20] sm:$0xff]
    %v1098 = vadd.f32 %v1097, %v1041
    %v1099 = vadd.f32 %v1041, %v597
    %v1100 = vxor.u32 %v1098, 2147483648
    %v1101 = vmul.f32 %v1100, 1.442695
    %v1102 = vpow.pop %v1101
    %v1103 = vadd.f32 %v1102, 1.0
    %v1104 = vrcp.pop %v1103
    %v1105 = vmul.f32 1.0, %v1104
    %1107 = vrot.lane.b32.xlu0 %v1099, 64
    %v1108 = vpop.permute.xlu0 %1107
    %v1110 = vmul.f32 %v1105, %v1108
    %1112 = vrot.lane.b32.xlu0 %v1110, 64
    %v1113 = vpop.permute.xlu0 %1112
    %v1115 = vadd.f32 %v1097, %v1113
    %v1116 = vtanh.pop %v1115
    %s1117 = scalar_lea.vmem %s1, 32
    %v1118 = vld [vmem:[%s1117] sm:$0xff]
    %1120 = vrot.lane.b32.xlu0 %v1116, 96
    %v1121 = vpop.permute.xlu0 %1120
    %v1123 = vsub.f32 %v894, %v1121
    %v1124 = vmul.f32 %v1105, %v1123
    %1126 = vrot.lane.b32.xlu0 %v1124, 32
    %v1127 = vpop.permute.xlu0 %1126
    %v1129 = vadd.f32 %v1116, %v1127
    %1130 = vrot.lane.b32.xlu0 %v894, 32
    %v1131 = vpop.permute.xlu0 %1130
    %v1133 = vsub.f32 %v1129, %v1131
    %1135 = vset.pattern.permute.xlu0 0
    %1136 = vperm.xlu0 %1135, %v1118
    %v1137 = vpop.permute.xlu0 %1136
    %v1139 = vmul.f32 %v1137, %v1133
    %1141 = vrot.lane.b32.xlu0 %v1139, 96
    %v1142 = vpop.permute.xlu0 %1141
    %v1144 = vadd.f32 %v894, %v1142
    %1146 = vrot.lane.b32.xlu0 %v1144, 96
    %v1147 = vpop.permute.xlu0 %1146
    %1149 = vst.msk [vmem:[%s392 + $0x20] sm:$0xff] %vm283, %v1147
    %v1150 = vsel %vm283, %v1094, 0
    %1152 = vmatprep.subr.mxu0 0.0
    %1153 = vmatpush1.msra.mxu0 0.0
    %1154 = vmatprep.subr.mxu0 0.0
    %1155 = vmatpush1.msra.mxu0 0.0
    %1156 = vmatprep.subr.mxu0 0.0
    %1157 = vmatpush1.msra.mxu0 0.0
    %1158 = vmatprep.subr.mxu0 0.0
    %1159 = vmatpush1.msra.mxu0 0.0
    %1160 = vmatprep.subr.mxu0 0.0
    %1161 = vmatpush1.msra.mxu0 0.0
    %1162 = vmatprep.subr.mxu0 0.0
    %1163 = vmatpush1.msra.mxu0 0.0
    %1164 = vmatprep.subr.mxu0 0.0
    %1165 = vmatpush1.msra.mxu0 0.0
    %1166 = vmatprep.subr.mxu0 0.0
    %1167 = vmatpush1.msra.mxu0 0.0
    %1168 = vmatprep.subr.mxu0 0.0
    %1169 = vmatpush1.msra.mxu0 0.0
    %1170 = vmatprep.subr.mxu0 0.0
    %1171 = vmatpush1.msra.mxu0 0.0
    %1172 = vmatprep.subr.mxu0 0.0
    %1173 = vmatpush1.msra.mxu0 0.0
    %1174 = vmatprep.subr.mxu0 0.0
    %1175 = vmatpush1.msra.mxu0 0.0
    %1176 = vmatprep.subr.mxu0 0.0
    %1177 = vmatpush1.msra.mxu0 %v312
    %1178 = vmatprep.subr.mxu0 0.0
    %1179 = vmatpush1.msra.mxu0 %v311
    %1180 = vmatprep.subr.mxu0 0.0
    %1181 = vmatpush1.msra.mxu0 %v310
    %1182 = vmatprep.subr.mxu0 0.0
    %1183 = vmatpush1.msra.mxu0 %v309
    %1184 = vmatprep.subr.mxu0 0.0
    %1185 = vmatpush2.msra.mxu0 0.0
    %1186 = vmatprep.subr.mxu0 0.0
    %1187 = vmatpush2.msra.mxu0 0.0
    %1188 = vmatprep.subr.mxu0 0.0
    %1189 = vmatpush2.msra.mxu0 0.0
    %1190 = vmatprep.subr.mxu0 0.0
    %1191 = vmatpush2.msra.mxu0 0.0
    %1192 = vmatprep.subr.mxu0 0.0
    %1193 = vmatpush2.msra.mxu0 0.0
    %1194 = vmatprep.subr.mxu0 0.0
    %1195 = vmatpush2.msra.mxu0 0.0
    %1196 = vmatprep.subr.mxu0 0.0
    %1197 = vmatpush2.msra.mxu0 0.0
    %1198 = vmatprep.subr.mxu0 0.0
    %1199 = vmatpush2.msra.mxu0 0.0
    %1200 = vmatprep.subr.mxu0 0.0
    %1201 = vmatpush2.msra.mxu0 0.0
    %1202 = vmatprep.subr.mxu0 0.0
    %1203 = vmatpush2.msra.mxu0 0.0
    %1204 = vmatprep.subr.mxu0 0.0
    %1205 = vmatpush2.msra.mxu0 0.0
    %1206 = vmatprep.subr.mxu0 0.0
    %1207 = vmatpush2.msra.mxu0 0.0
    %1208 = vmatprep.subr.mxu0 0.0
    %1209 = vmatpush2.msra.mxu0 0.0
    %1210 = vmatprep.subr.mxu0 0.0
    %1211 = vmatpush2.msra.mxu0 0.0
    %1212 = vmatprep.subr.mxu0 0.0
    %1213 = vmatpush2.msra.mxu0 0.0
    %1214 = vmatprep.subr.mxu0 0.0
    %1215 = vmatpush2.msra.mxu0 0.0
    %1216 = vmatprep.mubr.f32.mxu0 0.0
    %1217 = vmatmul.mubr.f32.gmra.mxu0 %v1150
    %v1218 = vpop.f32.mrf.mxu0
    %v1219 = vadd.f32 0.0, %v1218
    %v1220 = vpop.f32.mrf.mxu0
    %1221 = vdwg.mxu0
    %v1222 = vsel %vm283, %v1147, 0
    %1224 = vmatprep.subr.mxu0 0.0
    %1225 = vmatpush1.msra.mxu0 0.0
    %1226 = vmatprep.subr.mxu0 0.0
    %1227 = vmatpush1.msra.mxu0 0.0
    %1228 = vmatprep.subr.mxu0 0.0
    %1229 = vmatpush1.msra.mxu0 0.0
    %1230 = vmatprep.subr.mxu0 0.0
    %1231 = vmatpush1.msra.mxu0 0.0
    %1232 = vmatprep.subr.mxu0 0.0
    %1233 = vmatpush1.msra.mxu0 0.0
    %1234 = vmatprep.subr.mxu0 0.0
    %1235 = vmatpush1.msra.mxu0 0.0
    %1236 = vmatprep.subr.mxu0 0.0
    %1237 = vmatpush1.msra.mxu0 0.0
    %1238 = vmatprep.subr.mxu0 0.0
    %1239 = vmatpush1.msra.mxu0 0.0
    %1240 = vmatprep.subr.mxu0 0.0
    %1241 = vmatpush1.msra.mxu0 0.0
    %1242 = vmatprep.subr.mxu0 0.0
    %1243 = vmatpush1.msra.mxu0 0.0
    %1244 = vmatprep.subr.mxu0 0.0
    %1245 = vmatpush1.msra.mxu0 0.0
    %1246 = vmatprep.subr.mxu0 0.0
    %1247 = vmatpush1.msra.mxu0 0.0
    %1248 = vmatprep.subr.mxu0 0.0
    %1249 = vmatpush1.msra.mxu0 %v317
    %1250 = vmatprep.subr.mxu0 0.0
    %1251 = vmatpush1.msra.mxu0 %v316
    %1252 = vmatprep.subr.mxu0 0.0
    %1253 = vmatpush1.msra.mxu0 %v315
    %1254 = vmatprep.subr.mxu0 0.0
    %1255 = vmatpush1.msra.mxu0 %v314
    %1256 = vmatprep.subr.mxu0 0.0
    %1257 = vmatpush2.msra.mxu0 0.0
    %1258 = vmatprep.subr.mxu0 0.0
    %1259 = vmatpush2.msra.mxu0 0.0
    %1260 = vmatprep.subr.mxu0 0.0
    %1261 = vmatpush2.msra.mxu0 0.0
    %1262 = vmatprep.subr.mxu0 0.0
    %1263 = vmatpush2.msra.mxu0 0.0
    %1264 = vmatprep.subr.mxu0 0.0
    %1265 = vmatpush2.msra.mxu0 0.0
    %1266 = vmatprep.subr.mxu0 0.0
    %1267 = vmatpush2.msra.mxu0 0.0
    %1268 = vmatprep.subr.mxu0 0.0
    %1269 = vmatpush2.msra.mxu0 0.0
    %1270 = vmatprep.subr.mxu0 0.0
    %1271 = vmatpush2.msra.mxu0 0.0
    %1272 = vmatprep.subr.mxu0 0.0
    %1273 = vmatpush2.msra.mxu0 0.0
    %1274 = vmatprep.subr.mxu0 0.0
    %1275 = vmatpush2.msra.mxu0 0.0
    %1276 = vmatprep.subr.mxu0 0.0
    %1277 = vmatpush2.msra.mxu0 0.0
    %1278 = vmatprep.subr.mxu0 0.0
    %1279 = vmatpush2.msra.mxu0 0.0
    %1280 = vmatprep.subr.mxu0 0.0
    %1281 = vmatpush2.msra.mxu0 0.0
    %1282 = vmatprep.subr.mxu0 0.0
    %1283 = vmatpush2.msra.mxu0 0.0
    %1284 = vmatprep.subr.mxu0 0.0
    %1285 = vmatpush2.msra.mxu0 0.0
    %1286 = vmatprep.subr.mxu0 0.0
    %1287 = vmatpush2.msra.mxu0 0.0
    %1288 = vmatprep.mubr.f32.mxu0 0.0
    %1289 = vmatmul.mubr.f32.gmra.mxu0 %v1222
    %v1290 = vpop.f32.mrf.mxu0
    %v1291 = vadd.f32 0.0, %v1290
    %v1292 = vpop.f32.mrf.mxu0
    %1293 = vdwg.mxu0
    %v1294 = vld [vmem:[#allocation3 + $0x20] sm:$0xff]
    %v1295 = vadd.f32 %v1294, %v1219
    %v1296 = vadd.f32 %v1219, %v541
    %v1297 = vxor.u32 %v1295, 2147483648
    %v1298 = vmul.f32 %v1297, 1.442695
    %v1299 = vpow.pop %v1298
    %v1300 = vadd.f32 %v1299, 1.0
    %v1301 = vrcp.pop %v1300
    %v1302 = vmul.f32 1.0, %v1301
    %1304 = vrot.lane.b32.xlu0 %v1296, 64
    %v1305 = vpop.permute.xlu0 %1304
    %v1307 = vmul.f32 %v1302, %v1305
    %1309 = vrot.lane.b32.xlu0 %v1307, 64
    %v1310 = vpop.permute.xlu0 %1309
    %v1312 = vadd.f32 %v1294, %v1310
    %v1313 = vtanh.pop %v1312
    %v1314 = vld [vmem:[%s1117] sm:$0xff]
    %1316 = vrot.lane.b32.xlu0 %v1313, 96
    %v1317 = vpop.permute.xlu0 %1316
    %v1319 = vsub.f32 %v1091, %v1317
    %v1320 = vmul.f32 %v1302, %v1319
    %1322 = vrot.lane.b32.xlu0 %v1320, 32
    %v1323 = vpop.permute.xlu0 %1322
    %v1325 = vadd.f32 %v1313, %v1323
    %1326 = vrot.lane.b32.xlu0 %v1091, 32
    %v1327 = vpop.permute.xlu0 %1326
    %v1329 = vsub.f32 %v1325, %v1327
    %1331 = vset.pattern.permute.xlu0 0
    %1332 = vperm.xlu0 %1331, %v1314
    %v1333 = vpop.permute.xlu0 %1332
    %v1335 = vmul.f32 %v1333, %v1329
    %1337 = vrot.lane.b32.xlu0 %v1335, 96
    %v1338 = vpop.permute.xlu0 %1337
    %v1340 = vadd.f32 %v1091, %v1338
    %1342 = vrot.lane.b32.xlu0 %v1340, 96
    %v1343 = vpop.permute.xlu0 %1342
    %1345 = vst.msk [vmem:[#allocation2 + $0x20] sm:$0xff] %vm283, %v1343
    %v1346 = vld [vmem:[%s300 + $0x18] sm:$0xff]
    %v1347 = vadd.f32 %v1346, %v1291
    %v1348 = vadd.f32 %v1291, %v597
    %v1349 = vxor.u32 %v1347, 2147483648
    %v1350 = vmul.f32 %v1349, 1.442695
    %v1351 = vpow.pop %v1350
    %v1352 = vadd.f32 %v1351, 1.0
    %v1353 = vrcp.pop %v1352
    %v1354 = vmul.f32 1.0, %v1353
    %1356 = vrot.lane.b32.xlu0 %v1348, 64
    %v1357 = vpop.permute.xlu0 %1356
    %v1359 = vmul.f32 %v1354, %v1357
    %1361 = vrot.lane.b32.xlu0 %v1359, 64
    %v1362 = vpop.permute.xlu0 %1361
    %v1364 = vadd.f32 %v1346, %v1362
    %v1365 = vtanh.pop %v1364
    %v1366 = vld [vmem:[%s1064] sm:$0xff]
    %1368 = vrot.lane.b32.xlu0 %v1365, 96
    %v1369 = vpop.permute.xlu0 %1368
    %v1371 = vsub.f32 %v1144, %v1369
    %v1372 = vmul.f32 %v1354, %v1371
    %1374 = vrot.lane.b32.xlu0 %v1372, 32
    %v1375 = vpop.permute.xlu0 %1374
    %v1377 = vadd.f32 %v1365, %v1375
    %1378 = vrot.lane.b32.xlu0 %v1144, 32
    %v1379 = vpop.permute.xlu0 %1378
    %v1381 = vsub.f32 %v1377, %v1379
    %1383 = vset.pattern.permute.xlu0 0
    %1384 = vperm.xlu0 %1383, %v1366
    %v1385 = vpop.permute.xlu0 %1384
    %v1387 = vmul.f32 %v1385, %v1381
    %1389 = vrot.lane.b32.xlu0 %v1387, 96
    %v1390 = vpop.permute.xlu0 %1389
    %v1392 = vadd.f32 %v1144, %v1390
    %1394 = vrot.lane.b32.xlu0 %v1392, 96
    %v1395 = vpop.permute.xlu0 %1394
    %1397 = vst.msk [vmem:[%s392 + $0x18] sm:$0xff] %vm283, %v1395
    %v1398 = vsel %vm283, %v1343, 0
    %1400 = vmatprep.subr.mxu0 0.0
    %1401 = vmatpush1.msra.mxu0 0.0
    %1402 = vmatprep.subr.mxu0 0.0
    %1403 = vmatpush1.msra.mxu0 0.0
    %1404 = vmatprep.subr.mxu0 0.0
    %1405 = vmatpush1.msra.mxu0 0.0
    %1406 = vmatprep.subr.mxu0 0.0
    %1407 = vmatpush1.msra.mxu0 0.0
    %1408 = vmatprep.subr.mxu0 0.0
    %1409 = vmatpush1.msra.mxu0 0.0
    %1410 = vmatprep.subr.mxu0 0.0
    %1411 = vmatpush1.msra.mxu0 0.0
    %1412 = vmatprep.subr.mxu0 0.0
    %1413 = vmatpush1.msra.mxu0 0.0
    %1414 = vmatprep.subr.mxu0 0.0
    %1415 = vmatpush1.msra.mxu0 0.0
    %1416 = vmatprep.subr.mxu0 0.0
    %1417 = vmatpush1.msra.mxu0 0.0
    %1418 = vmatprep.subr.mxu0 0.0
    %1419 = vmatpush1.msra.mxu0 0.0
    %1420 = vmatprep.subr.mxu0 0.0
    %1421 = vmatpush1.msra.mxu0 0.0
    %1422 = vmatprep.subr.mxu0 0.0
    %1423 = vmatpush1.msra.mxu0 0.0
    %1424 = vmatprep.subr.mxu0 0.0
    %1425 = vmatpush1.msra.mxu0 %v312
    %1426 = vmatprep.subr.mxu0 0.0
    %1427 = vmatpush1.msra.mxu0 %v311
    %1428 = vmatprep.subr.mxu0 0.0
    %1429 = vmatpush1.msra.mxu0 %v310
    %1430 = vmatprep.subr.mxu0 0.0
    %1431 = vmatpush1.msra.mxu0 %v309
    %1432 = vmatprep.subr.mxu0 0.0
    %1433 = vmatpush2.msra.mxu0 0.0
    %1434 = vmatprep.subr.mxu0 0.0
    %1435 = vmatpush2.msra.mxu0 0.0
    %1436 = vmatprep.subr.mxu0 0.0
    %1437 = vmatpush2.msra.mxu0 0.0
    %1438 = vmatprep.subr.mxu0 0.0
    %1439 = vmatpush2.msra.mxu0 0.0
    %1440 = vmatprep.subr.mxu0 0.0
    %1441 = vmatpush2.msra.mxu0 0.0
    %1442 = vmatprep.subr.mxu0 0.0
    %1443 = vmatpush2.msra.mxu0 0.0
    %1444 = vmatprep.subr.mxu0 0.0
    %1445 = vmatpush2.msra.mxu0 0.0
    %1446 = vmatprep.subr.mxu0 0.0
    %1447 = vmatpush2.msra.mxu0 0.0
    %1448 = vmatprep.subr.mxu0 0.0
    %1449 = vmatpush2.msra.mxu0 0.0
    %1450 = vmatprep.subr.mxu0 0.0
    %1451 = vmatpush2.msra.mxu0 0.0
    %1452 = vmatprep.subr.mxu0 0.0
    %1453 = vmatpush2.msra.mxu0 0.0
    %1454 = vmatprep.subr.mxu0 0.0
    %1455 = vmatpush2.msra.mxu0 0.0
    %1456 = vmatprep.subr.mxu0 0.0
    %1457 = vmatpush2.msra.mxu0 0.0
    %1458 = vmatprep.subr.mxu0 0.0
    %1459 = vmatpush2.msra.mxu0 0.0
    %1460 = vmatprep.subr.mxu0 0.0
    %1461 = vmatpush2.msra.mxu0 0.0
    %1462 = vmatprep.subr.mxu0 0.0
    %1463 = vmatpush2.msra.mxu0 0.0
    %1464 = vmatprep.mubr.f32.mxu0 0.0
    %1465 = vmatmul.mubr.f32.gmra.mxu0 %v1398
    %v1466 = vpop.f32.mrf.mxu0
    %v1467 = vadd.f32 0.0, %v1466
    %v1468 = vpop.f32.mrf.mxu0
    %1469 = vdwg.mxu0
    %v1470 = vsel %vm283, %v1395, 0
    %1472 = vmatprep.subr.mxu0 0.0
    %1473 = vmatpush1.msra.mxu0 0.0
    %1474 = vmatprep.subr.mxu0 0.0
    %1475 = vmatpush1.msra.mxu0 0.0
    %1476 = vmatprep.subr.mxu0 0.0
    %1477 = vmatpush1.msra.mxu0 0.0
    %1478 = vmatprep.subr.mxu0 0.0
    %1479 = vmatpush1.msra.mxu0 0.0
    %1480 = vmatprep.subr.mxu0 0.0
    %1481 = vmatpush1.msra.mxu0 0.0
    %1482 = vmatprep.subr.mxu0 0.0
    %1483 = vmatpush1.msra.mxu0 0.0
    %1484 = vmatprep.subr.mxu0 0.0
    %1485 = vmatpush1.msra.mxu0 0.0
    %1486 = vmatprep.subr.mxu0 0.0
    %1487 = vmatpush1.msra.mxu0 0.0
    %1488 = vmatprep.subr.mxu0 0.0
    %1489 = vmatpush1.msra.mxu0 0.0
    %1490 = vmatprep.subr.mxu0 0.0
    %1491 = vmatpush1.msra.mxu0 0.0
    %1492 = vmatprep.subr.mxu0 0.0
    %1493 = vmatpush1.msra.mxu0 0.0
    %1494 = vmatprep.subr.mxu0 0.0
    %1495 = vmatpush1.msra.mxu0 0.0
    %1496 = vmatprep.subr.mxu0 0.0
    %1497 = vmatpush1.msra.mxu0 %v317
    %1498 = vmatprep.subr.mxu0 0.0
    %1499 = vmatpush1.msra.mxu0 %v316
    %1500 = vmatprep.subr.mxu0 0.0
    %1501 = vmatpush1.msra.mxu0 %v315
    %1502 = vmatprep.subr.mxu0 0.0
    %1503 = vmatpush1.msra.mxu0 %v314
    %1504 = vmatprep.subr.mxu0 0.0
    %1505 = vmatpush2.msra.mxu0 0.0
    %1506 = vmatprep.subr.mxu0 0.0
    %1507 = vmatpush2.msra.mxu0 0.0
    %1508 = vmatprep.subr.mxu0 0.0
    %1509 = vmatpush2.msra.mxu0 0.0
    %1510 = vmatprep.subr.mxu0 0.0
    %1511 = vmatpush2.msra.mxu0 0.0
    %1512 = vmatprep.subr.mxu0 0.0
    %1513 = vmatpush2.msra.mxu0 0.0
    %1514 = vmatprep.subr.mxu0 0.0
    %1515 = vmatpush2.msra.mxu0 0.0
    %1516 = vmatprep.subr.mxu0 0.0
    %1517 = vmatpush2.msra.mxu0 0.0
    %1518 = vmatprep.subr.mxu0 0.0
    %1519 = vmatpush2.msra.mxu0 0.0
    %1520 = vmatprep.subr.mxu0 0.0
    %1521 = vmatpush2.msra.mxu0 0.0
    %1522 = vmatprep.subr.mxu0 0.0
    %1523 = vmatpush2.msra.mxu0 0.0
    %1524 = vmatprep.subr.mxu0 0.0
    %1525 = vmatpush2.msra.mxu0 0.0
    %1526 = vmatprep.subr.mxu0 0.0
    %1527 = vmatpush2.msra.mxu0 0.0
    %1528 = vmatprep.subr.mxu0 0.0
    %1529 = vmatpush2.msra.mxu0 0.0
    %1530 = vmatprep.subr.mxu0 0.0
    %1531 = vmatpush2.msra.mxu0 0.0
    %1532 = vmatprep.subr.mxu0 0.0
    %1533 = vmatpush2.msra.mxu0 0.0
    %1534 = vmatprep.subr.mxu0 0.0
    %1535 = vmatpush2.msra.mxu0 0.0
    %1536 = vmatprep.mubr.f32.mxu0 0.0
    %1537 = vmatmul.mubr.f32.gmra.mxu0 %v1470
    %v1538 = vpop.f32.mrf.mxu0
    %v1539 = vadd.f32 0.0, %v1538
    %v1540 = vpop.f32.mrf.mxu0
    %1541 = vdwg.mxu0
    %v1542 = vld [vmem:[#allocation3 + $0x28] sm:$0xff]
    %v1543 = vadd.f32 %v1542, %v1467
    %v1544 = vadd.f32 %v1467, %v541
    %v1545 = vxor.u32 %v1543, 2147483648
    %v1546 = vmul.f32 %v1545, 1.442695
    %v1547 = vpow.pop %v1546
    %v1548 = vadd.f32 %v1547, 1.0
    %v1549 = vrcp.pop %v1548
    %v1550 = vmul.f32 1.0, %v1549
    %1552 = vrot.lane.b32.xlu0 %v1544, 64
    %v1553 = vpop.permute.xlu0 %1552
    %v1555 = vmul.f32 %v1550, %v1553
    %1557 = vrot.lane.b32.xlu0 %v1555, 64
    %v1558 = vpop.permute.xlu0 %1557
    %v1560 = vadd.f32 %v1542, %v1558
    %v1561 = vtanh.pop %v1560
    %v1562 = vld [vmem:[%s867] sm:$0xff]
    %1564 = vrot.lane.b32.xlu0 %v1561, 96
    %v1565 = vpop.permute.xlu0 %1564
    %v1567 = vsub.f32 %v1340, %v1565
    %v1568 = vmul.f32 %v1550, %v1567
    %1570 = vrot.lane.b32.xlu0 %v1568, 32
    %v1571 = vpop.permute.xlu0 %1570
    %v1573 = vadd.f32 %v1561, %v1571
    %1574 = vrot.lane.b32.xlu0 %v1340, 32
    %v1575 = vpop.permute.xlu0 %1574
    %v1577 = vsub.f32 %v1573, %v1575
    %1579 = vset.pattern.permute.xlu0 0
    %1580 = vperm.xlu0 %1579, %v1562
    %v1581 = vpop.permute.xlu0 %1580
    %v1583 = vmul.f32 %v1581, %v1577
    %1585 = vrot.lane.b32.xlu0 %v1583, 96
    %v1586 = vpop.permute.xlu0 %1585
    %v1588 = vadd.f32 %v1340, %v1586
    %1590 = vrot.lane.b32.xlu0 %v1588, 96
    %v1591 = vpop.permute.xlu0 %1590
    %1593 = vst.msk [vmem:[#allocation2 + $0x28] sm:$0xff] %vm283, %v1591
    %v1594 = vld [vmem:[%s300 + $0x10] sm:$0xff]
    %v1595 = vadd.f32 %v1594, %v1539
    %v1596 = vadd.f32 %v1539, %v597
    %v1597 = vxor.u32 %v1595, 2147483648
    %v1598 = vmul.f32 %v1597, 1.442695
    %v1599 = vpow.pop %v1598
    %v1600 = vadd.f32 %v1599, 1.0
    %v1601 = vrcp.pop %v1600
    %v1602 = vmul.f32 1.0, %v1601
    %1604 = vrot.lane.b32.xlu0 %v1596, 64
    %v1605 = vpop.permute.xlu0 %1604
    %v1607 = vmul.f32 %v1602, %v1605
    %1609 = vrot.lane.b32.xlu0 %v1607, 64
    %v1610 = vpop.permute.xlu0 %1609
    %v1612 = vadd.f32 %v1594, %v1610
    %v1613 = vtanh.pop %v1612
    %v1614 = vld [vmem:[%s814] sm:$0xff]
    %1616 = vrot.lane.b32.xlu0 %v1613, 96
    %v1617 = vpop.permute.xlu0 %1616
    %v1619 = vsub.f32 %v1392, %v1617
    %v1620 = vmul.f32 %v1602, %v1619
    %1622 = vrot.lane.b32.xlu0 %v1620, 32
    %v1623 = vpop.permute.xlu0 %1622
    %v1625 = vadd.f32 %v1613, %v1623
    %1626 = vrot.lane.b32.xlu0 %v1392, 32
    %v1627 = vpop.permute.xlu0 %1626
    %v1629 = vsub.f32 %v1625, %v1627
    %1631 = vset.pattern.permute.xlu0 0
    %1632 = vperm.xlu0 %1631, %v1614
    %v1633 = vpop.permute.xlu0 %1632
    %v1635 = vmul.f32 %v1633, %v1629
    %1637 = vrot.lane.b32.xlu0 %v1635, 96
    %v1638 = vpop.permute.xlu0 %1637
    %v1640 = vadd.f32 %v1392, %v1638
    %1642 = vrot.lane.b32.xlu0 %v1640, 96
    %v1643 = vpop.permute.xlu0 %1642
    %1645 = vst.msk [vmem:[%s392 + $0x10] sm:$0xff] %vm283, %v1643
    %v1646 = vsel %vm283, %v1591, 0
    %1648 = vmatprep.subr.mxu0 0.0
    %1649 = vmatpush1.msra.mxu0 0.0
    %1650 = vmatprep.subr.mxu0 0.0
    %1651 = vmatpush1.msra.mxu0 0.0
    %1652 = vmatprep.subr.mxu0 0.0
    %1653 = vmatpush1.msra.mxu0 0.0
    %1654 = vmatprep.subr.mxu0 0.0
    %1655 = vmatpush1.msra.mxu0 0.0
    %1656 = vmatprep.subr.mxu0 0.0
    %1657 = vmatpush1.msra.mxu0 0.0
    %1658 = vmatprep.subr.mxu0 0.0
    %1659 = vmatpush1.msra.mxu0 0.0
    %1660 = vmatprep.subr.mxu0 0.0
    %1661 = vmatpush1.msra.mxu0 0.0
    %1662 = vmatprep.subr.mxu0 0.0
    %1663 = vmatpush1.msra.mxu0 0.0
    %1664 = vmatprep.subr.mxu0 0.0
    %1665 = vmatpush1.msra.mxu0 0.0
    %1666 = vmatprep.subr.mxu0 0.0
    %1667 = vmatpush1.msra.mxu0 0.0
    %1668 = vmatprep.subr.mxu0 0.0
    %1669 = vmatpush1.msra.mxu0 0.0
    %1670 = vmatprep.subr.mxu0 0.0
    %1671 = vmatpush1.msra.mxu0 0.0
    %1672 = vmatprep.subr.mxu0 0.0
    %1673 = vmatpush1.msra.mxu0 %v312
    %1674 = vmatprep.subr.mxu0 0.0
    %1675 = vmatpush1.msra.mxu0 %v311
    %1676 = vmatprep.subr.mxu0 0.0
    %1677 = vmatpush1.msra.mxu0 %v310
    %1678 = vmatprep.subr.mxu0 0.0
    %1679 = vmatpush1.msra.mxu0 %v309
    %1680 = vmatprep.subr.mxu0 0.0
    %1681 = vmatpush2.msra.mxu0 0.0
    %1682 = vmatprep.subr.mxu0 0.0
    %1683 = vmatpush2.msra.mxu0 0.0
    %1684 = vmatprep.subr.mxu0 0.0
    %1685 = vmatpush2.msra.mxu0 0.0
    %1686 = vmatprep.subr.mxu0 0.0
    %1687 = vmatpush2.msra.mxu0 0.0
    %1688 = vmatprep.subr.mxu0 0.0
    %1689 = vmatpush2.msra.mxu0 0.0
    %1690 = vmatprep.subr.mxu0 0.0
    %1691 = vmatpush2.msra.mxu0 0.0
    %1692 = vmatprep.subr.mxu0 0.0
    %1693 = vmatpush2.msra.mxu0 0.0
    %1694 = vmatprep.subr.mxu0 0.0
    %1695 = vmatpush2.msra.mxu0 0.0
    %1696 = vmatprep.subr.mxu0 0.0
    %1697 = vmatpush2.msra.mxu0 0.0
    %1698 = vmatprep.subr.mxu0 0.0
    %1699 = vmatpush2.msra.mxu0 0.0
    %1700 = vmatprep.subr.mxu0 0.0
    %1701 = vmatpush2.msra.mxu0 0.0
    %1702 = vmatprep.subr.mxu0 0.0
    %1703 = vmatpush2.msra.mxu0 0.0
    %1704 = vmatprep.subr.mxu0 0.0
    %1705 = vmatpush2.msra.mxu0 0.0
    %1706 = vmatprep.subr.mxu0 0.0
    %1707 = vmatpush2.msra.mxu0 0.0
    %1708 = vmatprep.subr.mxu0 0.0
    %1709 = vmatpush2.msra.mxu0 0.0
    %1710 = vmatprep.subr.mxu0 0.0
    %1711 = vmatpush2.msra.mxu0 0.0
    %1712 = vmatprep.mubr.f32.mxu0 0.0
    %1713 = vmatmul.mubr.f32.gmra.mxu0 %v1646
    %v1714 = vpop.f32.mrf.mxu0
    %v1715 = vadd.f32 0.0, %v1714
    %v1716 = vpop.f32.mrf.mxu0
    %1717 = vdwg.mxu0
    %v1718 = vsel %vm283, %v1643, 0
    %1720 = vmatprep.subr.mxu0 0.0
    %1721 = vmatpush1.msra.mxu0 0.0
    %1722 = vmatprep.subr.mxu0 0.0
    %1723 = vmatpush1.msra.mxu0 0.0
    %1724 = vmatprep.subr.mxu0 0.0
    %1725 = vmatpush1.msra.mxu0 0.0
    %1726 = vmatprep.subr.mxu0 0.0
    %1727 = vmatpush1.msra.mxu0 0.0
    %1728 = vmatprep.subr.mxu0 0.0
    %1729 = vmatpush1.msra.mxu0 0.0
    %1730 = vmatprep.subr.mxu0 0.0
    %1731 = vmatpush1.msra.mxu0 0.0
    %1732 = vmatprep.subr.mxu0 0.0
    %1733 = vmatpush1.msra.mxu0 0.0
    %1734 = vmatprep.subr.mxu0 0.0
    %1735 = vmatpush1.msra.mxu0 0.0
    %1736 = vmatprep.subr.mxu0 0.0
    %1737 = vmatpush1.msra.mxu0 0.0
    %1738 = vmatprep.subr.mxu0 0.0
    %1739 = vmatpush1.msra.mxu0 0.0
    %1740 = vmatprep.subr.mxu0 0.0
    %1741 = vmatpush1.msra.mxu0 0.0
    %1742 = vmatprep.subr.mxu0 0.0
    %1743 = vmatpush1.msra.mxu0 0.0
    %1744 = vmatprep.subr.mxu0 0.0
    %1745 = vmatpush1.msra.mxu0 %v317
    %1746 = vmatprep.subr.mxu0 0.0
    %1747 = vmatpush1.msra.mxu0 %v316
    %1748 = vmatprep.subr.mxu0 0.0
    %1749 = vmatpush1.msra.mxu0 %v315
    %1750 = vmatprep.subr.mxu0 0.0
    %1751 = vmatpush1.msra.mxu0 %v314
    %1752 = vmatprep.subr.mxu0 0.0
    %1753 = vmatpush2.msra.mxu0 0.0
    %1754 = vmatprep.subr.mxu0 0.0
    %1755 = vmatpush2.msra.mxu0 0.0
    %1756 = vmatprep.subr.mxu0 0.0
    %1757 = vmatpush2.msra.mxu0 0.0
    %1758 = vmatprep.subr.mxu0 0.0
    %1759 = vmatpush2.msra.mxu0 0.0
    %1760 = vmatprep.subr.mxu0 0.0
    %1761 = vmatpush2.msra.mxu0 0.0
    %1762 = vmatprep.subr.mxu0 0.0
    %1763 = vmatpush2.msra.mxu0 0.0
    %1764 = vmatprep.subr.mxu0 0.0
    %1765 = vmatpush2.msra.mxu0 0.0
    %1766 = vmatprep.subr.mxu0 0.0
    %1767 = vmatpush2.msra.mxu0 0.0
    %1768 = vmatprep.subr.mxu0 0.0
    %1769 = vmatpush2.msra.mxu0 0.0
    %1770 = vmatprep.subr.mxu0 0.0
    %1771 = vmatpush2.msra.mxu0 0.0
    %1772 = vmatprep.subr.mxu0 0.0
    %1773 = vmatpush2.msra.mxu0 0.0
    %1774 = vmatprep.subr.mxu0 0.0
    %1775 = vmatpush2.msra.mxu0 0.0
    %1776 = vmatprep.subr.mxu0 0.0
    %1777 = vmatpush2.msra.mxu0 0.0
    %1778 = vmatprep.subr.mxu0 0.0
    %1779 = vmatpush2.msra.mxu0 0.0
    %1780 = vmatprep.subr.mxu0 0.0
    %1781 = vmatpush2.msra.mxu0 0.0
    %1782 = vmatprep.subr.mxu0 0.0
    %1783 = vmatpush2.msra.mxu0 0.0
    %1784 = vmatprep.mubr.f32.mxu0 0.0
    %1785 = vmatmul.mubr.f32.gmra.mxu0 %v1718
    %v1786 = vpop.f32.mrf.mxu0
    %v1787 = vadd.f32 0.0, %v1786
    %v1788 = vpop.f32.mrf.mxu0
    %1789 = vdwg.mxu0
    %v1790 = vld [vmem:[#allocation3 + $0x30] sm:$0xff]
    %v1791 = vadd.f32 %v1790, %v1715
    %v1792 = vadd.f32 %v1715, %v541
    %v1793 = vxor.u32 %v1791, 2147483648
    %v1794 = vmul.f32 %v1793, 1.442695
    %v1795 = vpow.pop %v1794
    %v1796 = vadd.f32 %v1795, 1.0
    %v1797 = vrcp.pop %v1796
    %v1798 = vmul.f32 1.0, %v1797
    %1800 = vrot.lane.b32.xlu0 %v1792, 64
    %v1801 = vpop.permute.xlu0 %1800
    %v1803 = vmul.f32 %v1798, %v1801
    %1805 = vrot.lane.b32.xlu0 %v1803, 64
    %v1806 = vpop.permute.xlu0 %1805
    %v1808 = vadd.f32 %v1790, %v1806
    %v1809 = vtanh.pop %v1808
    %v1810 = vld [vmem:[%s617] sm:$0xff]
    %1812 = vrot.lane.b32.xlu0 %v1809, 96
    %v1813 = vpop.permute.xlu0 %1812
    %v1815 = vsub.f32 %v1588, %v1813
    %v1816 = vmul.f32 %v1798, %v1815
    %1818 = vrot.lane.b32.xlu0 %v1816, 32
    %v1819 = vpop.permute.xlu0 %1818
    %v1821 = vadd.f32 %v1809, %v1819
    %1822 = vrot.lane.b32.xlu0 %v1588, 32
    %v1823 = vpop.permute.xlu0 %1822
    %v1825 = vsub.f32 %v1821, %v1823
    %1827 = vset.pattern.permute.xlu0 0
    %1828 = vperm.xlu0 %1827, %v1810
    %v1829 = vpop.permute.xlu0 %1828
    %v1831 = vmul.f32 %v1829, %v1825
    %1833 = vrot.lane.b32.xlu0 %v1831, 96
    %v1834 = vpop.permute.xlu0 %1833
    %v1836 = vadd.f32 %v1588, %v1834
    %1838 = vrot.lane.b32.xlu0 %v1836, 96
    %v1839 = vpop.permute.xlu0 %1838
    %1841 = vst.msk [vmem:[#allocation2 + $0x30] sm:$0xff] %vm283, %v1839
    %v1842 = vld [vmem:[%s300 + $0x8] sm:$0xff]
    %v1843 = vadd.f32 %v1842, %v1787
    %v1844 = vadd.f32 %v1787, %v597
    %v1845 = vxor.u32 %v1843, 2147483648
    %v1846 = vmul.f32 %v1845, 1.442695
    %v1847 = vpow.pop %v1846
    %v1848 = vadd.f32 %v1847, 1.0
    %v1849 = vrcp.pop %v1848
    %v1850 = vmul.f32 1.0, %v1849
    %1852 = vrot.lane.b32.xlu0 %v1844, 64
    %v1853 = vpop.permute.xlu0 %1852
    %v1855 = vmul.f32 %v1850, %v1853
    %1857 = vrot.lane.b32.xlu0 %v1855, 64
    %v1858 = vpop.permute.xlu0 %1857
    %v1860 = vadd.f32 %v1842, %v1858
    %v1861 = vtanh.pop %v1860
    %v1862 = vld [vmem:[%s561] sm:$0xff]
    %1864 = vrot.lane.b32.xlu0 %v1861, 96
    %v1865 = vpop.permute.xlu0 %1864
    %v1867 = vsub.f32 %v1640, %v1865
    %v1868 = vmul.f32 %v1850, %v1867
    %1870 = vrot.lane.b32.xlu0 %v1868, 32
    %v1871 = vpop.permute.xlu0 %1870
    %v1873 = vadd.f32 %v1861, %v1871
    %1874 = vrot.lane.b32.xlu0 %v1640, 32
    %v1875 = vpop.permute.xlu0 %1874
    %v1877 = vsub.f32 %v1873, %v1875
    %1879 = vset.pattern.permute.xlu0 0
    %1880 = vperm.xlu0 %1879, %v1862
    %v1881 = vpop.permute.xlu0 %1880
    %v1883 = vmul.f32 %v1881, %v1877
    %1885 = vrot.lane.b32.xlu0 %v1883, 96
    %v1886 = vpop.permute.xlu0 %1885
    %v1888 = vadd.f32 %v1640, %v1886
    %1890 = vrot.lane.b32.xlu0 %v1888, 96
    %v1891 = vpop.permute.xlu0 %1890
    %1893 = vst.msk [vmem:[%s392 + $0x8] sm:$0xff] %vm283, %v1891
    %v1894 = vsel %vm283, %v1839, 0
    %1896 = vmatprep.subr.mxu0 0.0
    %1897 = vmatpush1.msra.mxu0 0.0
    %1898 = vmatprep.subr.mxu0 0.0
    %1899 = vmatpush1.msra.mxu0 0.0
    %1900 = vmatprep.subr.mxu0 0.0
    %1901 = vmatpush1.msra.mxu0 0.0
    %1902 = vmatprep.subr.mxu0 0.0
    %1903 = vmatpush1.msra.mxu0 0.0
    %1904 = vmatprep.subr.mxu0 0.0
    %1905 = vmatpush1.msra.mxu0 0.0
    %1906 = vmatprep.subr.mxu0 0.0
    %1907 = vmatpush1.msra.mxu0 0.0
    %1908 = vmatprep.subr.mxu0 0.0
    %1909 = vmatpush1.msra.mxu0 0.0
    %1910 = vmatprep.subr.mxu0 0.0
    %1911 = vmatpush1.msra.mxu0 0.0
    %1912 = vmatprep.subr.mxu0 0.0
    %1913 = vmatpush1.msra.mxu0 0.0
    %1914 = vmatprep.subr.mxu0 0.0
    %1915 = vmatpush1.msra.mxu0 0.0
    %1916 = vmatprep.subr.mxu0 0.0
    %1917 = vmatpush1.msra.mxu0 0.0
    %1918 = vmatprep.subr.mxu0 0.0
    %1919 = vmatpush1.msra.mxu0 0.0
    %1920 = vmatprep.subr.mxu0 0.0
    %1921 = vmatpush1.msra.mxu0 %v312
    %1922 = vmatprep.subr.mxu0 0.0
    %1923 = vmatpush1.msra.mxu0 %v311
    %1924 = vmatprep.subr.mxu0 0.0
    %1925 = vmatpush1.msra.mxu0 %v310
    %1926 = vmatprep.subr.mxu0 0.0
    %1927 = vmatpush1.msra.mxu0 %v309
    %1928 = vmatprep.subr.mxu0 0.0
    %1929 = vmatpush2.msra.mxu0 0.0
    %1930 = vmatprep.subr.mxu0 0.0
    %1931 = vmatpush2.msra.mxu0 0.0
    %1932 = vmatprep.subr.mxu0 0.0
    %1933 = vmatpush2.msra.mxu0 0.0
    %1934 = vmatprep.subr.mxu0 0.0
    %1935 = vmatpush2.msra.mxu0 0.0
    %1936 = vmatprep.subr.mxu0 0.0
    %1937 = vmatpush2.msra.mxu0 0.0
    %1938 = vmatprep.subr.mxu0 0.0
    %1939 = vmatpush2.msra.mxu0 0.0
    %1940 = vmatprep.subr.mxu0 0.0
    %1941 = vmatpush2.msra.mxu0 0.0
    %1942 = vmatprep.subr.mxu0 0.0
    %1943 = vmatpush2.msra.mxu0 0.0
    %1944 = vmatprep.subr.mxu0 0.0
    %1945 = vmatpush2.msra.mxu0 0.0
    %1946 = vmatprep.subr.mxu0 0.0
    %1947 = vmatpush2.msra.mxu0 0.0
    %1948 = vmatprep.subr.mxu0 0.0
    %1949 = vmatpush2.msra.mxu0 0.0
    %1950 = vmatprep.subr.mxu0 0.0
    %1951 = vmatpush2.msra.mxu0 0.0
    %1952 = vmatprep.subr.mxu0 0.0
    %1953 = vmatpush2.msra.mxu0 0.0
    %1954 = vmatprep.subr.mxu0 0.0
    %1955 = vmatpush2.msra.mxu0 0.0
    %1956 = vmatprep.subr.mxu0 0.0
    %1957 = vmatpush2.msra.mxu0 0.0
    %1958 = vmatprep.subr.mxu0 0.0
    %1959 = vmatpush2.msra.mxu0 0.0
    %1960 = vmatprep.mubr.f32.mxu0 0.0
    %1961 = vmatmul.mubr.f32.gmra.mxu0 %v1894
    %v1962 = vpop.f32.mrf.mxu0
    %v1963 = vadd.f32 0.0, %v1962
    %v1964 = vpop.f32.mrf.mxu0
    %1965 = vdwg.mxu0
    %v1966 = vsel %vm283, %v1891, 0
    %1968 = vmatprep.subr.mxu0 0.0
    %1969 = vmatpush1.msra.mxu0 0.0
    %1970 = vmatprep.subr.mxu0 0.0
    %1971 = vmatpush1.msra.mxu0 0.0
    %1972 = vmatprep.subr.mxu0 0.0
    %1973 = vmatpush1.msra.mxu0 0.0
    %1974 = vmatprep.subr.mxu0 0.0
    %1975 = vmatpush1.msra.mxu0 0.0
    %1976 = vmatprep.subr.mxu0 0.0
    %1977 = vmatpush1.msra.mxu0 0.0
    %1978 = vmatprep.subr.mxu0 0.0
    %1979 = vmatpush1.msra.mxu0 0.0
    %1980 = vmatprep.subr.mxu0 0.0
    %1981 = vmatpush1.msra.mxu0 0.0
    %1982 = vmatprep.subr.mxu0 0.0
    %1983 = vmatpush1.msra.mxu0 0.0
    %1984 = vmatprep.subr.mxu0 0.0
    %1985 = vmatpush1.msra.mxu0 0.0
    %1986 = vmatprep.subr.mxu0 0.0
    %1987 = vmatpush1.msra.mxu0 0.0
    %1988 = vmatprep.subr.mxu0 0.0
    %1989 = vmatpush1.msra.mxu0 0.0
    %1990 = vmatprep.subr.mxu0 0.0
    %1991 = vmatpush1.msra.mxu0 0.0
    %1992 = vmatprep.subr.mxu0 0.0
    %1993 = vmatpush1.msra.mxu0 %v317
    %1994 = vmatprep.subr.mxu0 0.0
    %1995 = vmatpush1.msra.mxu0 %v316
    %1996 = vmatprep.subr.mxu0 0.0
    %1997 = vmatpush1.msra.mxu0 %v315
    %1998 = vmatprep.subr.mxu0 0.0
    %1999 = vmatpush1.msra.mxu0 %v314
    %2000 = vmatprep.subr.mxu0 0.0
    %2001 = vmatpush2.msra.mxu0 0.0
    %2002 = vmatprep.subr.mxu0 0.0
    %2003 = vmatpush2.msra.mxu0 0.0
    %2004 = vmatprep.subr.mxu0 0.0
    %2005 = vmatpush2.msra.mxu0 0.0
    %2006 = vmatprep.subr.mxu0 0.0
    %2007 = vmatpush2.msra.mxu0 0.0
    %2008 = vmatprep.subr.mxu0 0.0
    %2009 = vmatpush2.msra.mxu0 0.0
    %2010 = vmatprep.subr.mxu0 0.0
    %2011 = vmatpush2.msra.mxu0 0.0
    %2012 = vmatprep.subr.mxu0 0.0
    %2013 = vmatpush2.msra.mxu0 0.0
    %2014 = vmatprep.subr.mxu0 0.0
    %2015 = vmatpush2.msra.mxu0 0.0
    %2016 = vmatprep.subr.mxu0 0.0
    %2017 = vmatpush2.msra.mxu0 0.0
    %2018 = vmatprep.subr.mxu0 0.0
    %2019 = vmatpush2.msra.mxu0 0.0
    %2020 = vmatprep.subr.mxu0 0.0
    %2021 = vmatpush2.msra.mxu0 0.0
    %2022 = vmatprep.subr.mxu0 0.0
    %2023 = vmatpush2.msra.mxu0 0.0
    %2024 = vmatprep.subr.mxu0 0.0
    %2025 = vmatpush2.msra.mxu0 0.0
    %2026 = vmatprep.subr.mxu0 0.0
    %2027 = vmatpush2.msra.mxu0 0.0
    %2028 = vmatprep.subr.mxu0 0.0
    %2029 = vmatpush2.msra.mxu0 0.0
    %2030 = vmatprep.subr.mxu0 0.0
    %2031 = vmatpush2.msra.mxu0 0.0
    %2032 = vmatprep.mubr.f32.mxu0 0.0
    %2033 = vmatmul.mubr.f32.gmra.mxu0 %v1966
    %v2034 = vpop.f32.mrf.mxu0
    %v2035 = vadd.f32 0.0, %v2034
    %v2036 = vpop.f32.mrf.mxu0
    %2037 = vdwg.mxu0
    %v2038 = vld [vmem:[#allocation3 + $0x38] sm:$0xff]
    %v2039 = vadd.f32 %v2038, %v1963
    %v2040 = vadd.f32 %v1963, %v541
    %v2041 = vxor.u32 %v2039, 2147483648
    %v2042 = vmul.f32 %v2041, 1.442695
    %v2043 = vpow.pop %v2042
    %v2044 = vadd.f32 %v2043, 1.0
    %v2045 = vrcp.pop %v2044
    %v2046 = vmul.f32 1.0, %v2045
    %2048 = vrot.lane.b32.xlu0 %v2040, 64
    %v2049 = vpop.permute.xlu0 %2048
    %v2051 = vmul.f32 %v2046, %v2049
    %2053 = vrot.lane.b32.xlu0 %v2051, 64
    %v2054 = vpop.permute.xlu0 %2053
    %v2056 = vadd.f32 %v2038, %v2054
    %v2057 = vtanh.pop %v2056
    %v2058 = vld [vmem:[%s374] sm:$0xff]
    %2060 = vrot.lane.b32.xlu0 %v2057, 96
    %v2061 = vpop.permute.xlu0 %2060
    %v2063 = vsub.f32 %v1836, %v2061
    %v2064 = vmul.f32 %v2046, %v2063
    %2066 = vrot.lane.b32.xlu0 %v2064, 32
    %v2067 = vpop.permute.xlu0 %2066
    %v2069 = vadd.f32 %v2057, %v2067
    %2070 = vrot.lane.b32.xlu0 %v1836, 32
    %v2071 = vpop.permute.xlu0 %2070
    %v2073 = vsub.f32 %v2069, %v2071
    %2075 = vset.pattern.permute.xlu0 0
    %2076 = vperm.xlu0 %2075, %v2058
    %v2077 = vpop.permute.xlu0 %2076
    %v2079 = vmul.f32 %v2077, %v2073
    %2081 = vrot.lane.b32.xlu0 %v2079, 96
    %v2082 = vpop.permute.xlu0 %2081
    %v2084 = vadd.f32 %v1836, %v2082
    %2086 = vrot.lane.b32.xlu0 %v2084, 96
    %v2087 = vpop.permute.xlu0 %2086
    %2089 = vst.msk [vmem:[#allocation2 + $0x38] sm:$0xff] %vm283, %v2087
    %v2090 = vld [vmem:[%s300] sm:$0xff]
    %v2091 = vadd.f32 %v2090, %v2035
    %v2092 = vadd.f32 %v2035, %v597
    %v2093 = vxor.u32 %v2091, 2147483648
    %v2094 = vmul.f32 %v2093, 1.442695
    %v2095 = vpow.pop %v2094
    %v2096 = vadd.f32 %v2095, 1.0
    %v2097 = vrcp.pop %v2096
    %v2098 = vmul.f32 1.0, %v2097
    %2100 = vrot.lane.b32.xlu0 %v2092, 64
    %v2101 = vpop.permute.xlu0 %2100
    %v2103 = vmul.f32 %v2098, %v2101
    %2105 = vrot.lane.b32.xlu0 %v2103, 64
    %v2106 = vpop.permute.xlu0 %2105
    %v2108 = vadd.f32 %v2090, %v2106
    %v2109 = vtanh.pop %v2108
    %v2110 = vld [vmem:[%s1] sm:$0xff]
    %2112 = vrot.lane.b32.xlu0 %v2109, 96
    %v2113 = vpop.permute.xlu0 %2112
    %v2115 = vsub.f32 %v1888, %v2113
    %v2116 = vmul.f32 %v2098, %v2115
    %2118 = vrot.lane.b32.xlu0 %v2116, 32
    %v2119 = vpop.permute.xlu0 %2118
    %v2121 = vadd.f32 %v2109, %v2119
    %2122 = vrot.lane.b32.xlu0 %v1888, 32
    %v2123 = vpop.permute.xlu0 %2122
    %v2125 = vsub.f32 %v2121, %v2123
    %2127 = vset.pattern.permute.xlu0 0
    %2128 = vperm.xlu0 %2127, %v2110
    %v2129 = vpop.permute.xlu0 %2128
    %v2131 = vmul.f32 %v2129, %v2125
    %2133 = vrot.lane.b32.xlu0 %v2131, 96
    %v2134 = vpop.permute.xlu0 %2133
    %v2136 = vadd.f32 %v1888, %v2134
    %2138 = vrot.lane.b32.xlu0 %v2136, 96
    %v2139 = vpop.permute.xlu0 %2138
    %2141 = vst.msk [vmem:[%s392] sm:$0xff] %vm283, %v2139
    %v2142 = vld [vmem:[%s8] sm:$0x3]
    %v2143 = vld [vmem:[#allocation2] sm:$0xff]
    %v2144 = vld [vmem:[#allocation2 + $0x8] sm:$0xff]
    %v2145 = vld [vmem:[#allocation2 + $0x10] sm:$0xff]
    %v2146 = vld [vmem:[#allocation2 + $0x18] sm:$0xff]
    %v2147 = vld [vmem:[#allocation2 + $0x20] sm:$0xff]
    %v2148 = vld [vmem:[#allocation2 + $0x28] sm:$0xff]
    %v2149 = vld [vmem:[#allocation2 + $0x30] sm:$0xff]
    %v2150 = vld [vmem:[#allocation2 + $0x38] sm:$0xff]
    %v2151 = vld [vmem:[%s6] sm:$0xff]
    %v2152 = vld [vmem:[%s6 + $0x8] sm:$0xff]
    %v2153 = vld [vmem:[%s6 + $0x10] sm:$0xff]
    %v2154 = vld [vmem:[%s6 + $0x18] sm:$0xff]
    %v2155 = vld [vmem:[%s6 + $0x20] sm:$0xff]
    %v2156 = vld [vmem:[%s6 + $0x28] sm:$0xff]
    %v2157 = vld [vmem:[%s6 + $0x30] sm:$0xff]
    %v2158 = vld [vmem:[%s6 + $0x38] sm:$0xff]
    %v2160 = vsel %vm283, %v2143, 0
    %v2163 = vsel %vm283, %v2144, 0
    %v2166 = vsel %vm283, %v2145, 0
    %v2169 = vsel %vm283, %v2146, 0
    %v2172 = vsel %vm283, %v2147, 0
    %v2175 = vsel %vm283, %v2148, 0
    %v2178 = vsel %vm283, %v2149, 0
    %v2181 = vsel %vm283, %v2150, 0
    %2183 = vmatprep.subr.mxu0 0.0
    %2184 = vmatpush1.msra.mxu0 0.0
    %2185 = vmatprep.subr.mxu0 0.0
    %2186 = vmatpush1.msra.mxu0 0.0
    %2187 = vmatprep.subr.mxu0 0.0
    %2188 = vmatpush1.msra.mxu0 0.0
    %2189 = vmatprep.subr.mxu0 0.0
    %2190 = vmatpush1.msra.mxu0 0.0
    %2191 = vmatprep.subr.mxu0 0.0
    %2192 = vmatpush1.msra.mxu0 0.0
    %2193 = vmatprep.subr.mxu0 0.0
    %2194 = vmatpush1.msra.mxu0 0.0
    %2195 = vmatprep.subr.mxu0 0.0
    %2196 = vmatpush1.msra.mxu0 0.0
    %2197 = vmatprep.subr.mxu0 0.0
    %2198 = vmatpush1.msra.mxu0 0.0
    %2199 = vmatprep.subr.mxu0 0.0
    %2200 = vmatpush1.msra.mxu0 0.0
    %2201 = vmatprep.subr.mxu0 0.0
    %2202 = vmatpush1.msra.mxu0 0.0
    %2203 = vmatprep.subr.mxu0 0.0
    %2204 = vmatpush1.msra.mxu0 0.0
    %2205 = vmatprep.subr.mxu0 0.0
    %2206 = vmatpush1.msra.mxu0 0.0
    %2207 = vmatprep.subr.mxu0 %v2158
    %2208 = vmatpush1.msra.mxu0 %v2157
    %2209 = vmatprep.subr.mxu0 %v2156
    %2210 = vmatpush1.msra.mxu0 %v2155
    %2211 = vmatprep.subr.mxu0 %v2154
    %2212 = vmatpush1.msra.mxu0 %v2153
    %2213 = vmatprep.subr.mxu0 %v2152
    %2214 = vmatpush1.msra.mxu0 %v2151
    %2215 = vmatprep.subr.mxu0 0.0
    %2216 = vmatpush2.msra.mxu0 0.0
    %2217 = vmatprep.subr.mxu0 0.0
    %2218 = vmatpush2.msra.mxu0 0.0
    %2219 = vmatprep.subr.mxu0 0.0
    %2220 = vmatpush2.msra.mxu0 0.0
    %2221 = vmatprep.subr.mxu0 0.0
    %2222 = vmatpush2.msra.mxu0 0.0
    %2223 = vmatprep.subr.mxu0 0.0
    %2224 = vmatpush2.msra.mxu0 0.0
    %2225 = vmatprep.subr.mxu0 0.0
    %2226 = vmatpush2.msra.mxu0 0.0
    %2227 = vmatprep.subr.mxu0 0.0
    %2228 = vmatpush2.msra.mxu0 0.0
    %2229 = vmatprep.subr.mxu0 0.0
    %2230 = vmatpush2.msra.mxu0 0.0
    %2231 = vmatprep.subr.mxu0 0.0
    %2232 = vmatpush2.msra.mxu0 0.0
    %2233 = vmatprep.subr.mxu0 0.0
    %2234 = vmatpush2.msra.mxu0 0.0
    %2235 = vmatprep.subr.mxu0 0.0
    %2236 = vmatpush2.msra.mxu0 0.0
    %2237 = vmatprep.subr.mxu0 0.0
    %2238 = vmatpush2.msra.mxu0 0.0
    %2239 = vmatprep.subr.mxu0 0.0
    %2240 = vmatpush2.msra.mxu0 0.0
    %2241 = vmatprep.subr.mxu0 0.0
    %2242 = vmatpush2.msra.mxu0 0.0
    %2243 = vmatprep.subr.mxu0 0.0
    %2244 = vmatpush2.msra.mxu0 0.0
    %2245 = vmatprep.subr.mxu0 0.0
    %2246 = vmatpush2.msra.mxu0 0.0
    %2247 = vmatprep.mubr.f32.mxu0 0.0
    %2248 = vmatmul.mubr.f32.gmra.mxu0 %v2160
    %v2249 = vpop.f32.mrf.mxu0
    %v2250 = vadd.f32 0.0, %v2249
    %v2251 = vpop.f32.mrf.mxu0
    %v2252 = vadd.f32 0.0, %v2251
    %2253 = vmatprep.mubr.f32.mxu0 0.0
    %2254 = vmatmul.mubr.f32.gmra.mxu0 %v2163
    %v2255 = vpop.f32.mrf.mxu0
    %v2256 = vadd.f32 0.0, %v2255
    %v2257 = vpop.f32.mrf.mxu0
    %v2258 = vadd.f32 0.0, %v2257
    %2259 = vmatprep.mubr.f32.mxu0 0.0
    %2260 = vmatmul.mubr.f32.gmra.mxu0 %v2166
    %v2261 = vpop.f32.mrf.mxu0
    %v2262 = vadd.f32 0.0, %v2261
    %v2263 = vpop.f32.mrf.mxu0
    %v2264 = vadd.f32 0.0, %v2263
    %2265 = vmatprep.mubr.f32.mxu0 0.0
    %2266 = vmatmul.mubr.f32.gmra.mxu0 %v2169
    %v2267 = vpop.f32.mrf.mxu0
    %v2268 = vadd.f32 0.0, %v2267
    %v2269 = vpop.f32.mrf.mxu0
    %v2270 = vadd.f32 0.0, %v2269
    %2271 = vmatprep.mubr.f32.mxu0 0.0
    %2272 = vmatmul.mubr.f32.gmra.mxu0 %v2172
    %v2273 = vpop.f32.mrf.mxu0
    %v2274 = vadd.f32 0.0, %v2273
    %v2275 = vpop.f32.mrf.mxu0
    %v2276 = vadd.f32 0.0, %v2275
    %2277 = vmatprep.mubr.f32.mxu0 0.0
    %2278 = vmatmul.mubr.f32.gmra.mxu0 %v2175
    %v2279 = vpop.f32.mrf.mxu0
    %v2280 = vadd.f32 0.0, %v2279
    %v2281 = vpop.f32.mrf.mxu0
    %v2282 = vadd.f32 0.0, %v2281
    %2283 = vmatprep.mubr.f32.mxu0 0.0
    %2284 = vmatmul.mubr.f32.gmra.mxu0 %v2178
    %v2285 = vpop.f32.mrf.mxu0
    %v2286 = vadd.f32 0.0, %v2285
    %v2287 = vpop.f32.mrf.mxu0
    %v2288 = vadd.f32 0.0, %v2287
    %2289 = vmatprep.mubr.f32.mxu0 0.0
    %2290 = vmatmul.mubr.f32.gmra.mxu0 %v2181
    %v2291 = vpop.f32.mrf.mxu0
    %v2292 = vadd.f32 0.0, %v2291
    %v2293 = vpop.f32.mrf.mxu0
    %v2294 = vadd.f32 0.0, %v2293
    %2295 = vdwg.mxu0
    %v2297 = vlaneseq
    %v2298 = vshrl.u32 %v2297, 7
    %v2299 = vsub.s32 0, %v2298
    %v2300 = vrot.slane %v2142, %v2299
    %v2301 = vlaneseq
    %v2302 = vshrl.u32 %v2301, 7
    %v2303 = vsub.s32 1, %v2302
    %v2304 = vrot.slane %v2142, %v2303
    %v2307 = vadd.f32 %v2300, %v2250
    %v2308 = vadd.f32 %v2304, %v2252
    %v2309 = vadd.f32 %v2300, %v2256
    %v2310 = vadd.f32 %v2304, %v2258
    %v2311 = vadd.f32 %v2300, %v2262
    %v2312 = vadd.f32 %v2304, %v2264
    %v2313 = vadd.f32 %v2300, %v2268
    %v2314 = vadd.f32 %v2304, %v2270
    %v2315 = vadd.f32 %v2300, %v2274
    %v2316 = vadd.f32 %v2304, %v2276
    %v2317 = vadd.f32 %v2300, %v2280
    %v2318 = vadd.f32 %v2304, %v2282
    %v2319 = vadd.f32 %v2300, %v2286
    %v2320 = vadd.f32 %v2304, %v2288
    %v2321 = vadd.f32 %v2300, %v2292
    %v2322 = vadd.f32 %v2304, %v2294
    %v2323 = vld [vmem:[%s392] sm:$0xff]
    %v2324 = vld [vmem:[%s392 + $0x8] sm:$0xff]
    %v2325 = vld [vmem:[%s392 + $0x10] sm:$0xff]
    %v2326 = vld [vmem:[%s392 + $0x18] sm:$0xff]
    %v2327 = vld [vmem:[%s392 + $0x20] sm:$0xff]
    %v2328 = vld [vmem:[%s392 + $0x28] sm:$0xff]
    %v2329 = vld [vmem:[%s392 + $0x30] sm:$0xff]
    %v2330 = vld [vmem:[%s392 + $0x38] sm:$0xff]
    %s2331 = scalar_lea.vmem %s6, 64
    %v2332 = vld [vmem:[%s2331] sm:$0xff]
    %v2333 = vld [vmem:[%s2331 + $0x8] sm:$0xff]
    %v2334 = vld [vmem:[%s2331 + $0x10] sm:$0xff]
    %v2335 = vld [vmem:[%s2331 + $0x18] sm:$0xff]
    %v2336 = vld [vmem:[%s2331 + $0x20] sm:$0xff]
    %v2337 = vld [vmem:[%s2331 + $0x28] sm:$0xff]
    %v2338 = vld [vmem:[%s2331 + $0x30] sm:$0xff]
    %v2339 = vld [vmem:[%s2331 + $0x38] sm:$0xff]
    %v2341 = vsel %vm283, %v2323, 0
    %v2344 = vsel %vm283, %v2324, 0
    %v2347 = vsel %vm283, %v2325, 0
    %v2350 = vsel %vm283, %v2326, 0
    %v2353 = vsel %vm283, %v2327, 0
    %v2356 = vsel %vm283, %v2328, 0
    %v2359 = vsel %vm283, %v2329, 0
    %v2362 = vsel %vm283, %v2330, 0
    %2364 = vmatprep.subr.mxu0 0.0
    %2365 = vmatpush1.msra.mxu0 0.0
    %2366 = vmatprep.subr.mxu0 0.0
    %2367 = vmatpush1.msra.mxu0 0.0
    %2368 = vmatprep.subr.mxu0 0.0
    %2369 = vmatpush1.msra.mxu0 0.0
    %2370 = vmatprep.subr.mxu0 0.0
    %2371 = vmatpush1.msra.mxu0 0.0
    %2372 = vmatprep.subr.mxu0 0.0
    %2373 = vmatpush1.msra.mxu0 0.0
    %2374 = vmatprep.subr.mxu0 0.0
    %2375 = vmatpush1.msra.mxu0 0.0
    %2376 = vmatprep.subr.mxu0 0.0
    %2377 = vmatpush1.msra.mxu0 0.0
    %2378 = vmatprep.subr.mxu0 0.0
    %2379 = vmatpush1.msra.mxu0 0.0
    %2380 = vmatprep.subr.mxu0 0.0
    %2381 = vmatpush1.msra.mxu0 0.0
    %2382 = vmatprep.subr.mxu0 0.0
    %2383 = vmatpush1.msra.mxu0 0.0
    %2384 = vmatprep.subr.mxu0 0.0
    %2385 = vmatpush1.msra.mxu0 0.0
    %2386 = vmatprep.subr.mxu0 0.0
    %2387 = vmatpush1.msra.mxu0 0.0
    %2388 = vmatprep.subr.mxu0 %v2339
    %2389 = vmatpush1.msra.mxu0 %v2338
    %2390 = vmatprep.subr.mxu0 %v2337
    %2391 = vmatpush1.msra.mxu0 %v2336
    %2392 = vmatprep.subr.mxu0 %v2335
    %2393 = vmatpush1.msra.mxu0 %v2334
    %2394 = vmatprep.subr.mxu0 %v2333
    %2395 = vmatpush1.msra.mxu0 %v2332
    %2396 = vmatprep.subr.mxu0 0.0
    %2397 = vmatpush2.msra.mxu0 0.0
    %2398 = vmatprep.subr.mxu0 0.0
    %2399 = vmatpush2.msra.mxu0 0.0
    %2400 = vmatprep.subr.mxu0 0.0
    %2401 = vmatpush2.msra.mxu0 0.0
    %2402 = vmatprep.subr.mxu0 0.0
    %2403 = vmatpush2.msra.mxu0 0.0
    %2404 = vmatprep.subr.mxu0 0.0
    %2405 = vmatpush2.msra.mxu0 0.0
    %2406 = vmatprep.subr.mxu0 0.0
    %2407 = vmatpush2.msra.mxu0 0.0
    %2408 = vmatprep.subr.mxu0 0.0
    %2409 = vmatpush2.msra.mxu0 0.0
    %2410 = vmatprep.subr.mxu0 0.0
    %2411 = vmatpush2.msra.mxu0 0.0
    %2412 = vmatprep.subr.mxu0 0.0
    %2413 = vmatpush2.msra.mxu0 0.0
    %2414 = vmatprep.subr.mxu0 0.0
    %2415 = vmatpush2.msra.mxu0 0.0
    %2416 = vmatprep.subr.mxu0 0.0
    %2417 = vmatpush2.msra.mxu0 0.0
    %2418 = vmatprep.subr.mxu0 0.0
    %2419 = vmatpush2.msra.mxu0 0.0
    %2420 = vmatprep.subr.mxu0 0.0
    %2421 = vmatpush2.msra.mxu0 0.0
    %2422 = vmatprep.subr.mxu0 0.0
    %2423 = vmatpush2.msra.mxu0 0.0
    %2424 = vmatprep.subr.mxu0 0.0
    %2425 = vmatpush2.msra.mxu0 0.0
    %2426 = vmatprep.subr.mxu0 0.0
    %2427 = vmatpush2.msra.mxu0 0.0
    %2428 = vmatprep.mubr.f32.mxu0 0.0
    %2429 = vmatmul.mubr.f32.gmra.mxu0 %v2341
    %v2430 = vpop.f32.mrf.mxu0
    %v2431 = vadd.f32 0.0, %v2430
    %v2432 = vpop.f32.mrf.mxu0
    %v2433 = vadd.f32 0.0, %v2432
    %2434 = vmatprep.mubr.f32.mxu0 0.0
    %2435 = vmatmul.mubr.f32.gmra.mxu0 %v2344
    %v2436 = vpop.f32.mrf.mxu0
    %v2437 = vadd.f32 0.0, %v2436
    %v2438 = vpop.f32.mrf.mxu0
    %v2439 = vadd.f32 0.0, %v2438
    %2440 = vmatprep.mubr.f32.mxu0 0.0
    %2441 = vmatmul.mubr.f32.gmra.mxu0 %v2347
    %v2442 = vpop.f32.mrf.mxu0
    %v2443 = vadd.f32 0.0, %v2442
    %v2444 = vpop.f32.mrf.mxu0
    %v2445 = vadd.f32 0.0, %v2444
    %2446 = vmatprep.mubr.f32.mxu0 0.0
    %2447 = vmatmul.mubr.f32.gmra.mxu0 %v2350
    %v2448 = vpop.f32.mrf.mxu0
    %v2449 = vadd.f32 0.0, %v2448
    %v2450 = vpop.f32.mrf.mxu0
    %v2451 = vadd.f32 0.0, %v2450
    %2452 = vmatprep.mubr.f32.mxu0 0.0
    %2453 = vmatmul.mubr.f32.gmra.mxu0 %v2353
    %v2454 = vpop.f32.mrf.mxu0
    %v2455 = vadd.f32 0.0, %v2454
    %v2456 = vpop.f32.mrf.mxu0
    %v2457 = vadd.f32 0.0, %v2456
    %2458 = vmatprep.mubr.f32.mxu0 0.0
    %2459 = vmatmul.mubr.f32.gmra.mxu0 %v2356
    %v2460 = vpop.f32.mrf.mxu0
    %v2461 = vadd.f32 0.0, %v2460
    %v2462 = vpop.f32.mrf.mxu0
    %v2463 = vadd.f32 0.0, %v2462
    %2464 = vmatprep.mubr.f32.mxu0 0.0
    %2465 = vmatmul.mubr.f32.gmra.mxu0 %v2359
    %v2466 = vpop.f32.mrf.mxu0
    %v2467 = vadd.f32 0.0, %v2466
    %v2468 = vpop.f32.mrf.mxu0
    %v2469 = vadd.f32 0.0, %v2468
    %2470 = vmatprep.mubr.f32.mxu0 0.0
    %2471 = vmatmul.mubr.f32.gmra.mxu0 %v2362
    %v2472 = vpop.f32.mrf.mxu0
    %v2473 = vadd.f32 0.0, %v2472
    %v2474 = vpop.f32.mrf.mxu0
    %v2475 = vadd.f32 0.0, %v2474
    %2476 = vdwg.mxu0
    %v2477 = vadd.f32 %v2307, %v2431
    %v2478 = vadd.f32 %v2308, %v2433
    %v2479 = vadd.f32 %v2309, %v2437
    %v2480 = vadd.f32 %v2310, %v2439
    %v2481 = vadd.f32 %v2311, %v2443
    %v2482 = vadd.f32 %v2312, %v2445
    %v2483 = vadd.f32 %v2313, %v2449
    %v2484 = vadd.f32 %v2314, %v2451
    %v2485 = vadd.f32 %v2315, %v2455
    %v2486 = vadd.f32 %v2316, %v2457
    %v2487 = vadd.f32 %v2317, %v2461
    %v2488 = vadd.f32 %v2318, %v2463
    %v2489 = vadd.f32 %v2319, %v2467
    %v2490 = vadd.f32 %v2320, %v2469
    %v2491 = vadd.f32 %v2321, %v2473
    %v2492 = vadd.f32 %v2322, %v2475
    %2493 = vst.msk [vmem:[#allocation3] sm:$0xff] %vm226, %v2477
    %2494 = vst.msk [vmem:[#allocation3 + $0x8] sm:$0xff] %vm226, %v2479
    %2495 = vst.msk [vmem:[#allocation3 + $0x10] sm:$0xff] %vm226, %v2481
    %2496 = vst.msk [vmem:[#allocation3 + $0x18] sm:$0xff] %vm226, %v2483
    %2497 = vst.msk [vmem:[#allocation3 + $0x20] sm:$0xff] %vm226, %v2485
    %2498 = vst.msk [vmem:[#allocation3 + $0x28] sm:$0xff] %vm226, %v2487
    %2499 = vst.msk [vmem:[#allocation3 + $0x30] sm:$0xff] %vm226, %v2489
    %2500 = vst.msk [vmem:[#allocation3 + $0x38] sm:$0xff] %vm226, %v2491
    %2517 = vrot.lane.b32.xlu0 %v2477, 32
    %v2518 = vpop.permute.xlu0 %2517
    %2519 = vrot.lane.b32.xlu0 %v2478, 32
    %v2520 = vpop.permute.xlu0 %2519
    %2521 = vrot.lane.b32.xlu0 %v2479, 32
    %v2522 = vpop.permute.xlu0 %2521
    %2523 = vrot.lane.b32.xlu0 %v2480, 32
    %v2524 = vpop.permute.xlu0 %2523
    %2525 = vrot.lane.b32.xlu0 %v2481, 32
    %v2526 = vpop.permute.xlu0 %2525
    %2527 = vrot.lane.b32.xlu0 %v2482, 32
    %v2528 = vpop.permute.xlu0 %2527
    %2529 = vrot.lane.b32.xlu0 %v2483, 32
    %v2530 = vpop.permute.xlu0 %2529
    %2531 = vrot.lane.b32.xlu0 %v2484, 32
    %v2532 = vpop.permute.xlu0 %2531
    %2533 = vrot.lane.b32.xlu0 %v2485, 32
    %v2534 = vpop.permute.xlu0 %2533
    %2535 = vrot.lane.b32.xlu0 %v2486, 32
    %v2536 = vpop.permute.xlu0 %2535
    %2537 = vrot.lane.b32.xlu0 %v2487, 32
    %v2538 = vpop.permute.xlu0 %2537
    %2539 = vrot.lane.b32.xlu0 %v2488, 32
    %v2540 = vpop.permute.xlu0 %2539
    %2541 = vrot.lane.b32.xlu0 %v2489, 32
    %v2542 = vpop.permute.xlu0 %2541
    %2543 = vrot.lane.b32.xlu0 %v2490, 32
    %v2544 = vpop.permute.xlu0 %2543
    %2545 = vrot.lane.b32.xlu0 %v2491, 32
    %v2546 = vpop.permute.xlu0 %2545
    %2547 = vrot.lane.b32.xlu0 %v2492, 32
    %v2548 = vpop.permute.xlu0 %2547
    %v2549 = vsel %vm283, %v2518, %v2520
    %v2550 = vsel %vm283, %v2522, %v2524
    %v2551 = vsel %vm283, %v2526, %v2528
    %v2552 = vsel %vm283, %v2530, %v2532
    %v2553 = vsel %vm283, %v2534, %v2536
    %v2554 = vsel %vm283, %v2538, %v2540
    %v2555 = vsel %vm283, %v2542, %v2544
    %v2556 = vsel %vm283, %v2546, %v2548
    %2565 = vst.msk [vmem:[%s300] sm:$0xff] %vm226, %v2549
    %2566 = vst.msk [vmem:[%s300 + $0x8] sm:$0xff] %vm226, %v2550
    %2567 = vst.msk [vmem:[%s300 + $0x10] sm:$0xff] %vm226, %v2551
    %2568 = vst.msk [vmem:[%s300 + $0x18] sm:$0xff] %vm226, %v2552
    %2569 = vst.msk [vmem:[%s300 + $0x20] sm:$0xff] %vm226, %v2553
    %2570 = vst.msk [vmem:[%s300 + $0x28] sm:$0xff] %vm226, %v2554
    %2571 = vst.msk [vmem:[%s300 + $0x30] sm:$0xff] %vm226, %v2555
    %2572 = vst.msk [vmem:[%s300 + $0x38] sm:$0xff] %vm226, %v2556
    %v2573 = vld [vmem:[#allocation7] sm:$0xff]
    %v2574 = vld [vmem:[#allocation7 + $0x8] sm:$0xff]
    %v2575 = vld [vmem:[#allocation7 + $0x10] sm:$0xff]
    %v2576 = vld [vmem:[#allocation7 + $0x18] sm:$0xff]
    %s2577 = scalar_lea.vmem [#allocation7], 32
    %v2578 = vld [vmem:[%s2577] sm:$0xff]
    %v2579 = vld [vmem:[%s2577 + $0x8] sm:$0xff]
    %v2580 = vld [vmem:[%s2577 + $0x10] sm:$0xff]
    %v2581 = vld [vmem:[%s2577 + $0x18] sm:$0xff]
    %v2582 = vld [vmem:[%s9] sm:$0x1]
    %v2583 = vld [vmem:[#allocation3] sm:$0xff]
    %v2584 = vxor.u32 %v2583, 2147483648
    %v2585 = vmul.f32 %v2584, 1.442695
    %v2586 = vpow.pop %v2585
    %v2587 = vadd.f32 %v2586, 1.0
    %v2588 = vrcp.pop %v2587
    %v2589 = vmul.f32 1.0, %v2588
    %v2591 = vlaneseq
    %v2592 = vshrl.u32 %v2591, 7
    %v2593 = vsub.s32 0, %v2592
    %v2594 = vrot.slane %v2582, %v2593
    %v2596 = vmul.f32 %v2589, %v2594
    %2598 = vrot.lane.b32.xlu0 %v2596, 64
    %v2599 = vpop.permute.xlu0 %2598
    %v2601 = vadd.f32 %v2583, %v2599
    %v2602 = vtanh.pop %v2601
    %v2603 = vld [vmem:[%s1] sm:$0xff]
    %v2604 = vsub.f32 1.0, %v2589
    %2606 = vrot.lane.b32.xlu0 %v2602, 96
    %v2607 = vpop.permute.xlu0 %2606
    %v2609 = vmul.f32 %v2604, %v2607
    %2611 = vset.pattern.permute.xlu0 0
    %2612 = vperm.xlu0 %2611, %v2603
    %v2613 = vpop.permute.xlu0 %2612
    %v2615 = vmul.f32 %v2613, %v2609
    %v2616 = vld [vmem:[%s300 + $0x38] sm:$0xff]
    %v2617 = vxor.u32 %v2616, 2147483648
    %v2618 = vmul.f32 %v2617, 1.442695
    %v2619 = vpow.pop %v2618
    %v2620 = vadd.f32 %v2619, 1.0
    %v2621 = vrcp.pop %v2620
    %v2622 = vmul.f32 1.0, %v2621
    %2623 = vrot.lane.b32.xlu0 %v2594, 96
    %v2624 = vpop.permute.xlu0 %2623
    %v2626 = vmul.f32 %v2622, %v2624
    %2628 = vrot.lane.b32.xlu0 %v2626, 64
    %v2629 = vpop.permute.xlu0 %2628
    %v2631 = vadd.f32 %v2616, %v2629
    %v2632 = vtanh.pop %v2631
    %v2633 = vld [vmem:[%s374] sm:$0xff]
    %v2634 = vsub.f32 1.0, %v2622
    %2636 = vrot.lane.b32.xlu0 %v2632, 96
    %v2637 = vpop.permute.xlu0 %2636
    %v2639 = vmul.f32 %v2634, %v2637
    %2641 = vset.pattern.permute.xlu0 0
    %2642 = vperm.xlu0 %2641, %v2633
    %v2643 = vpop.permute.xlu0 %2642
    %v2645 = vmul.f32 %v2643, %v2639
    %2647 = vrot.lane.b32.xlu0 %v2615, 96
    %v2648 = vpop.permute.xlu0 %2647
    %v2649 = vsel %vm283, %v2648, 0
    %2651 = vmatprep.subr.mxu0 0.0
    %2652 = vmatpush1.msra.mxu0 0.0
    %2653 = vmatprep.subr.mxu0 0.0
    %2654 = vmatpush1.msra.mxu0 0.0
    %2655 = vmatprep.subr.mxu0 0.0
    %2656 = vmatpush1.msra.mxu0 0.0
    %2657 = vmatprep.subr.mxu0 0.0
    %2658 = vmatpush1.msra.mxu0 0.0
    %2659 = vmatprep.subr.mxu0 0.0
    %2660 = vmatpush1.msra.mxu0 0.0
    %2661 = vmatprep.subr.mxu0 0.0
    %2662 = vmatpush1.msra.mxu0 0.0
    %2663 = vmatprep.subr.mxu0 0.0
    %2664 = vmatpush1.msra.mxu0 0.0
    %2665 = vmatprep.subr.mxu0 0.0
    %2666 = vmatpush1.msra.mxu0 0.0
    %2667 = vmatprep.subr.mxu0 0.0
    %2668 = vmatpush1.msra.mxu0 0.0
    %2669 = vmatprep.subr.mxu0 0.0
    %2670 = vmatpush1.msra.mxu0 0.0
    %2671 = vmatprep.subr.mxu0 0.0
    %2672 = vmatpush1.msra.mxu0 0.0
    %2673 = vmatprep.subr.mxu0 0.0
    %2674 = vmatpush1.msra.mxu0 0.0
    %2675 = vmatprep.subr.mxu0 0.0
    %2676 = vmatpush1.msra.mxu0 %v2576
    %2677 = vmatprep.subr.mxu0 0.0
    %2678 = vmatpush1.msra.mxu0 %v2575
    %2679 = vmatprep.subr.mxu0 0.0
    %2680 = vmatpush1.msra.mxu0 %v2574
    %2681 = vmatprep.subr.mxu0 0.0
    %2682 = vmatpush1.msra.mxu0 %v2573
    %2683 = vmatprep.subr.mxu0 0.0
    %2684 = vmatpush2.msra.mxu0 0.0
    %2685 = vmatprep.subr.mxu0 0.0
    %2686 = vmatpush2.msra.mxu0 0.0
    %2687 = vmatprep.subr.mxu0 0.0
    %2688 = vmatpush2.msra.mxu0 0.0
    %2689 = vmatprep.subr.mxu0 0.0
    %2690 = vmatpush2.msra.mxu0 0.0
    %2691 = vmatprep.subr.mxu0 0.0
    %2692 = vmatpush2.msra.mxu0 0.0
    %2693 = vmatprep.subr.mxu0 0.0
    %2694 = vmatpush2.msra.mxu0 0.0
    %2695 = vmatprep.subr.mxu0 0.0
    %2696 = vmatpush2.msra.mxu0 0.0
    %2697 = vmatprep.subr.mxu0 0.0
    %2698 = vmatpush2.msra.mxu0 0.0
    %2699 = vmatprep.subr.mxu0 0.0
    %2700 = vmatpush2.msra.mxu0 0.0
    %2701 = vmatprep.subr.mxu0 0.0
    %2702 = vmatpush2.msra.mxu0 0.0
    %2703 = vmatprep.subr.mxu0 0.0
    %2704 = vmatpush2.msra.mxu0 0.0
    %2705 = vmatprep.subr.mxu0 0.0
    %2706 = vmatpush2.msra.mxu0 0.0
    %2707 = vmatprep.subr.mxu0 0.0
    %2708 = vmatpush2.msra.mxu0 0.0
    %2709 = vmatprep.subr.mxu0 0.0
    %2710 = vmatpush2.msra.mxu0 0.0
    %2711 = vmatprep.subr.mxu0 0.0
    %2712 = vmatpush2.msra.mxu0 0.0
    %2713 = vmatprep.subr.mxu0 0.0
    %2714 = vmatpush2.msra.mxu0 0.0
    %2715 = vmatprep.mubr.f32.mxu0 0.0
    %2716 = vmatmul.mubr.f32.gmra.mxu0 %v2649
    %v2717 = vpop.f32.mrf.mxu0
    %v2718 = vadd.f32 0.0, %v2717
    %v2719 = vpop.f32.mrf.mxu0
    %2720 = vdwg.mxu0
    %2722 = vrot.lane.b32.xlu0 %v2645, 96
    %v2723 = vpop.permute.xlu0 %2722
    %v2724 = vsel %vm283, %v2723, 0
    %2726 = vmatprep.subr.mxu0 0.0
    %2727 = vmatpush1.msra.mxu0 0.0
    %2728 = vmatprep.subr.mxu0 0.0
    %2729 = vmatpush1.msra.mxu0 0.0
    %2730 = vmatprep.subr.mxu0 0.0
    %2731 = vmatpush1.msra.mxu0 0.0
    %2732 = vmatprep.subr.mxu0 0.0
    %2733 = vmatpush1.msra.mxu0 0.0
    %2734 = vmatprep.subr.mxu0 0.0
    %2735 = vmatpush1.msra.mxu0 0.0
    %2736 = vmatprep.subr.mxu0 0.0
    %2737 = vmatpush1.msra.mxu0 0.0
    %2738 = vmatprep.subr.mxu0 0.0
    %2739 = vmatpush1.msra.mxu0 0.0
    %2740 = vmatprep.subr.mxu0 0.0
    %2741 = vmatpush1.msra.mxu0 0.0
    %2742 = vmatprep.subr.mxu0 0.0
    %2743 = vmatpush1.msra.mxu0 0.0
    %2744 = vmatprep.subr.mxu0 0.0
    %2745 = vmatpush1.msra.mxu0 0.0
    %2746 = vmatprep.subr.mxu0 0.0
    %2747 = vmatpush1.msra.mxu0 0.0
    %2748 = vmatprep.subr.mxu0 0.0
    %2749 = vmatpush1.msra.mxu0 0.0
    %2750 = vmatprep.subr.mxu0 0.0
    %2751 = vmatpush1.msra.mxu0 %v2581
    %2752 = vmatprep.subr.mxu0 0.0
    %2753 = vmatpush1.msra.mxu0 %v2580
    %2754 = vmatprep.subr.mxu0 0.0
    %2755 = vmatpush1.msra.mxu0 %v2579
    %2756 = vmatprep.subr.mxu0 0.0
    %2757 = vmatpush1.msra.mxu0 %v2578
    %2758 = vmatprep.subr.mxu0 0.0
    %2759 = vmatpush2.msra.mxu0 0.0
    %2760 = vmatprep.subr.mxu0 0.0
    %2761 = vmatpush2.msra.mxu0 0.0
    %2762 = vmatprep.subr.mxu0 0.0
    %2763 = vmatpush2.msra.mxu0 0.0
    %2764 = vmatprep.subr.mxu0 0.0
    %2765 = vmatpush2.msra.mxu0 0.0
    %2766 = vmatprep.subr.mxu0 0.0
    %2767 = vmatpush2.msra.mxu0 0.0
    %2768 = vmatprep.subr.mxu0 0.0
    %2769 = vmatpush2.msra.mxu0 0.0
    %2770 = vmatprep.subr.mxu0 0.0
    %2771 = vmatpush2.msra.mxu0 0.0
    %2772 = vmatprep.subr.mxu0 0.0
    %2773 = vmatpush2.msra.mxu0 0.0
    %2774 = vmatprep.subr.mxu0 0.0
    %2775 = vmatpush2.msra.mxu0 0.0
    %2776 = vmatprep.subr.mxu0 0.0
    %2777 = vmatpush2.msra.mxu0 0.0
    %2778 = vmatprep.subr.mxu0 0.0
    %2779 = vmatpush2.msra.mxu0 0.0
    %2780 = vmatprep.subr.mxu0 0.0
    %2781 = vmatpush2.msra.mxu0 0.0
    %2782 = vmatprep.subr.mxu0 0.0
    %2783 = vmatpush2.msra.mxu0 0.0
    %2784 = vmatprep.subr.mxu0 0.0
    %2785 = vmatpush2.msra.mxu0 0.0
    %2786 = vmatprep.subr.mxu0 0.0
    %2787 = vmatpush2.msra.mxu0 0.0
    %2788 = vmatprep.subr.mxu0 0.0
    %2789 = vmatpush2.msra.mxu0 0.0
    %2790 = vmatprep.mubr.f32.mxu0 0.0
    %2791 = vmatmul.mubr.f32.gmra.mxu0 %v2724
    %v2792 = vpop.f32.mrf.mxu0
    %v2793 = vadd.f32 0.0, %v2792
    %v2794 = vpop.f32.mrf.mxu0
    %2795 = vdwg.mxu0
    %v2796 = vld [vmem:[#allocation3 + $0x8] sm:$0xff]
    %v2797 = vadd.f32 %v2796, %v2718
    %2798 = vrot.lane.b32.xlu0 %v2594, 64
    %v2799 = vpop.permute.xlu0 %2798
    %v2801 = vadd.f32 %v2718, %v2799
    %v2802 = vxor.u32 %v2797, 2147483648
    %v2803 = vmul.f32 %v2802, 1.442695
    %v2804 = vpow.pop %v2803
    %v2805 = vadd.f32 %v2804, 1.0
    %v2806 = vrcp.pop %v2805
    %v2807 = vmul.f32 1.0, %v2806
    %2809 = vrot.lane.b32.xlu0 %v2801, 64
    %v2810 = vpop.permute.xlu0 %2809
    %v2812 = vmul.f32 %v2807, %v2810
    %2814 = vrot.lane.b32.xlu0 %v2812, 64
    %v2815 = vpop.permute.xlu0 %2814
    %v2817 = vadd.f32 %v2796, %v2815
    %v2818 = vtanh.pop %v2817
    %v2819 = vld [vmem:[%s561] sm:$0xff]
    %2821 = vrot.lane.b32.xlu0 %v2818, 96
    %v2822 = vpop.permute.xlu0 %2821
    %v2824 = vsub.f32 %v2615, %v2822
    %v2825 = vmul.f32 %v2807, %v2824
    %2827 = vrot.lane.b32.xlu0 %v2825, 32
    %v2828 = vpop.permute.xlu0 %2827
    %v2830 = vadd.f32 %v2818, %v2828
    %2831 = vrot.lane.b32.xlu0 %v2615, 32
    %v2832 = vpop.permute.xlu0 %2831
    %v2834 = vsub.f32 %v2830, %v2832
    %2836 = vset.pattern.permute.xlu0 0
    %2837 = vperm.xlu0 %2836, %v2819
    %v2838 = vpop.permute.xlu0 %2837
    %v2840 = vmul.f32 %v2838, %v2834
    %2842 = vrot.lane.b32.xlu0 %v2840, 96
    %v2843 = vpop.permute.xlu0 %2842
    %v2845 = vadd.f32 %v2615, %v2843
    %v2846 = vld [vmem:[%s300 + $0x30] sm:$0xff]
    %v2847 = vadd.f32 %v2846, %v2793
    %2848 = vrot.lane.b32.xlu0 %v2594, 32
    %v2849 = vpop.permute.xlu0 %2848
    %v2851 = vadd.f32 %v2793, %v2849
    %v2852 = vxor.u32 %v2847, 2147483648
    %v2853 = vmul.f32 %v2852, 1.442695
    %v2854 = vpow.pop %v2853
    %v2855 = vadd.f32 %v2854, 1.0
    %v2856 = vrcp.pop %v2855
    %v2857 = vmul.f32 1.0, %v2856
    %2859 = vrot.lane.b32.xlu0 %v2851, 64
    %v2860 = vpop.permute.xlu0 %2859
    %v2862 = vmul.f32 %v2857, %v2860
    %2864 = vrot.lane.b32.xlu0 %v2862, 64
    %v2865 = vpop.permute.xlu0 %2864
    %v2867 = vadd.f32 %v2846, %v2865
    %v2868 = vtanh.pop %v2867
    %v2869 = vld [vmem:[%s617] sm:$0xff]
    %2871 = vrot.lane.b32.xlu0 %v2868, 96
    %v2872 = vpop.permute.xlu0 %2871
    %v2874 = vsub.f32 %v2645, %v2872
    %v2875 = vmul.f32 %v2857, %v2874
    %2877 = vrot.lane.b32.xlu0 %v2875, 32
    %v2878 = vpop.permute.xlu0 %2877
    %v2880 = vadd.f32 %v2868, %v2878
    %2881 = vrot.lane.b32.xlu0 %v2645, 32
    %v2882 = vpop.permute.xlu0 %2881
    %v2884 = vsub.f32 %v2880, %v2882
    %2886 = vset.pattern.permute.xlu0 0
    %2887 = vperm.xlu0 %2886, %v2869
    %v2888 = vpop.permute.xlu0 %2887
    %v2890 = vmul.f32 %v2888, %v2884
    %2892 = vrot.lane.b32.xlu0 %v2890, 96
    %v2893 = vpop.permute.xlu0 %2892
    %v2895 = vadd.f32 %v2645, %v2893
    %2897 = vrot.lane.b32.xlu0 %v2845, 96
    %v2898 = vpop.permute.xlu0 %2897
    %v2899 = vsel %vm283, %v2898, 0
    %2901 = vmatprep.subr.mxu0 0.0
    %2902 = vmatpush1.msra.mxu0 0.0
    %2903 = vmatprep.subr.mxu0 0.0
    %2904 = vmatpush1.msra.mxu0 0.0
    %2905 = vmatprep.subr.mxu0 0.0
    %2906 = vmatpush1.msra.mxu0 0.0
    %2907 = vmatprep.subr.mxu0 0.0
    %2908 = vmatpush1.msra.mxu0 0.0
    %2909 = vmatprep.subr.mxu0 0.0
    %2910 = vmatpush1.msra.mxu0 0.0
    %2911 = vmatprep.subr.mxu0 0.0
    %2912 = vmatpush1.msra.mxu0 0.0
    %2913 = vmatprep.subr.mxu0 0.0
    %2914 = vmatpush1.msra.mxu0 0.0
    %2915 = vmatprep.subr.mxu0 0.0
    %2916 = vmatpush1.msra.mxu0 0.0
    %2917 = vmatprep.subr.mxu0 0.0
    %2918 = vmatpush1.msra.mxu0 0.0
    %2919 = vmatprep.subr.mxu0 0.0
    %2920 = vmatpush1.msra.mxu0 0.0
    %2921 = vmatprep.subr.mxu0 0.0
    %2922 = vmatpush1.msra.mxu0 0.0
    %2923 = vmatprep.subr.mxu0 0.0
    %2924 = vmatpush1.msra.mxu0 0.0
    %2925 = vmatprep.subr.mxu0 0.0
    %2926 = vmatpush1.msra.mxu0 %v2576
    %2927 = vmatprep.subr.mxu0 0.0
    %2928 = vmatpush1.msra.mxu0 %v2575
    %2929 = vmatprep.subr.mxu0 0.0
    %2930 = vmatpush1.msra.mxu0 %v2574
    %2931 = vmatprep.subr.mxu0 0.0
    %2932 = vmatpush1.msra.mxu0 %v2573
    %2933 = vmatprep.subr.mxu0 0.0
    %2934 = vmatpush2.msra.mxu0 0.0
    %2935 = vmatprep.subr.mxu0 0.0
    %2936 = vmatpush2.msra.mxu0 0.0
    %2937 = vmatprep.subr.mxu0 0.0
    %2938 = vmatpush2.msra.mxu0 0.0
    %2939 = vmatprep.subr.mxu0 0.0
    %2940 = vmatpush2.msra.mxu0 0.0
    %2941 = vmatprep.subr.mxu0 0.0
    %2942 = vmatpush2.msra.mxu0 0.0
    %2943 = vmatprep.subr.mxu0 0.0
    %2944 = vmatpush2.msra.mxu0 0.0
    %2945 = vmatprep.subr.mxu0 0.0
    %2946 = vmatpush2.msra.mxu0 0.0
    %2947 = vmatprep.subr.mxu0 0.0
    %2948 = vmatpush2.msra.mxu0 0.0
    %2949 = vmatprep.subr.mxu0 0.0
    %2950 = vmatpush2.msra.mxu0 0.0
    %2951 = vmatprep.subr.mxu0 0.0
    %2952 = vmatpush2.msra.mxu0 0.0
    %2953 = vmatprep.subr.mxu0 0.0
    %2954 = vmatpush2.msra.mxu0 0.0
    %2955 = vmatprep.subr.mxu0 0.0
    %2956 = vmatpush2.msra.mxu0 0.0
    %2957 = vmatprep.subr.mxu0 0.0
    %2958 = vmatpush2.msra.mxu0 0.0
    %2959 = vmatprep.subr.mxu0 0.0
    %2960 = vmatpush2.msra.mxu0 0.0
    %2961 = vmatprep.subr.mxu0 0.0
    %2962 = vmatpush2.msra.mxu0 0.0
    %2963 = vmatprep.subr.mxu0 0.0
    %2964 = vmatpush2.msra.mxu0 0.0
    %2965 = vmatprep.mubr.f32.mxu0 0.0
    %2966 = vmatmul.mubr.f32.gmra.mxu0 %v2899
    %v2967 = vpop.f32.mrf.mxu0
    %v2968 = vadd.f32 0.0, %v2967
    %v2969 = vpop.f32.mrf.mxu0
    %2970 = vdwg.mxu0
    %2972 = vrot.lane.b32.xlu0 %v2895, 96
    %v2973 = vpop.permute.xlu0 %2972
    %v2974 = vsel %vm283, %v2973, 0
    %2976 = vmatprep.subr.mxu0 0.0
    %2977 = vmatpush1.msra.mxu0 0.0
    %2978 = vmatprep.subr.mxu0 0.0
    %2979 = vmatpush1.msra.mxu0 0.0
    %2980 = vmatprep.subr.mxu0 0.0
    %2981 = vmatpush1.msra.mxu0 0.0
    %2982 = vmatprep.subr.mxu0 0.0
    %2983 = vmatpush1.msra.mxu0 0.0
    %2984 = vmatprep.subr.mxu0 0.0
    %2985 = vmatpush1.msra.mxu0 0.0
    %2986 = vmatprep.subr.mxu0 0.0
    %2987 = vmatpush1.msra.mxu0 0.0
    %2988 = vmatprep.subr.mxu0 0.0
    %2989 = vmatpush1.msra.mxu0 0.0
    %2990 = vmatprep.subr.mxu0 0.0
    %2991 = vmatpush1.msra.mxu0 0.0
    %2992 = vmatprep.subr.mxu0 0.0
    %2993 = vmatpush1.msra.mxu0 0.0
    %2994 = vmatprep.subr.mxu0 0.0
    %2995 = vmatpush1.msra.mxu0 0.0
    %2996 = vmatprep.subr.mxu0 0.0
    %2997 = vmatpush1.msra.mxu0 0.0
    %2998 = vmatprep.subr.mxu0 0.0
    %2999 = vmatpush1.msra.mxu0 0.0
    %3000 = vmatprep.subr.mxu0 0.0
    %3001 = vmatpush1.msra.mxu0 %v2581
    %3002 = vmatprep.subr.mxu0 0.0
    %3003 = vmatpush1.msra.mxu0 %v2580
    %3004 = vmatprep.subr.mxu0 0.0
    %3005 = vmatpush1.msra.mxu0 %v2579
    %3006 = vmatprep.subr.mxu0 0.0
    %3007 = vmatpush1.msra.mxu0 %v2578
    %3008 = vmatprep.subr.mxu0 0.0
    %3009 = vmatpush2.msra.mxu0 0.0
    %3010 = vmatprep.subr.mxu0 0.0
    %3011 = vmatpush2.msra.mxu0 0.0
    %3012 = vmatprep.subr.mxu0 0.0
    %3013 = vmatpush2.msra.mxu0 0.0
    %3014 = vmatprep.subr.mxu0 0.0
    %3015 = vmatpush2.msra.mxu0 0.0
    %3016 = vmatprep.subr.mxu0 0.0
    %3017 = vmatpush2.msra.mxu0 0.0
    %3018 = vmatprep.subr.mxu0 0.0
    %3019 = vmatpush2.msra.mxu0 0.0
    %3020 = vmatprep.subr.mxu0 0.0
    %3021 = vmatpush2.msra.mxu0 0.0
    %3022 = vmatprep.subr.mxu0 0.0
    %3023 = vmatpush2.msra.mxu0 0.0
    %3024 = vmatprep.subr.mxu0 0.0
    %3025 = vmatpush2.msra.mxu0 0.0
    %3026 = vmatprep.subr.mxu0 0.0
    %3027 = vmatpush2.msra.mxu0 0.0
    %3028 = vmatprep.subr.mxu0 0.0
    %3029 = vmatpush2.msra.mxu0 0.0
    %3030 = vmatprep.subr.mxu0 0.0
    %3031 = vmatpush2.msra.mxu0 0.0
    %3032 = vmatprep.subr.mxu0 0.0
    %3033 = vmatpush2.msra.mxu0 0.0
    %3034 = vmatprep.subr.mxu0 0.0
    %3035 = vmatpush2.msra.mxu0 0.0
    %3036 = vmatprep.subr.mxu0 0.0
    %3037 = vmatpush2.msra.mxu0 0.0
    %3038 = vmatprep.subr.mxu0 0.0
    %3039 = vmatpush2.msra.mxu0 0.0
    %3040 = vmatprep.mubr.f32.mxu0 0.0
    %3041 = vmatmul.mubr.f32.gmra.mxu0 %v2974
    %v3042 = vpop.f32.mrf.mxu0
    %v3043 = vadd.f32 0.0, %v3042
    %v3044 = vpop.f32.mrf.mxu0
    %3045 = vdwg.mxu0
    %v3046 = vld [vmem:[#allocation3 + $0x10] sm:$0xff]
    %v3047 = vadd.f32 %v3046, %v2968
    %v3048 = vadd.f32 %v2968, %v2799
    %v3049 = vxor.u32 %v3047, 2147483648
    %v3050 = vmul.f32 %v3049, 1.442695
    %v3051 = vpow.pop %v3050
    %v3052 = vadd.f32 %v3051, 1.0
    %v3053 = vrcp.pop %v3052
    %v3054 = vmul.f32 1.0, %v3053
    %3056 = vrot.lane.b32.xlu0 %v3048, 64
    %v3057 = vpop.permute.xlu0 %3056
    %v3059 = vmul.f32 %v3054, %v3057
    %3061 = vrot.lane.b32.xlu0 %v3059, 64
    %v3062 = vpop.permute.xlu0 %3061
    %v3064 = vadd.f32 %v3046, %v3062
    %v3065 = vtanh.pop %v3064
    %v3066 = vld [vmem:[%s814] sm:$0xff]
    %3068 = vrot.lane.b32.xlu0 %v3065, 96
    %v3069 = vpop.permute.xlu0 %3068
    %v3071 = vsub.f32 %v2845, %v3069
    %v3072 = vmul.f32 %v3054, %v3071
    %3074 = vrot.lane.b32.xlu0 %v3072, 32
    %v3075 = vpop.permute.xlu0 %3074
    %v3077 = vadd.f32 %v3065, %v3075
    %3078 = vrot.lane.b32.xlu0 %v2845, 32
    %v3079 = vpop.permute.xlu0 %3078
    %v3081 = vsub.f32 %v3077, %v3079
    %3083 = vset.pattern.permute.xlu0 0
    %3084 = vperm.xlu0 %3083, %v3066
    %v3085 = vpop.permute.xlu0 %3084
    %v3087 = vmul.f32 %v3085, %v3081
    %3089 = vrot.lane.b32.xlu0 %v3087, 96
    %v3090 = vpop.permute.xlu0 %3089
    %v3092 = vadd.f32 %v2845, %v3090
    %v3093 = vld [vmem:[%s300 + $0x28] sm:$0xff]
    %v3094 = vadd.f32 %v3093, %v3043
    %v3095 = vadd.f32 %v3043, %v2849
    %v3096 = vxor.u32 %v3094, 2147483648
    %v3097 = vmul.f32 %v3096, 1.442695
    %v3098 = vpow.pop %v3097
    %v3099 = vadd.f32 %v3098, 1.0
    %v3100 = vrcp.pop %v3099
    %v3101 = vmul.f32 1.0, %v3100
    %3103 = vrot.lane.b32.xlu0 %v3095, 64
    %v3104 = vpop.permute.xlu0 %3103
    %v3106 = vmul.f32 %v3101, %v3104
    %3108 = vrot.lane.b32.xlu0 %v3106, 64
    %v3109 = vpop.permute.xlu0 %3108
    %v3111 = vadd.f32 %v3093, %v3109
    %v3112 = vtanh.pop %v3111
    %v3113 = vld [vmem:[%s867] sm:$0xff]
    %3115 = vrot.lane.b32.xlu0 %v3112, 96
    %v3116 = vpop.permute.xlu0 %3115
    %v3118 = vsub.f32 %v2895, %v3116
    %v3119 = vmul.f32 %v3101, %v3118
    %3121 = vrot.lane.b32.xlu0 %v3119, 32
    %v3122 = vpop.permute.xlu0 %3121
    %v3124 = vadd.f32 %v3112, %v3122
    %3125 = vrot.lane.b32.xlu0 %v2895, 32
    %v3126 = vpop.permute.xlu0 %3125
    %v3128 = vsub.f32 %v3124, %v3126
    %3130 = vset.pattern.permute.xlu0 0
    %3131 = vperm.xlu0 %3130, %v3113
    %v3132 = vpop.permute.xlu0 %3131
    %v3134 = vmul.f32 %v3132, %v3128
    %3136 = vrot.lane.b32.xlu0 %v3134, 96
    %v3137 = vpop.permute.xlu0 %3136
    %v3139 = vadd.f32 %v2895, %v3137
    %3141 = vrot.lane.b32.xlu0 %v3092, 96
    %v3142 = vpop.permute.xlu0 %3141
    %v3143 = vsel %vm283, %v3142, 0
    %3145 = vmatprep.subr.mxu0 0.0
    %3146 = vmatpush1.msra.mxu0 0.0
    %3147 = vmatprep.subr.mxu0 0.0
    %3148 = vmatpush1.msra.mxu0 0.0
    %3149 = vmatprep.subr.mxu0 0.0
    %3150 = vmatpush1.msra.mxu0 0.0
    %3151 = vmatprep.subr.mxu0 0.0
    %3152 = vmatpush1.msra.mxu0 0.0
    %3153 = vmatprep.subr.mxu0 0.0
    %3154 = vmatpush1.msra.mxu0 0.0
    %3155 = vmatprep.subr.mxu0 0.0
    %3156 = vmatpush1.msra.mxu0 0.0
    %3157 = vmatprep.subr.mxu0 0.0
    %3158 = vmatpush1.msra.mxu0 0.0
    %3159 = vmatprep.subr.mxu0 0.0
    %3160 = vmatpush1.msra.mxu0 0.0
    %3161 = vmatprep.subr.mxu0 0.0
    %3162 = vmatpush1.msra.mxu0 0.0
    %3163 = vmatprep.subr.mxu0 0.0
    %3164 = vmatpush1.msra.mxu0 0.0
    %3165 = vmatprep.subr.mxu0 0.0
    %3166 = vmatpush1.msra.mxu0 0.0
    %3167 = vmatprep.subr.mxu0 0.0
    %3168 = vmatpush1.msra.mxu0 0.0
    %3169 = vmatprep.subr.mxu0 0.0
    %3170 = vmatpush1.msra.mxu0 %v2576
    %3171 = vmatprep.subr.mxu0 0.0
    %3172 = vmatpush1.msra.mxu0 %v2575
    %3173 = vmatprep.subr.mxu0 0.0
    %3174 = vmatpush1.msra.mxu0 %v2574
    %3175 = vmatprep.subr.mxu0 0.0
    %3176 = vmatpush1.msra.mxu0 %v2573
    %3177 = vmatprep.subr.mxu0 0.0
    %3178 = vmatpush2.msra.mxu0 0.0
    %3179 = vmatprep.subr.mxu0 0.0
    %3180 = vmatpush2.msra.mxu0 0.0
    %3181 = vmatprep.subr.mxu0 0.0
    %3182 = vmatpush2.msra.mxu0 0.0
    %3183 = vmatprep.subr.mxu0 0.0
    %3184 = vmatpush2.msra.mxu0 0.0
    %3185 = vmatprep.subr.mxu0 0.0
    %3186 = vmatpush2.msra.mxu0 0.0
    %3187 = vmatprep.subr.mxu0 0.0
    %3188 = vmatpush2.msra.mxu0 0.0
    %3189 = vmatprep.subr.mxu0 0.0
    %3190 = vmatpush2.msra.mxu0 0.0
    %3191 = vmatprep.subr.mxu0 0.0
    %3192 = vmatpush2.msra.mxu0 0.0
    %3193 = vmatprep.subr.mxu0 0.0
    %3194 = vmatpush2.msra.mxu0 0.0
    %3195 = vmatprep.subr.mxu0 0.0
    %3196 = vmatpush2.msra.mxu0 0.0
    %3197 = vmatprep.subr.mxu0 0.0
    %3198 = vmatpush2.msra.mxu0 0.0
    %3199 = vmatprep.subr.mxu0 0.0
    %3200 = vmatpush2.msra.mxu0 0.0
    %3201 = vmatprep.subr.mxu0 0.0
    %3202 = vmatpush2.msra.mxu0 0.0
    %3203 = vmatprep.subr.mxu0 0.0
    %3204 = vmatpush2.msra.mxu0 0.0
    %3205 = vmatprep.subr.mxu0 0.0
    %3206 = vmatpush2.msra.mxu0 0.0
    %3207 = vmatprep.subr.mxu0 0.0
    %3208 = vmatpush2.msra.mxu0 0.0
    %3209 = vmatprep.mubr.f32.mxu0 0.0
    %3210 = vmatmul.mubr.f32.gmra.mxu0 %v3143
    %v3211 = vpop.f32.mrf.mxu0
    %v3212 = vadd.f32 0.0, %v3211
    %v3213 = vpop.f32.mrf.mxu0
    %3214 = vdwg.mxu0
    %3216 = vrot.lane.b32.xlu0 %v3139, 96
    %v3217 = vpop.permute.xlu0 %3216
    %v3218 = vsel %vm283, %v3217, 0
    %3220 = vmatprep.subr.mxu0 0.0
    %3221 = vmatpush1.msra.mxu0 0.0
    %3222 = vmatprep.subr.mxu0 0.0
    %3223 = vmatpush1.msra.mxu0 0.0
    %3224 = vmatprep.subr.mxu0 0.0
    %3225 = vmatpush1.msra.mxu0 0.0
    %3226 = vmatprep.subr.mxu0 0.0
    %3227 = vmatpush1.msra.mxu0 0.0
    %3228 = vmatprep.subr.mxu0 0.0
    %3229 = vmatpush1.msra.mxu0 0.0
    %3230 = vmatprep.subr.mxu0 0.0
    %3231 = vmatpush1.msra.mxu0 0.0
    %3232 = vmatprep.subr.mxu0 0.0
    %3233 = vmatpush1.msra.mxu0 0.0
    %3234 = vmatprep.subr.mxu0 0.0
    %3235 = vmatpush1.msra.mxu0 0.0
    %3236 = vmatprep.subr.mxu0 0.0
    %3237 = vmatpush1.msra.mxu0 0.0
    %3238 = vmatprep.subr.mxu0 0.0
    %3239 = vmatpush1.msra.mxu0 0.0
    %3240 = vmatprep.subr.mxu0 0.0
    %3241 = vmatpush1.msra.mxu0 0.0
    %3242 = vmatprep.subr.mxu0 0.0
    %3243 = vmatpush1.msra.mxu0 0.0
    %3244 = vmatprep.subr.mxu0 0.0
    %3245 = vmatpush1.msra.mxu0 %v2581
    %3246 = vmatprep.subr.mxu0 0.0
    %3247 = vmatpush1.msra.mxu0 %v2580
    %3248 = vmatprep.subr.mxu0 0.0
    %3249 = vmatpush1.msra.mxu0 %v2579
    %3250 = vmatprep.subr.mxu0 0.0
    %3251 = vmatpush1.msra.mxu0 %v2578
    %3252 = vmatprep.subr.mxu0 0.0
    %3253 = vmatpush2.msra.mxu0 0.0
    %3254 = vmatprep.subr.mxu0 0.0
    %3255 = vmatpush2.msra.mxu0 0.0
    %3256 = vmatprep.subr.mxu0 0.0
    %3257 = vmatpush2.msra.mxu0 0.0
    %3258 = vmatprep.subr.mxu0 0.0
    %3259 = vmatpush2.msra.mxu0 0.0
    %3260 = vmatprep.subr.mxu0 0.0
    %3261 = vmatpush2.msra.mxu0 0.0
    %3262 = vmatprep.subr.mxu0 0.0
    %3263 = vmatpush2.msra.mxu0 0.0
    %3264 = vmatprep.subr.mxu0 0.0
    %3265 = vmatpush2.msra.mxu0 0.0
    %3266 = vmatprep.subr.mxu0 0.0
    %3267 = vmatpush2.msra.mxu0 0.0
    %3268 = vmatprep.subr.mxu0 0.0
    %3269 = vmatpush2.msra.mxu0 0.0
    %3270 = vmatprep.subr.mxu0 0.0
    %3271 = vmatpush2.msra.mxu0 0.0
    %3272 = vmatprep.subr.mxu0 0.0
    %3273 = vmatpush2.msra.mxu0 0.0
    %3274 = vmatprep.subr.mxu0 0.0
    %3275 = vmatpush2.msra.mxu0 0.0
    %3276 = vmatprep.subr.mxu0 0.0
    %3277 = vmatpush2.msra.mxu0 0.0
    %3278 = vmatprep.subr.mxu0 0.0
    %3279 = vmatpush2.msra.mxu0 0.0
    %3280 = vmatprep.subr.mxu0 0.0
    %3281 = vmatpush2.msra.mxu0 0.0
    %3282 = vmatprep.subr.mxu0 0.0
    %3283 = vmatpush2.msra.mxu0 0.0
    %3284 = vmatprep.mubr.f32.mxu0 0.0
    %3285 = vmatmul.mubr.f32.gmra.mxu0 %v3218
    %v3286 = vpop.f32.mrf.mxu0
    %v3287 = vadd.f32 0.0, %v3286
    %v3288 = vpop.f32.mrf.mxu0
    %3289 = vdwg.mxu0
    %v3290 = vld [vmem:[#allocation3 + $0x18] sm:$0xff]
    %v3291 = vadd.f32 %v3290, %v3212
    %v3292 = vadd.f32 %v3212, %v2799
    %v3293 = vxor.u32 %v3291, 2147483648
    %v3294 = vmul.f32 %v3293, 1.442695
    %v3295 = vpow.pop %v3294
    %v3296 = vadd.f32 %v3295, 1.0
    %v3297 = vrcp.pop %v3296
    %v3298 = vmul.f32 1.0, %v3297
    %3300 = vrot.lane.b32.xlu0 %v3292, 64
    %v3301 = vpop.permute.xlu0 %3300
    %v3303 = vmul.f32 %v3298, %v3301
    %3305 = vrot.lane.b32.xlu0 %v3303, 64
    %v3306 = vpop.permute.xlu0 %3305
    %v3308 = vadd.f32 %v3290, %v3306
    %v3309 = vtanh.pop %v3308
    %v3310 = vld [vmem:[%s1064] sm:$0xff]
    %3312 = vrot.lane.b32.xlu0 %v3309, 96
    %v3313 = vpop.permute.xlu0 %3312
    %v3315 = vsub.f32 %v3092, %v3313
    %v3316 = vmul.f32 %v3298, %v3315
    %3318 = vrot.lane.b32.xlu0 %v3316, 32
    %v3319 = vpop.permute.xlu0 %3318
    %v3321 = vadd.f32 %v3309, %v3319
    %3322 = vrot.lane.b32.xlu0 %v3092, 32
    %v3323 = vpop.permute.xlu0 %3322
    %v3325 = vsub.f32 %v3321, %v3323
    %3327 = vset.pattern.permute.xlu0 0
    %3328 = vperm.xlu0 %3327, %v3310
    %v3329 = vpop.permute.xlu0 %3328
    %v3331 = vmul.f32 %v3329, %v3325
    %3333 = vrot.lane.b32.xlu0 %v3331, 96
    %v3334 = vpop.permute.xlu0 %3333
    %v3336 = vadd.f32 %v3092, %v3334
    %v3337 = vld [vmem:[%s300 + $0x20] sm:$0xff]
    %v3338 = vadd.f32 %v3337, %v3287
    %v3339 = vadd.f32 %v3287, %v2849
    %v3340 = vxor.u32 %v3338, 2147483648
    %v3341 = vmul.f32 %v3340, 1.442695
    %v3342 = vpow.pop %v3341
    %v3343 = vadd.f32 %v3342, 1.0
    %v3344 = vrcp.pop %v3343
    %v3345 = vmul.f32 1.0, %v3344
    %3347 = vrot.lane.b32.xlu0 %v3339, 64
    %v3348 = vpop.permute.xlu0 %3347
    %v3350 = vmul.f32 %v3345, %v3348
    %3352 = vrot.lane.b32.xlu0 %v3350, 64
    %v3353 = vpop.permute.xlu0 %3352
    %v3355 = vadd.f32 %v3337, %v3353
    %v3356 = vtanh.pop %v3355
    %v3357 = vld [vmem:[%s1117] sm:$0xff]
    %3359 = vrot.lane.b32.xlu0 %v3356, 96
    %v3360 = vpop.permute.xlu0 %3359
    %v3362 = vsub.f32 %v3139, %v3360
    %v3363 = vmul.f32 %v3345, %v3362
    %3365 = vrot.lane.b32.xlu0 %v3363, 32
    %v3366 = vpop.permute.xlu0 %3365
    %v3368 = vadd.f32 %v3356, %v3366
    %3369 = vrot.lane.b32.xlu0 %v3139, 32
    %v3370 = vpop.permute.xlu0 %3369
    %v3372 = vsub.f32 %v3368, %v3370
    %3374 = vset.pattern.permute.xlu0 0
    %3375 = vperm.xlu0 %3374, %v3357
    %v3376 = vpop.permute.xlu0 %3375
    %v3378 = vmul.f32 %v3376, %v3372
    %3380 = vrot.lane.b32.xlu0 %v3378, 96
    %v3381 = vpop.permute.xlu0 %3380
    %v3383 = vadd.f32 %v3139, %v3381
    %3385 = vrot.lane.b32.xlu0 %v3336, 96
    %v3386 = vpop.permute.xlu0 %3385
    %v3387 = vsel %vm283, %v3386, 0
    %3389 = vmatprep.subr.mxu0 0.0
    %3390 = vmatpush1.msra.mxu0 0.0
    %3391 = vmatprep.subr.mxu0 0.0
    %3392 = vmatpush1.msra.mxu0 0.0
    %3393 = vmatprep.subr.mxu0 0.0
    %3394 = vmatpush1.msra.mxu0 0.0
    %3395 = vmatprep.subr.mxu0 0.0
    %3396 = vmatpush1.msra.mxu0 0.0
    %3397 = vmatprep.subr.mxu0 0.0
    %3398 = vmatpush1.msra.mxu0 0.0
    %3399 = vmatprep.subr.mxu0 0.0
    %3400 = vmatpush1.msra.mxu0 0.0
    %3401 = vmatprep.subr.mxu0 0.0
    %3402 = vmatpush1.msra.mxu0 0.0
    %3403 = vmatprep.subr.mxu0 0.0
    %3404 = vmatpush1.msra.mxu0 0.0
    %3405 = vmatprep.subr.mxu0 0.0
    %3406 = vmatpush1.msra.mxu0 0.0
    %3407 = vmatprep.subr.mxu0 0.0
    %3408 = vmatpush1.msra.mxu0 0.0
    %3409 = vmatprep.subr.mxu0 0.0
    %3410 = vmatpush1.msra.mxu0 0.0
    %3411 = vmatprep.subr.mxu0 0.0
    %3412 = vmatpush1.msra.mxu0 0.0
    %3413 = vmatprep.subr.mxu0 0.0
    %3414 = vmatpush1.msra.mxu0 %v2576
    %3415 = vmatprep.subr.mxu0 0.0
    %3416 = vmatpush1.msra.mxu0 %v2575
    %3417 = vmatprep.subr.mxu0 0.0
    %3418 = vmatpush1.msra.mxu0 %v2574
    %3419 = vmatprep.subr.mxu0 0.0
    %3420 = vmatpush1.msra.mxu0 %v2573
    %3421 = vmatprep.subr.mxu0 0.0
    %3422 = vmatpush2.msra.mxu0 0.0
    %3423 = vmatprep.subr.mxu0 0.0
    %3424 = vmatpush2.msra.mxu0 0.0
    %3425 = vmatprep.subr.mxu0 0.0
    %3426 = vmatpush2.msra.mxu0 0.0
    %3427 = vmatprep.subr.mxu0 0.0
    %3428 = vmatpush2.msra.mxu0 0.0
    %3429 = vmatprep.subr.mxu0 0.0
    %3430 = vmatpush2.msra.mxu0 0.0
    %3431 = vmatprep.subr.mxu0 0.0
    %3432 = vmatpush2.msra.mxu0 0.0
    %3433 = vmatprep.subr.mxu0 0.0
    %3434 = vmatpush2.msra.mxu0 0.0
    %3435 = vmatprep.subr.mxu0 0.0
    %3436 = vmatpush2.msra.mxu0 0.0
    %3437 = vmatprep.subr.mxu0 0.0
    %3438 = vmatpush2.msra.mxu0 0.0
    %3439 = vmatprep.subr.mxu0 0.0
    %3440 = vmatpush2.msra.mxu0 0.0
    %3441 = vmatprep.subr.mxu0 0.0
    %3442 = vmatpush2.msra.mxu0 0.0
    %3443 = vmatprep.subr.mxu0 0.0
    %3444 = vmatpush2.msra.mxu0 0.0
    %3445 = vmatprep.subr.mxu0 0.0
    %3446 = vmatpush2.msra.mxu0 0.0
    %3447 = vmatprep.subr.mxu0 0.0
    %3448 = vmatpush2.msra.mxu0 0.0
    %3449 = vmatprep.subr.mxu0 0.0
    %3450 = vmatpush2.msra.mxu0 0.0
    %3451 = vmatprep.subr.mxu0 0.0
    %3452 = vmatpush2.msra.mxu0 0.0
    %3453 = vmatprep.mubr.f32.mxu0 0.0
    %3454 = vmatmul.mubr.f32.gmra.mxu0 %v3387
    %v3455 = vpop.f32.mrf.mxu0
    %v3456 = vadd.f32 0.0, %v3455
    %v3457 = vpop.f32.mrf.mxu0
    %3458 = vdwg.mxu0
    %3460 = vrot.lane.b32.xlu0 %v3383, 96
    %v3461 = vpop.permute.xlu0 %3460
    %v3462 = vsel %vm283, %v3461, 0
    %3464 = vmatprep.subr.mxu0 0.0
    %3465 = vmatpush1.msra.mxu0 0.0
    %3466 = vmatprep.subr.mxu0 0.0
    %3467 = vmatpush1.msra.mxu0 0.0
    %3468 = vmatprep.subr.mxu0 0.0
    %3469 = vmatpush1.msra.mxu0 0.0
    %3470 = vmatprep.subr.mxu0 0.0
    %3471 = vmatpush1.msra.mxu0 0.0
    %3472 = vmatprep.subr.mxu0 0.0
    %3473 = vmatpush1.msra.mxu0 0.0
    %3474 = vmatprep.subr.mxu0 0.0
    %3475 = vmatpush1.msra.mxu0 0.0
    %3476 = vmatprep.subr.mxu0 0.0
    %3477 = vmatpush1.msra.mxu0 0.0
    %3478 = vmatprep.subr.mxu0 0.0
    %3479 = vmatpush1.msra.mxu0 0.0
    %3480 = vmatprep.subr.mxu0 0.0
    %3481 = vmatpush1.msra.mxu0 0.0
    %3482 = vmatprep.subr.mxu0 0.0
    %3483 = vmatpush1.msra.mxu0 0.0
    %3484 = vmatprep.subr.mxu0 0.0
    %3485 = vmatpush1.msra.mxu0 0.0
    %3486 = vmatprep.subr.mxu0 0.0
    %3487 = vmatpush1.msra.mxu0 0.0
    %3488 = vmatprep.subr.mxu0 0.0
    %3489 = vmatpush1.msra.mxu0 %v2581
    %3490 = vmatprep.subr.mxu0 0.0
    %3491 = vmatpush1.msra.mxu0 %v2580
    %3492 = vmatprep.subr.mxu0 0.0
    %3493 = vmatpush1.msra.mxu0 %v2579
    %3494 = vmatprep.subr.mxu0 0.0
    %3495 = vmatpush1.msra.mxu0 %v2578
    %3496 = vmatprep.subr.mxu0 0.0
    %3497 = vmatpush2.msra.mxu0 0.0
    %3498 = vmatprep.subr.mxu0 0.0
    %3499 = vmatpush2.msra.mxu0 0.0
    %3500 = vmatprep.subr.mxu0 0.0
    %3501 = vmatpush2.msra.mxu0 0.0
    %3502 = vmatprep.subr.mxu0 0.0
    %3503 = vmatpush2.msra.mxu0 0.0
    %3504 = vmatprep.subr.mxu0 0.0
    %3505 = vmatpush2.msra.mxu0 0.0
    %3506 = vmatprep.subr.mxu0 0.0
    %3507 = vmatpush2.msra.mxu0 0.0
    %3508 = vmatprep.subr.mxu0 0.0
    %3509 = vmatpush2.msra.mxu0 0.0
    %3510 = vmatprep.subr.mxu0 0.0
    %3511 = vmatpush2.msra.mxu0 0.0
    %3512 = vmatprep.subr.mxu0 0.0
    %3513 = vmatpush2.msra.mxu0 0.0
    %3514 = vmatprep.subr.mxu0 0.0
    %3515 = vmatpush2.msra.mxu0 0.0
    %3516 = vmatprep.subr.mxu0 0.0
    %3517 = vmatpush2.msra.mxu0 0.0
    %3518 = vmatprep.subr.mxu0 0.0
    %3519 = vmatpush2.msra.mxu0 0.0
    %3520 = vmatprep.subr.mxu0 0.0
    %3521 = vmatpush2.msra.mxu0 0.0
    %3522 = vmatprep.subr.mxu0 0.0
    %3523 = vmatpush2.msra.mxu0 0.0
    %3524 = vmatprep.subr.mxu0 0.0
    %3525 = vmatpush2.msra.mxu0 0.0
    %3526 = vmatprep.subr.mxu0 0.0
    %3527 = vmatpush2.msra.mxu0 0.0
    %3528 = vmatprep.mubr.f32.mxu0 0.0
    %3529 = vmatmul.mubr.f32.gmra.mxu0 %v3462
    %v3530 = vpop.f32.mrf.mxu0
    %v3531 = vadd.f32 0.0, %v3530
    %v3532 = vpop.f32.mrf.mxu0
    %3533 = vdwg.mxu0
    %v3534 = vld [vmem:[#allocation3 + $0x20] sm:$0xff]
    %v3535 = vadd.f32 %v3534, %v3456
    %v3536 = vadd.f32 %v3456, %v2799
    %v3537 = vxor.u32 %v3535, 2147483648
    %v3538 = vmul.f32 %v3537, 1.442695
    %v3539 = vpow.pop %v3538
    %v3540 = vadd.f32 %v3539, 1.0
    %v3541 = vrcp.pop %v3540
    %v3542 = vmul.f32 1.0, %v3541
    %3544 = vrot.lane.b32.xlu0 %v3536, 64
    %v3545 = vpop.permute.xlu0 %3544
    %v3547 = vmul.f32 %v3542, %v3545
    %3549 = vrot.lane.b32.xlu0 %v3547, 64
    %v3550 = vpop.permute.xlu0 %3549
    %v3552 = vadd.f32 %v3534, %v3550
    %v3553 = vtanh.pop %v3552
    %3555 = vrot.lane.b32.xlu0 %v3553, 96
    %v3556 = vpop.permute.xlu0 %3555
    %v3558 = vsub.f32 %v3336, %v3556
    %v3559 = vmul.f32 %v3542, %v3558
    %3561 = vrot.lane.b32.xlu0 %v3559, 32
    %v3562 = vpop.permute.xlu0 %3561
    %v3564 = vadd.f32 %v3553, %v3562
    %3565 = vrot.lane.b32.xlu0 %v3336, 32
    %v3566 = vpop.permute.xlu0 %3565
    %v3568 = vsub.f32 %v3564, %v3566
    %v3569 = vmul.f32 %v3376, %v3568
    %3571 = vrot.lane.b32.xlu0 %v3569, 96
    %v3572 = vpop.permute.xlu0 %3571
    %v3574 = vadd.f32 %v3336, %v3572
    %v3575 = vld [vmem:[%s300 + $0x18] sm:$0xff]
    %v3576 = vadd.f32 %v3575, %v3531
    %v3577 = vadd.f32 %v3531, %v2849
    %v3578 = vxor.u32 %v3576, 2147483648
    %v3579 = vmul.f32 %v3578, 1.442695
    %v3580 = vpow.pop %v3579
    %v3581 = vadd.f32 %v3580, 1.0
    %v3582 = vrcp.pop %v3581
    %v3583 = vmul.f32 1.0, %v3582
    %3585 = vrot.lane.b32.xlu0 %v3577, 64
    %v3586 = vpop.permute.xlu0 %3585
    %v3588 = vmul.f32 %v3583, %v3586
    %3590 = vrot.lane.b32.xlu0 %v3588, 64
    %v3591 = vpop.permute.xlu0 %3590
    %v3593 = vadd.f32 %v3575, %v3591
    %v3594 = vtanh.pop %v3593
    %3596 = vrot.lane.b32.xlu0 %v3594, 96
    %v3597 = vpop.permute.xlu0 %3596
    %v3599 = vsub.f32 %v3383, %v3597
    %v3600 = vmul.f32 %v3583, %v3599
    %3602 = vrot.lane.b32.xlu0 %v3600, 32
    %v3603 = vpop.permute.xlu0 %3602
    %v3605 = vadd.f32 %v3594, %v3603
    %3606 = vrot.lane.b32.xlu0 %v3383, 32
    %v3607 = vpop.permute.xlu0 %3606
    %v3609 = vsub.f32 %v3605, %v3607
    %v3610 = vmul.f32 %v3329, %v3609
    %3612 = vrot.lane.b32.xlu0 %v3610, 96
    %v3613 = vpop.permute.xlu0 %3612
    %v3615 = vadd.f32 %v3383, %v3613
    %3617 = vrot.lane.b32.xlu0 %v3574, 96
    %v3618 = vpop.permute.xlu0 %3617
    %v3619 = vsel %vm283, %v3618, 0
    %3621 = vmatprep.subr.mxu0 0.0
    %3622 = vmatpush1.msra.mxu0 0.0
    %3623 = vmatprep.subr.mxu0 0.0
    %3624 = vmatpush1.msra.mxu0 0.0
    %3625 = vmatprep.subr.mxu0 0.0
    %3626 = vmatpush1.msra.mxu0 0.0
    %3627 = vmatprep.subr.mxu0 0.0
    %3628 = vmatpush1.msra.mxu0 0.0
    %3629 = vmatprep.subr.mxu0 0.0
    %3630 = vmatpush1.msra.mxu0 0.0
    %3631 = vmatprep.subr.mxu0 0.0
    %3632 = vmatpush1.msra.mxu0 0.0
    %3633 = vmatprep.subr.mxu0 0.0
    %3634 = vmatpush1.msra.mxu0 0.0
    %3635 = vmatprep.subr.mxu0 0.0
    %3636 = vmatpush1.msra.mxu0 0.0
    %3637 = vmatprep.subr.mxu0 0.0
    %3638 = vmatpush1.msra.mxu0 0.0
    %3639 = vmatprep.subr.mxu0 0.0
    %3640 = vmatpush1.msra.mxu0 0.0
    %3641 = vmatprep.subr.mxu0 0.0
    %3642 = vmatpush1.msra.mxu0 0.0
    %3643 = vmatprep.subr.mxu0 0.0
    %3644 = vmatpush1.msra.mxu0 0.0
    %3645 = vmatprep.subr.mxu0 0.0
    %3646 = vmatpush1.msra.mxu0 %v2576
    %3647 = vmatprep.subr.mxu0 0.0
    %3648 = vmatpush1.msra.mxu0 %v2575
    %3649 = vmatprep.subr.mxu0 0.0
    %3650 = vmatpush1.msra.mxu0 %v2574
    %3651 = vmatprep.subr.mxu0 0.0
    %3652 = vmatpush1.msra.mxu0 %v2573
    %3653 = vmatprep.subr.mxu0 0.0
    %3654 = vmatpush2.msra.mxu0 0.0
    %3655 = vmatprep.subr.mxu0 0.0
    %3656 = vmatpush2.msra.mxu0 0.0
    %3657 = vmatprep.subr.mxu0 0.0
    %3658 = vmatpush2.msra.mxu0 0.0
    %3659 = vmatprep.subr.mxu0 0.0
    %3660 = vmatpush2.msra.mxu0 0.0
    %3661 = vmatprep.subr.mxu0 0.0
    %3662 = vmatpush2.msra.mxu0 0.0
    %3663 = vmatprep.subr.mxu0 0.0
    %3664 = vmatpush2.msra.mxu0 0.0
    %3665 = vmatprep.subr.mxu0 0.0
    %3666 = vmatpush2.msra.mxu0 0.0
    %3667 = vmatprep.subr.mxu0 0.0
    %3668 = vmatpush2.msra.mxu0 0.0
    %3669 = vmatprep.subr.mxu0 0.0
    %3670 = vmatpush2.msra.mxu0 0.0
    %3671 = vmatprep.subr.mxu0 0.0
    %3672 = vmatpush2.msra.mxu0 0.0
    %3673 = vmatprep.subr.mxu0 0.0
    %3674 = vmatpush2.msra.mxu0 0.0
    %3675 = vmatprep.subr.mxu0 0.0
    %3676 = vmatpush2.msra.mxu0 0.0
    %3677 = vmatprep.subr.mxu0 0.0
    %3678 = vmatpush2.msra.mxu0 0.0
    %3679 = vmatprep.subr.mxu0 0.0
    %3680 = vmatpush2.msra.mxu0 0.0
    %3681 = vmatprep.subr.mxu0 0.0
    %3682 = vmatpush2.msra.mxu0 0.0
    %3683 = vmatprep.subr.mxu0 0.0
    %3684 = vmatpush2.msra.mxu0 0.0
    %3685 = vmatprep.mubr.f32.mxu0 0.0
    %3686 = vmatmul.mubr.f32.gmra.mxu0 %v3619
    %v3687 = vpop.f32.mrf.mxu0
    %v3688 = vadd.f32 0.0, %v3687
    %v3689 = vpop.f32.mrf.mxu0
    %3690 = vdwg.mxu0
    %3692 = vrot.lane.b32.xlu0 %v3615, 96
    %v3693 = vpop.permute.xlu0 %3692
    %v3694 = vsel %vm283, %v3693, 0
    %3696 = vmatprep.subr.mxu0 0.0
    %3697 = vmatpush1.msra.mxu0 0.0
    %3698 = vmatprep.subr.mxu0 0.0
    %3699 = vmatpush1.msra.mxu0 0.0
    %3700 = vmatprep.subr.mxu0 0.0
    %3701 = vmatpush1.msra.mxu0 0.0
    %3702 = vmatprep.subr.mxu0 0.0
    %3703 = vmatpush1.msra.mxu0 0.0
    %3704 = vmatprep.subr.mxu0 0.0
    %3705 = vmatpush1.msra.mxu0 0.0
    %3706 = vmatprep.subr.mxu0 0.0
    %3707 = vmatpush1.msra.mxu0 0.0
    %3708 = vmatprep.subr.mxu0 0.0
    %3709 = vmatpush1.msra.mxu0 0.0
    %3710 = vmatprep.subr.mxu0 0.0
    %3711 = vmatpush1.msra.mxu0 0.0
    %3712 = vmatprep.subr.mxu0 0.0
    %3713 = vmatpush1.msra.mxu0 0.0
    %3714 = vmatprep.subr.mxu0 0.0
    %3715 = vmatpush1.msra.mxu0 0.0
    %3716 = vmatprep.subr.mxu0 0.0
    %3717 = vmatpush1.msra.mxu0 0.0
    %3718 = vmatprep.subr.mxu0 0.0
    %3719 = vmatpush1.msra.mxu0 0.0
    %3720 = vmatprep.subr.mxu0 0.0
    %3721 = vmatpush1.msra.mxu0 %v2581
    %3722 = vmatprep.subr.mxu0 0.0
    %3723 = vmatpush1.msra.mxu0 %v2580
    %3724 = vmatprep.subr.mxu0 0.0
    %3725 = vmatpush1.msra.mxu0 %v2579
    %3726 = vmatprep.subr.mxu0 0.0
    %3727 = vmatpush1.msra.mxu0 %v2578
    %3728 = vmatprep.subr.mxu0 0.0
    %3729 = vmatpush2.msra.mxu0 0.0
    %3730 = vmatprep.subr.mxu0 0.0
    %3731 = vmatpush2.msra.mxu0 0.0
    %3732 = vmatprep.subr.mxu0 0.0
    %3733 = vmatpush2.msra.mxu0 0.0
    %3734 = vmatprep.subr.mxu0 0.0
    %3735 = vmatpush2.msra.mxu0 0.0
    %3736 = vmatprep.subr.mxu0 0.0
    %3737 = vmatpush2.msra.mxu0 0.0
    %3738 = vmatprep.subr.mxu0 0.0
    %3739 = vmatpush2.msra.mxu0 0.0
    %3740 = vmatprep.subr.mxu0 0.0
    %3741 = vmatpush2.msra.mxu0 0.0
    %3742 = vmatprep.subr.mxu0 0.0
    %3743 = vmatpush2.msra.mxu0 0.0
    %3744 = vmatprep.subr.mxu0 0.0
    %3745 = vmatpush2.msra.mxu0 0.0
    %3746 = vmatprep.subr.mxu0 0.0
    %3747 = vmatpush2.msra.mxu0 0.0
    %3748 = vmatprep.subr.mxu0 0.0
    %3749 = vmatpush2.msra.mxu0 0.0
    %3750 = vmatprep.subr.mxu0 0.0
    %3751 = vmatpush2.msra.mxu0 0.0
    %3752 = vmatprep.subr.mxu0 0.0
    %3753 = vmatpush2.msra.mxu0 0.0
    %3754 = vmatprep.subr.mxu0 0.0
    %3755 = vmatpush2.msra.mxu0 0.0
    %3756 = vmatprep.subr.mxu0 0.0
    %3757 = vmatpush2.msra.mxu0 0.0
    %3758 = vmatprep.subr.mxu0 0.0
    %3759 = vmatpush2.msra.mxu0 0.0
    %3760 = vmatprep.mubr.f32.mxu0 0.0
    %3761 = vmatmul.mubr.f32.gmra.mxu0 %v3694
    %v3762 = vpop.f32.mrf.mxu0
    %v3763 = vadd.f32 0.0, %v3762
    %v3764 = vpop.f32.mrf.mxu0
    %3765 = vdwg.mxu0
    %v3766 = vld [vmem:[#allocation3 + $0x28] sm:$0xff]
    %v3767 = vadd.f32 %v3766, %v3688
    %v3768 = vadd.f32 %v3688, %v2799
    %v3769 = vxor.u32 %v3767, 2147483648
    %v3770 = vmul.f32 %v3769, 1.442695
    %v3771 = vpow.pop %v3770
    %v3772 = vadd.f32 %v3771, 1.0
    %v3773 = vrcp.pop %v3772
    %v3774 = vmul.f32 1.0, %v3773
    %3776 = vrot.lane.b32.xlu0 %v3768, 64
    %v3777 = vpop.permute.xlu0 %3776
    %v3779 = vmul.f32 %v3774, %v3777
    %3781 = vrot.lane.b32.xlu0 %v3779, 64
    %v3782 = vpop.permute.xlu0 %3781
    %v3784 = vadd.f32 %v3766, %v3782
    %v3785 = vtanh.pop %v3784
    %3787 = vrot.lane.b32.xlu0 %v3785, 96
    %v3788 = vpop.permute.xlu0 %3787
    %v3790 = vsub.f32 %v3574, %v3788
    %v3791 = vmul.f32 %v3774, %v3790
    %3793 = vrot.lane.b32.xlu0 %v3791, 32
    %v3794 = vpop.permute.xlu0 %3793
    %v3796 = vadd.f32 %v3785, %v3794
    %3797 = vrot.lane.b32.xlu0 %v3574, 32
    %v3798 = vpop.permute.xlu0 %3797
    %v3800 = vsub.f32 %v3796, %v3798
    %v3801 = vmul.f32 %v3132, %v3800
    %3803 = vrot.lane.b32.xlu0 %v3801, 96
    %v3804 = vpop.permute.xlu0 %3803
    %v3806 = vadd.f32 %v3574, %v3804
    %v3807 = vld [vmem:[%s300 + $0x10] sm:$0xff]
    %v3808 = vadd.f32 %v3807, %v3763
    %v3809 = vadd.f32 %v3763, %v2849
    %v3810 = vxor.u32 %v3808, 2147483648
    %v3811 = vmul.f32 %v3810, 1.442695
    %v3812 = vpow.pop %v3811
    %v3813 = vadd.f32 %v3812, 1.0
    %v3814 = vrcp.pop %v3813
    %v3815 = vmul.f32 1.0, %v3814
    %3817 = vrot.lane.b32.xlu0 %v3809, 64
    %v3818 = vpop.permute.xlu0 %3817
    %v3820 = vmul.f32 %v3815, %v3818
    %3822 = vrot.lane.b32.xlu0 %v3820, 64
    %v3823 = vpop.permute.xlu0 %3822
    %v3825 = vadd.f32 %v3807, %v3823
    %v3826 = vtanh.pop %v3825
    %3828 = vrot.lane.b32.xlu0 %v3826, 96
    %v3829 = vpop.permute.xlu0 %3828
    %v3831 = vsub.f32 %v3615, %v3829
    %v3832 = vmul.f32 %v3815, %v3831
    %3834 = vrot.lane.b32.xlu0 %v3832, 32
    %v3835 = vpop.permute.xlu0 %3834
    %v3837 = vadd.f32 %v3826, %v3835
    %3838 = vrot.lane.b32.xlu0 %v3615, 32
    %v3839 = vpop.permute.xlu0 %3838
    %v3841 = vsub.f32 %v3837, %v3839
    %v3842 = vmul.f32 %v3085, %v3841
    %3844 = vrot.lane.b32.xlu0 %v3842, 96
    %v3845 = vpop.permute.xlu0 %3844
    %v3847 = vadd.f32 %v3615, %v3845
    %3849 = vrot.lane.b32.xlu0 %v3806, 96
    %v3850 = vpop.permute.xlu0 %3849
    %v3851 = vsel %vm283, %v3850, 0
    %3853 = vmatprep.subr.mxu0 0.0
    %3854 = vmatpush1.msra.mxu0 0.0
    %3855 = vmatprep.subr.mxu0 0.0
    %3856 = vmatpush1.msra.mxu0 0.0
    %3857 = vmatprep.subr.mxu0 0.0
    %3858 = vmatpush1.msra.mxu0 0.0
    %3859 = vmatprep.subr.mxu0 0.0
    %3860 = vmatpush1.msra.mxu0 0.0
    %3861 = vmatprep.subr.mxu0 0.0
    %3862 = vmatpush1.msra.mxu0 0.0
    %3863 = vmatprep.subr.mxu0 0.0
    %3864 = vmatpush1.msra.mxu0 0.0
    %3865 = vmatprep.subr.mxu0 0.0
    %3866 = vmatpush1.msra.mxu0 0.0
    %3867 = vmatprep.subr.mxu0 0.0
    %3868 = vmatpush1.msra.mxu0 0.0
    %3869 = vmatprep.subr.mxu0 0.0
    %3870 = vmatpush1.msra.mxu0 0.0
    %3871 = vmatprep.subr.mxu0 0.0
    %3872 = vmatpush1.msra.mxu0 0.0
    %3873 = vmatprep.subr.mxu0 0.0
    %3874 = vmatpush1.msra.mxu0 0.0
    %3875 = vmatprep.subr.mxu0 0.0
    %3876 = vmatpush1.msra.mxu0 0.0
    %3877 = vmatprep.subr.mxu0 0.0
    %3878 = vmatpush1.msra.mxu0 %v2576
    %3879 = vmatprep.subr.mxu0 0.0
    %3880 = vmatpush1.msra.mxu0 %v2575
    %3881 = vmatprep.subr.mxu0 0.0
    %3882 = vmatpush1.msra.mxu0 %v2574
    %3883 = vmatprep.subr.mxu0 0.0
    %3884 = vmatpush1.msra.mxu0 %v2573
    %3885 = vmatprep.subr.mxu0 0.0
    %3886 = vmatpush2.msra.mxu0 0.0
    %3887 = vmatprep.subr.mxu0 0.0
    %3888 = vmatpush2.msra.mxu0 0.0
    %3889 = vmatprep.subr.mxu0 0.0
    %3890 = vmatpush2.msra.mxu0 0.0
    %3891 = vmatprep.subr.mxu0 0.0
    %3892 = vmatpush2.msra.mxu0 0.0
    %3893 = vmatprep.subr.mxu0 0.0
    %3894 = vmatpush2.msra.mxu0 0.0
    %3895 = vmatprep.subr.mxu0 0.0
    %3896 = vmatpush2.msra.mxu0 0.0
    %3897 = vmatprep.subr.mxu0 0.0
    %3898 = vmatpush2.msra.mxu0 0.0
    %3899 = vmatprep.subr.mxu0 0.0
    %3900 = vmatpush2.msra.mxu0 0.0
    %3901 = vmatprep.subr.mxu0 0.0
    %3902 = vmatpush2.msra.mxu0 0.0
    %3903 = vmatprep.subr.mxu0 0.0
    %3904 = vmatpush2.msra.mxu0 0.0
    %3905 = vmatprep.subr.mxu0 0.0
    %3906 = vmatpush2.msra.mxu0 0.0
    %3907 = vmatprep.subr.mxu0 0.0
    %3908 = vmatpush2.msra.mxu0 0.0
    %3909 = vmatprep.subr.mxu0 0.0
    %3910 = vmatpush2.msra.mxu0 0.0
    %3911 = vmatprep.subr.mxu0 0.0
    %3912 = vmatpush2.msra.mxu0 0.0
    %3913 = vmatprep.subr.mxu0 0.0
    %3914 = vmatpush2.msra.mxu0 0.0
    %3915 = vmatprep.subr.mxu0 0.0
    %3916 = vmatpush2.msra.mxu0 0.0
    %3917 = vmatprep.mubr.f32.mxu0 0.0
    %3918 = vmatmul.mubr.f32.gmra.mxu0 %v3851
    %v3919 = vpop.f32.mrf.mxu0
    %v3920 = vadd.f32 0.0, %v3919
    %v3921 = vpop.f32.mrf.mxu0
    %3922 = vdwg.mxu0
    %3924 = vrot.lane.b32.xlu0 %v3847, 96
    %v3925 = vpop.permute.xlu0 %3924
    %v3926 = vsel %vm283, %v3925, 0
    %3928 = vmatprep.subr.mxu0 0.0
    %3929 = vmatpush1.msra.mxu0 0.0
    %3930 = vmatprep.subr.mxu0 0.0
    %3931 = vmatpush1.msra.mxu0 0.0
    %3932 = vmatprep.subr.mxu0 0.0
    %3933 = vmatpush1.msra.mxu0 0.0
    %3934 = vmatprep.subr.mxu0 0.0
    %3935 = vmatpush1.msra.mxu0 0.0
    %3936 = vmatprep.subr.mxu0 0.0
    %3937 = vmatpush1.msra.mxu0 0.0
    %3938 = vmatprep.subr.mxu0 0.0
    %3939 = vmatpush1.msra.mxu0 0.0
    %3940 = vmatprep.subr.mxu0 0.0
    %3941 = vmatpush1.msra.mxu0 0.0
    %3942 = vmatprep.subr.mxu0 0.0
    %3943 = vmatpush1.msra.mxu0 0.0
    %3944 = vmatprep.subr.mxu0 0.0
    %3945 = vmatpush1.msra.mxu0 0.0
    %3946 = vmatprep.subr.mxu0 0.0
    %3947 = vmatpush1.msra.mxu0 0.0
    %3948 = vmatprep.subr.mxu0 0.0
    %3949 = vmatpush1.msra.mxu0 0.0
    %3950 = vmatprep.subr.mxu0 0.0
    %3951 = vmatpush1.msra.mxu0 0.0
    %3952 = vmatprep.subr.mxu0 0.0
    %3953 = vmatpush1.msra.mxu0 %v2581
    %3954 = vmatprep.subr.mxu0 0.0
    %3955 = vmatpush1.msra.mxu0 %v2580
    %3956 = vmatprep.subr.mxu0 0.0
    %3957 = vmatpush1.msra.mxu0 %v2579
    %3958 = vmatprep.subr.mxu0 0.0
    %3959 = vmatpush1.msra.mxu0 %v2578
    %3960 = vmatprep.subr.mxu0 0.0
    %3961 = vmatpush2.msra.mxu0 0.0
    %3962 = vmatprep.subr.mxu0 0.0
    %3963 = vmatpush2.msra.mxu0 0.0
    %3964 = vmatprep.subr.mxu0 0.0
    %3965 = vmatpush2.msra.mxu0 0.0
    %3966 = vmatprep.subr.mxu0 0.0
    %3967 = vmatpush2.msra.mxu0 0.0
    %3968 = vmatprep.subr.mxu0 0.0
    %3969 = vmatpush2.msra.mxu0 0.0
    %3970 = vmatprep.subr.mxu0 0.0
    %3971 = vmatpush2.msra.mxu0 0.0
    %3972 = vmatprep.subr.mxu0 0.0
    %3973 = vmatpush2.msra.mxu0 0.0
    %3974 = vmatprep.subr.mxu0 0.0
    %3975 = vmatpush2.msra.mxu0 0.0
    %3976 = vmatprep.subr.mxu0 0.0
    %3977 = vmatpush2.msra.mxu0 0.0
    %3978 = vmatprep.subr.mxu0 0.0
    %3979 = vmatpush2.msra.mxu0 0.0
    %3980 = vmatprep.subr.mxu0 0.0
    %3981 = vmatpush2.msra.mxu0 0.0
    %3982 = vmatprep.subr.mxu0 0.0
    %3983 = vmatpush2.msra.mxu0 0.0
    %3984 = vmatprep.subr.mxu0 0.0
    %3985 = vmatpush2.msra.mxu0 0.0
    %3986 = vmatprep.subr.mxu0 0.0
    %3987 = vmatpush2.msra.mxu0 0.0
    %3988 = vmatprep.subr.mxu0 0.0
    %3989 = vmatpush2.msra.mxu0 0.0
    %3990 = vmatprep.subr.mxu0 0.0
    %3991 = vmatpush2.msra.mxu0 0.0
    %3992 = vmatprep.mubr.f32.mxu0 0.0
    %3993 = vmatmul.mubr.f32.gmra.mxu0 %v3926
    %v3994 = vpop.f32.mrf.mxu0
    %v3995 = vadd.f32 0.0, %v3994
    %v3996 = vpop.f32.mrf.mxu0
    %3997 = vdwg.mxu0
    %v3998 = vld [vmem:[#allocation3 + $0x30] sm:$0xff]
    %v3999 = vadd.f32 %v3998, %v3920
    %v4000 = vadd.f32 %v3920, %v2799
    %v4001 = vxor.u32 %v3999, 2147483648
    %v4002 = vmul.f32 %v4001, 1.442695
    %v4003 = vpow.pop %v4002
    %v4004 = vadd.f32 %v4003, 1.0
    %v4005 = vrcp.pop %v4004
    %v4006 = vmul.f32 1.0, %v4005
    %4008 = vrot.lane.b32.xlu0 %v4000, 64
    %v4009 = vpop.permute.xlu0 %4008
    %v4011 = vmul.f32 %v4006, %v4009
    %4013 = vrot.lane.b32.xlu0 %v4011, 64
    %v4014 = vpop.permute.xlu0 %4013
    %v4016 = vadd.f32 %v3998, %v4014
    %v4017 = vtanh.pop %v4016
    %4019 = vrot.lane.b32.xlu0 %v4017, 96
    %v4020 = vpop.permute.xlu0 %4019
    %v4022 = vsub.f32 %v3806, %v4020
    %v4023 = vmul.f32 %v4006, %v4022
    %4025 = vrot.lane.b32.xlu0 %v4023, 32
    %v4026 = vpop.permute.xlu0 %4025
    %v4028 = vadd.f32 %v4017, %v4026
    %4029 = vrot.lane.b32.xlu0 %v3806, 32
    %v4030 = vpop.permute.xlu0 %4029
    %v4032 = vsub.f32 %v4028, %v4030
    %v4033 = vmul.f32 %v2888, %v4032
    %4035 = vrot.lane.b32.xlu0 %v4033, 96
    %v4036 = vpop.permute.xlu0 %4035
    %v4038 = vadd.f32 %v3806, %v4036
    %v4039 = vld [vmem:[%s300 + $0x8] sm:$0xff]
    %v4040 = vadd.f32 %v4039, %v3995
    %v4041 = vadd.f32 %v3995, %v2849
    %v4042 = vxor.u32 %v4040, 2147483648
    %v4043 = vmul.f32 %v4042, 1.442695
    %v4044 = vpow.pop %v4043
    %v4045 = vadd.f32 %v4044, 1.0
    %v4046 = vrcp.pop %v4045
    %v4047 = vmul.f32 1.0, %v4046
    %4049 = vrot.lane.b32.xlu0 %v4041, 64
    %v4050 = vpop.permute.xlu0 %4049
    %v4052 = vmul.f32 %v4047, %v4050
    %4054 = vrot.lane.b32.xlu0 %v4052, 64
    %v4055 = vpop.permute.xlu0 %4054
    %v4057 = vadd.f32 %v4039, %v4055
    %v4058 = vtanh.pop %v4057
    %4060 = vrot.lane.b32.xlu0 %v4058, 96
    %v4061 = vpop.permute.xlu0 %4060
    %v4063 = vsub.f32 %v3847, %v4061
    %v4064 = vmul.f32 %v4047, %v4063
    %4066 = vrot.lane.b32.xlu0 %v4064, 32
    %v4067 = vpop.permute.xlu0 %4066
    %v4069 = vadd.f32 %v4058, %v4067
    %4070 = vrot.lane.b32.xlu0 %v3847, 32
    %v4071 = vpop.permute.xlu0 %4070
    %v4073 = vsub.f32 %v4069, %v4071
    %v4074 = vmul.f32 %v2838, %v4073
    %4076 = vrot.lane.b32.xlu0 %v4074, 96
    %v4077 = vpop.permute.xlu0 %4076
    %v4079 = vadd.f32 %v3847, %v4077
    %4081 = vrot.lane.b32.xlu0 %v4038, 96
    %v4082 = vpop.permute.xlu0 %4081
    %v4083 = vsel %vm283, %v4082, 0
    %4085 = vmatprep.subr.mxu0 0.0
    %4086 = vmatpush1.msra.mxu0 0.0
    %4087 = vmatprep.subr.mxu0 0.0
    %4088 = vmatpush1.msra.mxu0 0.0
    %4089 = vmatprep.subr.mxu0 0.0
    %4090 = vmatpush1.msra.mxu0 0.0
    %4091 = vmatprep.subr.mxu0 0.0
    %4092 = vmatpush1.msra.mxu0 0.0
    %4093 = vmatprep.subr.mxu0 0.0
    %4094 = vmatpush1.msra.mxu0 0.0
    %4095 = vmatprep.subr.mxu0 0.0
    %4096 = vmatpush1.msra.mxu0 0.0
    %4097 = vmatprep.subr.mxu0 0.0
    %4098 = vmatpush1.msra.mxu0 0.0
    %4099 = vmatprep.subr.mxu0 0.0
    %4100 = vmatpush1.msra.mxu0 0.0
    %4101 = vmatprep.subr.mxu0 0.0
    %4102 = vmatpush1.msra.mxu0 0.0
    %4103 = vmatprep.subr.mxu0 0.0
    %4104 = vmatpush1.msra.mxu0 0.0
    %4105 = vmatprep.subr.mxu0 0.0
    %4106 = vmatpush1.msra.mxu0 0.0
    %4107 = vmatprep.subr.mxu0 0.0
    %4108 = vmatpush1.msra.mxu0 0.0
    %4109 = vmatprep.subr.mxu0 0.0
    %4110 = vmatpush1.msra.mxu0 %v2576
    %4111 = vmatprep.subr.mxu0 0.0
    %4112 = vmatpush1.msra.mxu0 %v2575
    %4113 = vmatprep.subr.mxu0 0.0
    %4114 = vmatpush1.msra.mxu0 %v2574
    %4115 = vmatprep.subr.mxu0 0.0
    %4116 = vmatpush1.msra.mxu0 %v2573
    %4117 = vmatprep.subr.mxu0 0.0
    %4118 = vmatpush2.msra.mxu0 0.0
    %4119 = vmatprep.subr.mxu0 0.0
    %4120 = vmatpush2.msra.mxu0 0.0
    %4121 = vmatprep.subr.mxu0 0.0
    %4122 = vmatpush2.msra.mxu0 0.0
    %4123 = vmatprep.subr.mxu0 0.0
    %4124 = vmatpush2.msra.mxu0 0.0
    %4125 = vmatprep.subr.mxu0 0.0
    %4126 = vmatpush2.msra.mxu0 0.0
    %4127 = vmatprep.subr.mxu0 0.0
    %4128 = vmatpush2.msra.mxu0 0.0
    %4129 = vmatprep.subr.mxu0 0.0
    %4130 = vmatpush2.msra.mxu0 0.0
    %4131 = vmatprep.subr.mxu0 0.0
    %4132 = vmatpush2.msra.mxu0 0.0
    %4133 = vmatprep.subr.mxu0 0.0
    %4134 = vmatpush2.msra.mxu0 0.0
    %4135 = vmatprep.subr.mxu0 0.0
    %4136 = vmatpush2.msra.mxu0 0.0
    %4137 = vmatprep.subr.mxu0 0.0
    %4138 = vmatpush2.msra.mxu0 0.0
    %4139 = vmatprep.subr.mxu0 0.0
    %4140 = vmatpush2.msra.mxu0 0.0
    %4141 = vmatprep.subr.mxu0 0.0
    %4142 = vmatpush2.msra.mxu0 0.0
    %4143 = vmatprep.subr.mxu0 0.0
    %4144 = vmatpush2.msra.mxu0 0.0
    %4145 = vmatprep.subr.mxu0 0.0
    %4146 = vmatpush2.msra.mxu0 0.0
    %4147 = vmatprep.subr.mxu0 0.0
    %4148 = vmatpush2.msra.mxu0 0.0
    %4149 = vmatprep.mubr.f32.mxu0 0.0
    %4150 = vmatmul.mubr.f32.gmra.mxu0 %v4083
    %v4151 = vpop.f32.mrf.mxu0
    %v4152 = vadd.f32 0.0, %v4151
    %v4153 = vpop.f32.mrf.mxu0
    %4154 = vdwg.mxu0
    %4156 = vrot.lane.b32.xlu0 %v4079, 96
    %v4157 = vpop.permute.xlu0 %4156
    %v4158 = vsel %vm283, %v4157, 0
    %4160 = vmatprep.subr.mxu0 0.0
    %4161 = vmatpush1.msra.mxu0 0.0
    %4162 = vmatprep.subr.mxu0 0.0
    %4163 = vmatpush1.msra.mxu0 0.0
    %4164 = vmatprep.subr.mxu0 0.0
    %4165 = vmatpush1.msra.mxu0 0.0
    %4166 = vmatprep.subr.mxu0 0.0
    %4167 = vmatpush1.msra.mxu0 0.0
    %4168 = vmatprep.subr.mxu0 0.0
    %4169 = vmatpush1.msra.mxu0 0.0
    %4170 = vmatprep.subr.mxu0 0.0
    %4171 = vmatpush1.msra.mxu0 0.0
    %4172 = vmatprep.subr.mxu0 0.0
    %4173 = vmatpush1.msra.mxu0 0.0
    %4174 = vmatprep.subr.mxu0 0.0
    %4175 = vmatpush1.msra.mxu0 0.0
    %4176 = vmatprep.subr.mxu0 0.0
    %4177 = vmatpush1.msra.mxu0 0.0
    %4178 = vmatprep.subr.mxu0 0.0
    %4179 = vmatpush1.msra.mxu0 0.0
    %4180 = vmatprep.subr.mxu0 0.0
    %4181 = vmatpush1.msra.mxu0 0.0
    %4182 = vmatprep.subr.mxu0 0.0
    %4183 = vmatpush1.msra.mxu0 0.0
    %4184 = vmatprep.subr.mxu0 0.0
    %4185 = vmatpush1.msra.mxu0 %v2581
    %4186 = vmatprep.subr.mxu0 0.0
    %4187 = vmatpush1.msra.mxu0 %v2580
    %4188 = vmatprep.subr.mxu0 0.0
    %4189 = vmatpush1.msra.mxu0 %v2579
    %4190 = vmatprep.subr.mxu0 0.0
    %4191 = vmatpush1.msra.mxu0 %v2578
    %4192 = vmatprep.subr.mxu0 0.0
    %4193 = vmatpush2.msra.mxu0 0.0
    %4194 = vmatprep.subr.mxu0 0.0
    %4195 = vmatpush2.msra.mxu0 0.0
    %4196 = vmatprep.subr.mxu0 0.0
    %4197 = vmatpush2.msra.mxu0 0.0
    %4198 = vmatprep.subr.mxu0 0.0
    %4199 = vmatpush2.msra.mxu0 0.0
    %4200 = vmatprep.subr.mxu0 0.0
    %4201 = vmatpush2.msra.mxu0 0.0
    %4202 = vmatprep.subr.mxu0 0.0
    %4203 = vmatpush2.msra.mxu0 0.0
    %4204 = vmatprep.subr.mxu0 0.0
    %4205 = vmatpush2.msra.mxu0 0.0
    %4206 = vmatprep.subr.mxu0 0.0
    %4207 = vmatpush2.msra.mxu0 0.0
    %4208 = vmatprep.subr.mxu0 0.0
    %4209 = vmatpush2.msra.mxu0 0.0
    %4210 = vmatprep.subr.mxu0 0.0
    %4211 = vmatpush2.msra.mxu0 0.0
    %4212 = vmatprep.subr.mxu0 0.0
    %4213 = vmatpush2.msra.mxu0 0.0
    %4214 = vmatprep.subr.mxu0 0.0
    %4215 = vmatpush2.msra.mxu0 0.0
    %4216 = vmatprep.subr.mxu0 0.0
    %4217 = vmatpush2.msra.mxu0 0.0
    %4218 = vmatprep.subr.mxu0 0.0
    %4219 = vmatpush2.msra.mxu0 0.0
    %4220 = vmatprep.subr.mxu0 0.0
    %4221 = vmatpush2.msra.mxu0 0.0
    %4222 = vmatprep.subr.mxu0 0.0
    %4223 = vmatpush2.msra.mxu0 0.0
    %4224 = vmatprep.mubr.f32.mxu0 0.0
    %4225 = vmatmul.mubr.f32.gmra.mxu0 %v4158
    %v4226 = vpop.f32.mrf.mxu0
    %v4227 = vadd.f32 0.0, %v4226
    %v4228 = vpop.f32.mrf.mxu0
    %4229 = vdwg.mxu0
    %v4230 = vld [vmem:[#allocation3 + $0x38] sm:$0xff]
    %v4231 = vadd.f32 %v4230, %v4152
    %v4232 = vadd.f32 %v4152, %v2799
    %v4233 = vxor.u32 %v4231, 2147483648
    %v4234 = vmul.f32 %v4233, 1.442695
    %v4235 = vpow.pop %v4234
    %v4236 = vadd.f32 %v4235, 1.0
    %v4237 = vrcp.pop %v4236
    %v4238 = vmul.f32 1.0, %v4237
    %4240 = vrot.lane.b32.xlu0 %v4232, 64
    %v4241 = vpop.permute.xlu0 %4240
    %v4243 = vmul.f32 %v4238, %v4241
    %4245 = vrot.lane.b32.xlu0 %v4243, 64
    %v4246 = vpop.permute.xlu0 %4245
    %v4248 = vadd.f32 %v4230, %v4246
    %v4249 = vtanh.pop %v4248
    %4251 = vrot.lane.b32.xlu0 %v4249, 96
    %v4252 = vpop.permute.xlu0 %4251
    %v4254 = vsub.f32 %v4038, %v4252
    %v4255 = vmul.f32 %v4238, %v4254
    %4257 = vrot.lane.b32.xlu0 %v4255, 32
    %v4258 = vpop.permute.xlu0 %4257
    %v4260 = vadd.f32 %v4249, %v4258
    %4261 = vrot.lane.b32.xlu0 %v4038, 32
    %v4262 = vpop.permute.xlu0 %4261
    %v4264 = vsub.f32 %v4260, %v4262
    %v4265 = vmul.f32 %v2643, %v4264
    %4267 = vrot.lane.b32.xlu0 %v4265, 96
    %v4268 = vpop.permute.xlu0 %4267
    %v4270 = vadd.f32 %v4038, %v4268
    %v4271 = vld [vmem:[%s300] sm:$0xff]
    %v4272 = vadd.f32 %v4271, %v4227
    %v4273 = vadd.f32 %v4227, %v2849
    %v4274 = vxor.u32 %v4272, 2147483648
    %v4275 = vmul.f32 %v4274, 1.442695
    %v4276 = vpow.pop %v4275
    %v4277 = vadd.f32 %v4276, 1.0
    %v4278 = vrcp.pop %v4277
    %v4279 = vmul.f32 1.0, %v4278
    %4281 = vrot.lane.b32.xlu0 %v4273, 64
    %v4282 = vpop.permute.xlu0 %4281
    %v4284 = vmul.f32 %v4279, %v4282
    %4286 = vrot.lane.b32.xlu0 %v4284, 64
    %v4287 = vpop.permute.xlu0 %4286
    %v4289 = vadd.f32 %v4271, %v4287
    %v4290 = vtanh.pop %v4289
    %4292 = vrot.lane.b32.xlu0 %v4290, 96
    %v4293 = vpop.permute.xlu0 %4292
    %v4295 = vsub.f32 %v4079, %v4293
    %v4296 = vmul.f32 %v4279, %v4295
    %4298 = vrot.lane.b32.xlu0 %v4296, 32
    %v4299 = vpop.permute.xlu0 %4298
    %v4301 = vadd.f32 %v4290, %v4299
    %4302 = vrot.lane.b32.xlu0 %v4079, 32
    %v4303 = vpop.permute.xlu0 %4302
    %v4305 = vsub.f32 %v4301, %v4303
    %v4306 = vmul.f32 %v2613, %v4305
    %4308 = vrot.lane.b32.xlu0 %v4306, 96
    %v4309 = vpop.permute.xlu0 %4308
    %v4311 = vadd.f32 %v4079, %v4309
    %4313 = vrot.lane.b32.xlu0 %v4270, 96
    %v4314 = vpop.permute.xlu0 %4313
    %v4316 = vsel %vm283, %v4314, %v4311
    %vm4317 = vcmask 523264
    %4318 = vst.msk [vmem:[#allocation9] sm:$0xff] %vm4317, %v4316
    // Predicated region
    $region50: #{utterance_encoder_forward.1} parent=1 // pred_check
      _
    $region51: #{utterance_encoder_forward.1} parent=1 // pred_check_branch
      %4320 = sbr.rel (0) target = $region53
    $region52: #{utterance_encoder_forward.1} parent=1 // pred_region
      %s4322 = ssub.s32 128, 128
      %4323 = vsyncadd [#allocation6], %s4322
      %s4325 = sshll.u32 [#allocation9], 4
      %s4326 = int_to_ptr.vmem [resolvable:$true] %s4325
      %4328 = dma.vmem_to_hbm [thread:$0]  %s4326, 128, %s10, [#allocation6]
    $region53: #{utterance_encoder_forward.1} parent=1 // pred_fallthru
      _
    // Predicated region
    $region54: #{utterance_encoder_forward.1} parent=1 // pred_check
      _
    $region55: #{utterance_encoder_forward.1} parent=1 // pred_check_branch
      %4330 = sbr.rel (0) target = $region57
    $region56: #{utterance_encoder_forward.1} parent=1 // pred_region
      %4331 = dma.done [#allocation6], 128
    $region57: #{utterance_encoder_forward.1} parent=1 // pred_fallthru
      _
    %4332 = vsyncpa [#allocation5], 1
    %4333 = vsyncpa [#allocation8], 1
    %4334 = vsyncpa [#allocation6], 1

</llo_original>
